<compile_context>
chip_gen: v5e
topology: v5e:2x2
jax: 0.10.0
libtpu: 0.0.40
codegen_flags: <defaults>
</compile_context>

<pallas_src>
import functools

import jax
import jax.numpy as jnp
from jax import lax
from jax.experimental import pallas as pl
from jax.experimental.pallas import tpu as pltpu


def _residual_block_kernel(xp_ref, w1_ref, w2_ref, scale_ref, shift1_ref,
                           shift2_ref, mask_ref, o_ref, *, K, Wp, pad, Np):
    # xp_ref    : (1, Np, Cp)  flat zero-padded frame (row h*Wp+w), lane-dense C
    # w1_ref    : (K*K, Cp, Cp) conv1 weights, tap-major, (ci, co)
    # w2_ref    : (K*K, Cp, Cp) conv2 weights
    # scale_ref : (1, Cp)  BN scale  = gamma / sqrt(var + eps)
    # shift1_ref: (1, Cp)  scale*b1 + (beta - mean*scale)   (bias folded)
    # shift2_ref: (1, Cp)  scale*b2 + (beta - mean*scale)
    # mask_ref  : (Np, 1)  1.0 on interior frame pixels, 0.0 on halo/tail
    # o_ref     : (1, Np, Cp) output frame; pixel (h, w) lives at row h*Wp+w
    xp = xp_ref[0]
    scale = scale_ref[...]
    shift1 = shift1_ref[...]
    shift2 = shift2_ref[...]
    mask = mask_ref[...]

    def shift_rows(v, amount):
        amount = amount % Np
        if amount == 0:
            return v
        return pltpu.roll(v, amount, axis=0)          # static sublane rotate (XLU)

    def conv(inp, w_ref):
        # K*K accumulated MXU matmuls on the flat padded frame.  Tap (kh, kw)
        # contributes p[row + kh*Wp + kw] to output row `row`, i.e. a roll by
        # Np - (kh*Wp + kw).  No strided slices / relayout copies.
        acc = jnp.dot(inp, w_ref[0], preferred_element_type=jnp.float32)
        for kh in range(K):
            for kw in range(K):
                s = kh * Wp + kw
                if s == 0:
                    continue
                p = jnp.dot(inp, w_ref[kh * K + kw],
                            preferred_element_type=jnp.float32)
                acc = acc + shift_rows(p, Np - s)
        return acc

    # ---- conv1 -> BN (bias folded) -> ReLU -------------------------------
    h1 = jnp.maximum(conv(xp, w1_ref) * scale + shift1, 0.0)

    # ---- reposition conv1 output into a zero-padded frame for conv2 ------
    # Valid pixels move from the frame origin to offset (pad, pad); the halo
    # (and frame tail) is zeroed by the precomputed mask (no scratch re-pad).
    q = (shift_rows(h1, pad * Wp + pad) * mask).astype(xp.dtype)

    # ---- conv2 -> BN (same BN instance, bias folded) ----------------------
    y = conv(q, w2_ref) * scale + shift2

    # ---- residual add + ReLU ----------------------------------------------
    # x sits at frame offset (pad, pad); bring it back to the origin.
    res = shift_rows(xp.astype(jnp.float32), Np - (pad * Wp + pad))
    o_ref[0] = jnp.maximum(y + res, 0.0).astype(o_ref.dtype)


def residual_block_forward(x, conv1_w, conv1_b, conv2_w, conv2_b,
                           bn_gamma, bn_beta, bn_mean, bn_var,
                           *, eps=1e-5, use_bf16=False):
    """x: (B, Cin, H, W) NCHW; conv weights in PyTorch OIHW layout."""
    B, Cin, H, W = x.shape
    Cout, Cin2, K, K2 = conv1_w.shape
    assert K == K2 and Cin2 == Cin
    assert conv2_w.shape == (Cout, Cout, K, K)
    assert Cin == Cout, "residual add requires in_channels == out_channels"
    pad = (K - 1) // 2
    Hp, Wp = H + 2 * pad, W + 2 * pad
    Cp = ((Cout + 127) // 128) * 128          # lane-dense channel padding
    Nv = Hp * Wp                              # valid flat-frame rows
    Np = ((Nv + 7) // 8) * 8                  # sublane-aligned frame rows

    compute_dtype = jnp.bfloat16 if use_bf16 else jnp.float32

    # ---- layout plumbing (all in the wrapper, no in-kernel transposes) ----
    x_nhwc = jnp.transpose(x, (0, 2, 3, 1))                            # (B,H,W,C)
    xp = jnp.pad(x_nhwc, ((0, 0), (pad, pad), (pad, pad), (0, Cp - Cout)))
    xp = jnp.pad(xp.reshape(B, Nv, Cp), ((0, 0), (0, Np - Nv), (0, 0)))
    xp = xp.astype(compute_dtype)                                      # (B,Np,Cp)

    def prep_w(w):
        wt = jnp.transpose(w, (2, 3, 1, 0)).reshape(K * K, Cin, Cout)
        wt = jnp.pad(wt, ((0, 0), (0, Cp - Cin), (0, Cp - Cout)))
        return wt.astype(compute_dtype)

    w1 = prep_w(conv1_w)
    w2 = prep_w(conv2_w)

    scale = (bn_gamma / jnp.sqrt(bn_var + eps)).astype(jnp.float32)
    shift = (bn_beta - bn_mean * scale).astype(jnp.float32)
    shift1 = scale * conv1_b.astype(jnp.float32) + shift   # conv bias folded in
    shift2 = scale * conv2_b.astype(jnp.float32) + shift

    def prep_c(v):
        return jnp.pad(v, (0, Cp - Cout)).reshape(1, Cp)

    scale_p, shift1_p, shift2_p = prep_c(scale), prep_c(shift1), prep_c(shift2)

    # Interior mask: 1.0 where flat row corresponds to (pad<=h<pad+H, pad<=w<pad+W).
    flat = jnp.arange(Np)
    hh, ww = flat // Wp, flat % Wp
    interior = ((flat < Nv) & (hh >= pad) & (hh < pad + H)
                & (ww >= pad) & (ww < pad + W))
    mask = interior.astype(jnp.float32).reshape(Np, 1)

    itm = jnp.dtype(compute_dtype).itemsize
    out_itm = jnp.dtype(x.dtype).itemsize
    flops = 2 * B * 2 * (K * K) * Np * Cp * Cp
    bytes_accessed = (B * Np * Cp * itm + B * Np * Cp * out_itm
                      + 2 * K * K * Cp * Cp * itm + Np * 4 + 3 * Cp * 4)
    per_step = (2 * Np * Cp * itm + 2 * Np * Cp * out_itm
                + 2 * 2 * K * K * Cp * Cp * itm + 2 * (Np * 4 + 3 * Cp * 4))
    vmem_limit = int(min(64 * 2**20, max(2 * per_step, 16 * 2**20)))

    kernel = functools.partial(_residual_block_kernel, K=K, Wp=Wp, pad=pad, Np=Np)

    out_frame = pl.pallas_call(
        kernel,
        out_shape=jax.ShapeDtypeStruct((B, Np, Cp), x.dtype),
        grid=(B,),
        in_specs=[
            pl.BlockSpec((1, Np, Cp), lambda i: (i, 0, 0)),
            pl.BlockSpec((K * K, Cp, Cp), lambda i: (0, 0, 0)),
            pl.BlockSpec((K * K, Cp, Cp), lambda i: (0, 0, 0)),
            pl.BlockSpec((1, Cp), lambda i: (0, 0)),
            pl.BlockSpec((1, Cp), lambda i: (0, 0)),
            pl.BlockSpec((1, Cp), lambda i: (0, 0)),
            pl.BlockSpec((Np, 1), lambda i: (0, 0)),
        ],
        out_specs=pl.BlockSpec((1, Np, Cp), lambda i: (i, 0, 0)),
        compiler_params=pltpu.CompilerParams(
            dimension_semantics=("parallel",),
            vmem_limit_bytes=vmem_limit),
        cost_estimate=pl.CostEstimate(
            flops=flops, transcendentals=0, bytes_accessed=bytes_accessed),
    )(xp, w1, w2, scale_p, shift1_p, shift2_p, mask)

    # Output pixel (h, w, c) lives at frame row h*Wp + w; crop + back to NCHW.
    out = out_frame[:, :Nv, :].reshape(B, Hp, Wp, Cp)[:, :H, :W, :Cout]
    return jnp.transpose(out, (0, 3, 1, 2))


def residual_block_ref(x, conv1_w, conv1_b, conv2_w, conv2_b,
                       bn_gamma, bn_beta, bn_mean, bn_var, *, eps=1e-5):
    """Pure-JAX reference mirroring the (intended) PyTorch forward."""
    pad = (conv1_w.shape[-1] - 1) // 2
    dn = lax.conv_dimension_numbers(x.shape, conv1_w.shape,
                                    ("NCHW", "OIHW", "NCHW"))

    def conv(h, w, b):
        y = lax.conv_general_dilated(h, w, window_strides=(1, 1),
                                     padding=((pad, pad), (pad, pad)),
                                     dimension_numbers=dn)
        return y + b.reshape(1, -1, 1, 1)

    def bn(h):
        s = bn_gamma / jnp.sqrt(bn_var + eps)
        sh = bn_beta - bn_mean * s
        return s.reshape(1, -1, 1, 1) * h + sh.reshape(1, -1, 1, 1)

    residual = x
    h = jax.nn.relu(bn(conv(x, conv1_w, conv1_b)))
    h = bn(conv(h, conv2_w, conv2_b))
    return jax.nn.relu(h + residual)


if __name__ == "__main__":
    B, C, H, W = 2, 4, 16, 16
    K = 3

    key = jax.random.PRNGKey(0)
    ks = jax.random.split(key, 10)
    x = jax.random.normal(ks[0], (B, C, H, W), dtype=jnp.float32)
    conv1_w = jax.random.normal(ks[1], (C, C, K, K), dtype=jnp.float32) * 0.1
    conv1_b = jax.random.normal(ks[2], (C,), dtype=jnp.float32) * 0.1
    conv2_w = jax.random.normal(ks[3], (C, C, K, K), dtype=jnp.float32) * 0.1
    conv2_b = jax.random.normal(ks[4], (C,), dtype=jnp.float32) * 0.1
    gamma = 1.0 + 0.1 * jax.random.normal(ks[5], (C,), dtype=jnp.float32)
    beta = 0.1 * jax.random.normal(ks[6], (C,), dtype=jnp.float32)
    mean = 0.1 * jax.random.normal(ks[7], (C,), dtype=jnp.float32)
    var = 1.0 + 0.1 * jnp.abs(jax.random.normal(ks[8], (C,), dtype=jnp.float32))

    out = residual_block_forward(x, conv1_w, conv1_b, conv2_w, conv2_b,
                                 gamma, beta, mean, var)
    out = jax.block_until_ready(out)

    ref = residual_block_ref(x, conv1_w, conv1_b, conv2_w, conv2_b,
                             gamma, beta, mean, var)
    assert out.shape == (B, C, H, W)
    err = float(jnp.max(jnp.abs(out - ref)))
    assert jnp.allclose(out, ref, atol=1e-4, rtol=1e-4), f"mismatch, max err {err}"

    print("KERNEL_OK")
</pallas_src>

<mosaic_0001>
module attributes {stable_mosaic.version = 11 : i64} {
  func.func @_residual_block_kernel(%arg0: i32, %arg1: memref<1x328x128xf32, #tpu.memory_space<vmem>>, %arg2: memref<9x128x128xf32, #tpu.memory_space<vmem>>, %arg3: memref<9x128x128xf32, #tpu.memory_space<vmem>>, %arg4: memref<1x128xf32, #tpu.memory_space<vmem>>, %arg5: memref<1x128xf32, #tpu.memory_space<vmem>>, %arg6: memref<1x128xf32, #tpu.memory_space<vmem>>, %arg7: memref<328x1xf32, #tpu.memory_space<vmem>>, %arg8: memref<1x328x128xf32, #tpu.memory_space<vmem>>) attributes {dimension_semantics = [#tpu.dimension_semantics<parallel>], iteration_bounds = array<i64: 2>, scalar_prefetch = 0 : i64, scratch_operands = 0 : i64, tpu.core_type = #tpu.core_type<tc>, window_params = [{transform_indices = @transform_0, window_bounds = array<i64: 1, 328, 128>}, {pipeline_mode = #tpu.pipeline_mode<synchronous>, transform_indices = @transform_1, window_bounds = array<i64: 9, 128, 128>}, {pipeline_mode = #tpu.pipeline_mode<synchronous>, transform_indices = @transform_2, window_bounds = array<i64: 9, 128, 128>}, {pipeline_mode = #tpu.pipeline_mode<synchronous>, transform_indices = @transform_3, window_bounds = array<i64: 1, 128>}, {pipeline_mode = #tpu.pipeline_mode<synchronous>, transform_indices = @transform_4, window_bounds = array<i64: 1, 128>}, {pipeline_mode = #tpu.pipeline_mode<synchronous>, transform_indices = @transform_5, window_bounds = array<i64: 1, 128>}, {pipeline_mode = #tpu.pipeline_mode<synchronous>, transform_indices = @transform_6, window_bounds = array<i64: 328, 1>}, {transform_indices = @transform_7, window_bounds = array<i64: 1, 328, 128>}]} {
    %c0 = arith.constant 0 : index
    %c0_0 = arith.constant 0 : index
    %c0_1 = arith.constant 0 : index
    %0 = vector.load %arg1[%c0, %c0_0, %c0_1] : memref<1x328x128xf32, #tpu.memory_space<vmem>>, vector<1x328x128xf32>
    %1 = vector.shape_cast %0 : vector<1x328x128xf32> to vector<328x128xf32>
    %c0_2 = arith.constant 0 : index
    %c0_3 = arith.constant 0 : index
    %2 = vector.load %arg4[%c0_2, %c0_3] : memref<1x128xf32, #tpu.memory_space<vmem>>, vector<1x128xf32>
    %c0_4 = arith.constant 0 : index
    %c0_5 = arith.constant 0 : index
    %3 = vector.load %arg5[%c0_4, %c0_5] : memref<1x128xf32, #tpu.memory_space<vmem>>, vector<1x128xf32>
    %c0_6 = arith.constant 0 : index
    %c0_7 = arith.constant 0 : index
    %4 = vector.load %arg6[%c0_6, %c0_7] : memref<1x128xf32, #tpu.memory_space<vmem>>, vector<1x128xf32>
    %c0_8 = arith.constant 0 : index
    %c0_9 = arith.constant 0 : index
    %5 = vector.load %arg7[%c0_8, %c0_9] : memref<328x1xf32, #tpu.memory_space<vmem>>, vector<328x1xf32>
    %c0_10 = arith.constant 0 : index
    %c0_11 = arith.constant 0 : index
    %c0_12 = arith.constant 0 : index
    %6 = vector.load %arg2[%c0_10, %c0_11, %c0_12] : memref<9x128x128xf32, #tpu.memory_space<vmem>>, vector<1x128x128xf32>
    %7 = vector.shape_cast %6 : vector<1x128x128xf32> to vector<128x128xf32>
    %cst = arith.constant dense<0.000000e+00> : vector<328x128xf32>
    %8 = tpu.matmul %1, %7, %cst {dimension_numbers = #tpu.dot_dimension_numbers<[1], [0], [0], [1], [0, 0, 1, 1], [], []>} : vector<328x128xf32>, vector<128x128xf32>, vector<328x128xf32> -> vector<328x128xf32>
    %c1 = arith.constant 1 : index
    %c0_13 = arith.constant 0 : index
    %c0_14 = arith.constant 0 : index
    %9 = vector.load %arg2[%c1, %c0_13, %c0_14] : memref<9x128x128xf32, #tpu.memory_space<vmem>>, vector<1x128x128xf32>
    %10 = vector.shape_cast %9 : vector<1x128x128xf32> to vector<128x128xf32>
    %cst_15 = arith.constant dense<0.000000e+00> : vector<328x128xf32>
    %11 = tpu.matmul %1, %10, %cst_15 {dimension_numbers = #tpu.dot_dimension_numbers<[1], [0], [0], [1], [0, 0, 1, 1], [], []>} : vector<328x128xf32>, vector<128x128xf32>, vector<328x128xf32> -> vector<328x128xf32>
    %c327_i32 = arith.constant 327 : i32
    %12 = tpu.dynamic_rotate %11 by %c327_i32 dim 0 : vector<328x128xf32>, i32 -> vector<328x128xf32>
    %13 = arith.addf %8, %12 : vector<328x128xf32>
    %c2 = arith.constant 2 : index
    %c0_16 = arith.constant 0 : index
    %c0_17 = arith.constant 0 : index
    %14 = vector.load %arg2[%c2, %c0_16, %c0_17] : memref<9x128x128xf32, #tpu.memory_space<vmem>>, vector<1x128x128xf32>
    %15 = vector.shape_cast %14 : vector<1x128x128xf32> to vector<128x128xf32>
    %cst_18 = arith.constant dense<0.000000e+00> : vector<328x128xf32>
    %16 = tpu.matmul %1, %15, %cst_18 {dimension_numbers = #tpu.dot_dimension_numbers<[1], [0], [0], [1], [0, 0, 1, 1], [], []>} : vector<328x128xf32>, vector<128x128xf32>, vector<328x128xf32> -> vector<328x128xf32>
    %c326_i32 = arith.constant 326 : i32
    %17 = tpu.dynamic_rotate %16 by %c326_i32 dim 0 : vector<328x128xf32>, i32 -> vector<328x128xf32>
    %18 = arith.addf %13, %17 : vector<328x128xf32>
    %c3 = arith.constant 3 : index
    %c0_19 = arith.constant 0 : index
    %c0_20 = arith.constant 0 : index
    %19 = vector.load %arg2[%c3, %c0_19, %c0_20] : memref<9x128x128xf32, #tpu.memory_space<vmem>>, vector<1x128x128xf32>
    %20 = vector.shape_cast %19 : vector<1x128x128xf32> to vector<128x128xf32>
    %cst_21 = arith.constant dense<0.000000e+00> : vector<328x128xf32>
    %21 = tpu.matmul %1, %20, %cst_21 {dimension_numbers = #tpu.dot_dimension_numbers<[1], [0], [0], [1], [0, 0, 1, 1], [], []>} : vector<328x128xf32>, vector<128x128xf32>, vector<328x128xf32> -> vector<328x128xf32>
    %c310_i32 = arith.constant 310 : i32
    %22 = tpu.dynamic_rotate %21 by %c310_i32 dim 0 : vector<328x128xf32>, i32 -> vector<328x128xf32>
    %23 = arith.addf %18, %22 : vector<328x128xf32>
    %c4 = arith.constant 4 : index
    %c0_22 = arith.constant 0 : index
    %c0_23 = arith.constant 0 : index
    %24 = vector.load %arg2[%c4, %c0_22, %c0_23] : memref<9x128x128xf32, #tpu.memory_space<vmem>>, vector<1x128x128xf32>
    %25 = vector.shape_cast %24 : vector<1x128x128xf32> to vector<128x128xf32>
    %cst_24 = arith.constant dense<0.000000e+00> : vector<328x128xf32>
    %26 = tpu.matmul %1, %25, %cst_24 {dimension_numbers = #tpu.dot_dimension_numbers<[1], [0], [0], [1], [0, 0, 1, 1], [], []>} : vector<328x128xf32>, vector<128x128xf32>, vector<328x128xf32> -> vector<328x128xf32>
    %c309_i32 = arith.constant 309 : i32
    %27 = tpu.dynamic_rotate %26 by %c309_i32 dim 0 : vector<328x128xf32>, i32 -> vector<328x128xf32>
    %28 = arith.addf %23, %27 : vector<328x128xf32>
    %c5 = arith.constant 5 : index
    %c0_25 = arith.constant 0 : index
    %c0_26 = arith.constant 0 : index
    %29 = vector.load %arg2[%c5, %c0_25, %c0_26] : memref<9x128x128xf32, #tpu.memory_space<vmem>>, vector<1x128x128xf32>
    %30 = vector.shape_cast %29 : vector<1x128x128xf32> to vector<128x128xf32>
    %cst_27 = arith.constant dense<0.000000e+00> : vector<328x128xf32>
    %31 = tpu.matmul %1, %30, %cst_27 {dimension_numbers = #tpu.dot_dimension_numbers<[1], [0], [0], [1], [0, 0, 1, 1], [], []>} : vector<328x128xf32>, vector<128x128xf32>, vector<328x128xf32> -> vector<328x128xf32>
    %c308_i32 = arith.constant 308 : i32
    %32 = tpu.dynamic_rotate %31 by %c308_i32 dim 0 : vector<328x128xf32>, i32 -> vector<328x128xf32>
    %33 = arith.addf %28, %32 : vector<328x128xf32>
    %c6 = arith.constant 6 : index
    %c0_28 = arith.constant 0 : index
    %c0_29 = arith.constant 0 : index
    %34 = vector.load %arg2[%c6, %c0_28, %c0_29] : memref<9x128x128xf32, #tpu.memory_space<vmem>>, vector<1x128x128xf32>
    %35 = vector.shape_cast %34 : vector<1x128x128xf32> to vector<128x128xf32>
    %cst_30 = arith.constant dense<0.000000e+00> : vector<328x128xf32>
    %36 = tpu.matmul %1, %35, %cst_30 {dimension_numbers = #tpu.dot_dimension_numbers<[1], [0], [0], [1], [0, 0, 1, 1], [], []>} : vector<328x128xf32>, vector<128x128xf32>, vector<328x128xf32> -> vector<328x128xf32>
    %c292_i32 = arith.constant 292 : i32
    %37 = tpu.dynamic_rotate %36 by %c292_i32 dim 0 : vector<328x128xf32>, i32 -> vector<328x128xf32>
    %38 = arith.addf %33, %37 : vector<328x128xf32>
    %c7 = arith.constant 7 : index
    %c0_31 = arith.constant 0 : index
    %c0_32 = arith.constant 0 : index
    %39 = vector.load %arg2[%c7, %c0_31, %c0_32] : memref<9x128x128xf32, #tpu.memory_space<vmem>>, vector<1x128x128xf32>
    %40 = vector.shape_cast %39 : vector<1x128x128xf32> to vector<128x128xf32>
    %cst_33 = arith.constant dense<0.000000e+00> : vector<328x128xf32>
    %41 = tpu.matmul %1, %40, %cst_33 {dimension_numbers = #tpu.dot_dimension_numbers<[1], [0], [0], [1], [0, 0, 1, 1], [], []>} : vector<328x128xf32>, vector<128x128xf32>, vector<328x128xf32> -> vector<328x128xf32>
    %c291_i32 = arith.constant 291 : i32
    %42 = tpu.dynamic_rotate %41 by %c291_i32 dim 0 : vector<328x128xf32>, i32 -> vector<328x128xf32>
    %43 = arith.addf %38, %42 : vector<328x128xf32>
    %c8 = arith.constant 8 : index
    %c0_34 = arith.constant 0 : index
    %c0_35 = arith.constant 0 : index
    %44 = vector.load %arg2[%c8, %c0_34, %c0_35] : memref<9x128x128xf32, #tpu.memory_space<vmem>>, vector<1x128x128xf32>
    %45 = vector.shape_cast %44 : vector<1x128x128xf32> to vector<128x128xf32>
    %cst_36 = arith.constant dense<0.000000e+00> : vector<328x128xf32>
    %46 = tpu.matmul %1, %45, %cst_36 {dimension_numbers = #tpu.dot_dimension_numbers<[1], [0], [0], [1], [0, 0, 1, 1], [], []>} : vector<328x128xf32>, vector<128x128xf32>, vector<328x128xf32> -> vector<328x128xf32>
    %c290_i32 = arith.constant 290 : i32
    %47 = tpu.dynamic_rotate %46 by %c290_i32 dim 0 : vector<328x128xf32>, i32 -> vector<328x128xf32>
    %48 = arith.addf %43, %47 : vector<328x128xf32>
    %49 = vector.broadcast %2 : vector<1x128xf32> to vector<328x128xf32>
    %50 = arith.mulf %48, %49 : vector<328x128xf32>
    %51 = vector.broadcast %3 : vector<1x128xf32> to vector<328x128xf32>
    %52 = arith.addf %50, %51 : vector<328x128xf32>
    %cst_37 = arith.constant 0.000000e+00 : f32
    %53 = vector.broadcast %cst_37 : f32 to vector<328x128xf32>
    %54 = arith.maximumf %52, %53 : vector<328x128xf32>
    %c19_i32 = arith.constant 19 : i32
    %55 = tpu.dynamic_rotate %54 by %c19_i32 dim 0 : vector<328x128xf32>, i32 -> vector<328x128xf32>
    %56 = vector.broadcast %5 : vector<328x1xf32> to vector<328x128xf32>
    %57 = arith.mulf %55, %56 : vector<328x128xf32>
    %c0_38 = arith.constant 0 : index
    %c0_39 = arith.constant 0 : index
    %c0_40 = arith.constant 0 : index
    %58 = vector.load %arg3[%c0_38, %c0_39, %c0_40] : memref<9x128x128xf32, #tpu.memory_space<vmem>>, vector<1x128x128xf32>
    %59 = vector.shape_cast %58 : vector<1x128x128xf32> to vector<128x128xf32>
    %cst_41 = arith.constant dense<0.000000e+00> : vector<328x128xf32>
    %60 = tpu.matmul %57, %59, %cst_41 {dimension_numbers = #tpu.dot_dimension_numbers<[1], [0], [0], [1], [0, 0, 1, 1], [], []>} : vector<328x128xf32>, vector<128x128xf32>, vector<328x128xf32> -> vector<328x128xf32>
    %c1_42 = arith.constant 1 : index
    %c0_43 = arith.constant 0 : index
    %c0_44 = arith.constant 0 : index
    %61 = vector.load %arg3[%c1_42, %c0_43, %c0_44] : memref<9x128x128xf32, #tpu.memory_space<vmem>>, vector<1x128x128xf32>
    %62 = vector.shape_cast %61 : vector<1x128x128xf32> to vector<128x128xf32>
    %cst_45 = arith.constant dense<0.000000e+00> : vector<328x128xf32>
    %63 = tpu.matmul %57, %62, %cst_45 {dimension_numbers = #tpu.dot_dimension_numbers<[1], [0], [0], [1], [0, 0, 1, 1], [], []>} : vector<328x128xf32>, vector<128x128xf32>, vector<328x128xf32> -> vector<328x128xf32>
    %c327_i32_46 = arith.constant 327 : i32
    %64 = tpu.dynamic_rotate %63 by %c327_i32_46 dim 0 : vector<328x128xf32>, i32 -> vector<328x128xf32>
    %65 = arith.addf %60, %64 : vector<328x128xf32>
    %c2_47 = arith.constant 2 : index
    %c0_48 = arith.constant 0 : index
    %c0_49 = arith.constant 0 : index
    %66 = vector.load %arg3[%c2_47, %c0_48, %c0_49] : memref<9x128x128xf32, #tpu.memory_space<vmem>>, vector<1x128x128xf32>
    %67 = vector.shape_cast %66 : vector<1x128x128xf32> to vector<128x128xf32>
    %cst_50 = arith.constant dense<0.000000e+00> : vector<328x128xf32>
    %68 = tpu.matmul %57, %67, %cst_50 {dimension_numbers = #tpu.dot_dimension_numbers<[1], [0], [0], [1], [0, 0, 1, 1], [], []>} : vector<328x128xf32>, vector<128x128xf32>, vector<328x128xf32> -> vector<328x128xf32>
    %c326_i32_51 = arith.constant 326 : i32
    %69 = tpu.dynamic_rotate %68 by %c326_i32_51 dim 0 : vector<328x128xf32>, i32 -> vector<328x128xf32>
    %70 = arith.addf %65, %69 : vector<328x128xf32>
    %c3_52 = arith.constant 3 : index
    %c0_53 = arith.constant 0 : index
    %c0_54 = arith.constant 0 : index
    %71 = vector.load %arg3[%c3_52, %c0_53, %c0_54] : memref<9x128x128xf32, #tpu.memory_space<vmem>>, vector<1x128x128xf32>
    %72 = vector.shape_cast %71 : vector<1x128x128xf32> to vector<128x128xf32>
    %cst_55 = arith.constant dense<0.000000e+00> : vector<328x128xf32>
    %73 = tpu.matmul %57, %72, %cst_55 {dimension_numbers = #tpu.dot_dimension_numbers<[1], [0], [0], [1], [0, 0, 1, 1], [], []>} : vector<328x128xf32>, vector<128x128xf32>, vector<328x128xf32> -> vector<328x128xf32>
    %c310_i32_56 = arith.constant 310 : i32
    %74 = tpu.dynamic_rotate %73 by %c310_i32_56 dim 0 : vector<328x128xf32>, i32 -> vector<328x128xf32>
    %75 = arith.addf %70, %74 : vector<328x128xf32>
    %c4_57 = arith.constant 4 : index
    %c0_58 = arith.constant 0 : index
    %c0_59 = arith.constant 0 : index
    %76 = vector.load %arg3[%c4_57, %c0_58, %c0_59] : memref<9x128x128xf32, #tpu.memory_space<vmem>>, vector<1x128x128xf32>
    %77 = vector.shape_cast %76 : vector<1x128x128xf32> to vector<128x128xf32>
    %cst_60 = arith.constant dense<0.000000e+00> : vector<328x128xf32>
    %78 = tpu.matmul %57, %77, %cst_60 {dimension_numbers = #tpu.dot_dimension_numbers<[1], [0], [0], [1], [0, 0, 1, 1], [], []>} : vector<328x128xf32>, vector<128x128xf32>, vector<328x128xf32> -> vector<328x128xf32>
    %c309_i32_61 = arith.constant 309 : i32
    %79 = tpu.dynamic_rotate %78 by %c309_i32_61 dim 0 : vector<328x128xf32>, i32 -> vector<328x128xf32>
    %80 = arith.addf %75, %79 : vector<328x128xf32>
    %c5_62 = arith.constant 5 : index
    %c0_63 = arith.constant 0 : index
    %c0_64 = arith.constant 0 : index
    %81 = vector.load %arg3[%c5_62, %c0_63, %c0_64] : memref<9x128x128xf32, #tpu.memory_space<vmem>>, vector<1x128x128xf32>
    %82 = vector.shape_cast %81 : vector<1x128x128xf32> to vector<128x128xf32>
    %cst_65 = arith.constant dense<0.000000e+00> : vector<328x128xf32>
    %83 = tpu.matmul %57, %82, %cst_65 {dimension_numbers = #tpu.dot_dimension_numbers<[1], [0], [0], [1], [0, 0, 1, 1], [], []>} : vector<328x128xf32>, vector<128x128xf32>, vector<328x128xf32> -> vector<328x128xf32>
    %c308_i32_66 = arith.constant 308 : i32
    %84 = tpu.dynamic_rotate %83 by %c308_i32_66 dim 0 : vector<328x128xf32>, i32 -> vector<328x128xf32>
    %85 = arith.addf %80, %84 : vector<328x128xf32>
    %c6_67 = arith.constant 6 : index
    %c0_68 = arith.constant 0 : index
    %c0_69 = arith.constant 0 : index
    %86 = vector.load %arg3[%c6_67, %c0_68, %c0_69] : memref<9x128x128xf32, #tpu.memory_space<vmem>>, vector<1x128x128xf32>
    %87 = vector.shape_cast %86 : vector<1x128x128xf32> to vector<128x128xf32>
    %cst_70 = arith.constant dense<0.000000e+00> : vector<328x128xf32>
    %88 = tpu.matmul %57, %87, %cst_70 {dimension_numbers = #tpu.dot_dimension_numbers<[1], [0], [0], [1], [0, 0, 1, 1], [], []>} : vector<328x128xf32>, vector<128x128xf32>, vector<328x128xf32> -> vector<328x128xf32>
    %c292_i32_71 = arith.constant 292 : i32
    %89 = tpu.dynamic_rotate %88 by %c292_i32_71 dim 0 : vector<328x128xf32>, i32 -> vector<328x128xf32>
    %90 = arith.addf %85, %89 : vector<328x128xf32>
    %c7_72 = arith.constant 7 : index
    %c0_73 = arith.constant 0 : index
    %c0_74 = arith.constant 0 : index
    %91 = vector.load %arg3[%c7_72, %c0_73, %c0_74] : memref<9x128x128xf32, #tpu.memory_space<vmem>>, vector<1x128x128xf32>
    %92 = vector.shape_cast %91 : vector<1x128x128xf32> to vector<128x128xf32>
    %cst_75 = arith.constant dense<0.000000e+00> : vector<328x128xf32>
    %93 = tpu.matmul %57, %92, %cst_75 {dimension_numbers = #tpu.dot_dimension_numbers<[1], [0], [0], [1], [0, 0, 1, 1], [], []>} : vector<328x128xf32>, vector<128x128xf32>, vector<328x128xf32> -> vector<328x128xf32>
    %c291_i32_76 = arith.constant 291 : i32
    %94 = tpu.dynamic_rotate %93 by %c291_i32_76 dim 0 : vector<328x128xf32>, i32 -> vector<328x128xf32>
    %95 = arith.addf %90, %94 : vector<328x128xf32>
    %c8_77 = arith.constant 8 : index
    %c0_78 = arith.constant 0 : index
    %c0_79 = arith.constant 0 : index
    %96 = vector.load %arg3[%c8_77, %c0_78, %c0_79] : memref<9x128x128xf32, #tpu.memory_space<vmem>>, vector<1x128x128xf32>
    %97 = vector.shape_cast %96 : vector<1x128x128xf32> to vector<128x128xf32>
    %cst_80 = arith.constant dense<0.000000e+00> : vector<328x128xf32>
    %98 = tpu.matmul %57, %97, %cst_80 {dimension_numbers = #tpu.dot_dimension_numbers<[1], [0], [0], [1], [0, 0, 1, 1], [], []>} : vector<328x128xf32>, vector<128x128xf32>, vector<328x128xf32> -> vector<328x128xf32>
    %c290_i32_81 = arith.constant 290 : i32
    %99 = tpu.dynamic_rotate %98 by %c290_i32_81 dim 0 : vector<328x128xf32>, i32 -> vector<328x128xf32>
    %100 = arith.addf %95, %99 : vector<328x128xf32>
    %101 = vector.broadcast %2 : vector<1x128xf32> to vector<328x128xf32>
    %102 = arith.mulf %100, %101 : vector<328x128xf32>
    %103 = vector.broadcast %4 : vector<1x128xf32> to vector<328x128xf32>
    %104 = arith.addf %102, %103 : vector<328x128xf32>
    %c309_i32_82 = arith.constant 309 : i32
    %105 = tpu.dynamic_rotate %1 by %c309_i32_82 dim 0 : vector<328x128xf32>, i32 -> vector<328x128xf32>
    %106 = arith.addf %104, %105 : vector<328x128xf32>
    %cst_83 = arith.constant 0.000000e+00 : f32
    %107 = vector.broadcast %cst_83 : f32 to vector<328x128xf32>
    %108 = arith.maximumf %106, %107 : vector<328x128xf32>
    %c0_84 = arith.constant 0 : index
    %c0_85 = arith.constant 0 : index
    %c0_86 = arith.constant 0 : index
    %109 = vector.load %arg8[%c0_84, %c0_85, %c0_86] : memref<1x328x128xf32, #tpu.memory_space<vmem>>, vector<1x328x128xf32>
    %110 = vector.shape_cast %109 : vector<1x328x128xf32> to vector<328x128xf32>
    %111 = vector.shape_cast %108 : vector<328x128xf32> to vector<1x328x128xf32>
    tpu.vector_store %arg8[%c0_84, %c0_85, %c0_86], %111 {strides = array<i32>} : memref<1x328x128xf32, #tpu.memory_space<vmem>>, vector<1x328x128xf32>,
    return
  }
  func.func @transform_0(%arg0: i32) -> (i32, i32, i32) {
    %c0_i32 = arith.constant 0 : i32
    %c0_i32_0 = arith.constant 0 : i32
    %c0_i32_1 = arith.constant 0 : i32
    return %arg0, %c0_i32, %c0_i32_0 : i32, i32, i32
  }
  func.func @transform_1(%arg0: i32) -> (i32, i32, i32) {
    %c0_i32 = arith.constant 0 : i32
    %c0_i32_0 = arith.constant 0 : i32
    %c0_i32_1 = arith.constant 0 : i32
    %c0_i32_2 = arith.constant 0 : i32
    return %c0_i32, %c0_i32_0, %c0_i32_1 : i32, i32, i32
  }
  func.func @transform_2(%arg0: i32) -> (i32, i32, i32) {
    %c0_i32 = arith.constant 0 : i32
    %c0_i32_0 = arith.constant 0 : i32
    %c0_i32_1 = arith.constant 0 : i32
    %c0_i32_2 = arith.constant 0 : i32
    return %c0_i32, %c0_i32_0, %c0_i32_1 : i32, i32, i32
  }
  func.func @transform_3(%arg0: i32) -> (i32, i32) {
    %c0_i32 = arith.constant 0 : i32
    %c0_i32_0 = arith.constant 0 : i32
    %c0_i32_1 = arith.constant 0 : i32
    return %c0_i32, %c0_i32_0 : i32, i32
  }
  func.func @transform_4(%arg0: i32) -> (i32, i32) {
    %c0_i32 = arith.constant 0 : i32
    %c0_i32_0 = arith.constant 0 : i32
    %c0_i32_1 = arith.constant 0 : i32
    return %c0_i32, %c0_i32_0 : i32, i32
  }
  func.func @transform_5(%arg0: i32) -> (i32, i32) {
    %c0_i32 = arith.constant 0 : i32
    %c0_i32_0 = arith.constant 0 : i32
    %c0_i32_1 = arith.constant 0 : i32
    return %c0_i32, %c0_i32_0 : i32, i32
  }
  func.func @transform_6(%arg0: i32) -> (i32, i32) {
    %c0_i32 = arith.constant 0 : i32
    %c0_i32_0 = arith.constant 0 : i32
    %c0_i32_1 = arith.constant 0 : i32
    return %c0_i32, %c0_i32_0 : i32, i32
  }
  func.func @transform_7(%arg0: i32) -> (i32, i32, i32) {
    %c0_i32 = arith.constant 0 : i32
    %c0_i32_0 = arith.constant 0 : i32
    %c0_i32_1 = arith.constant 0 : i32
    return %arg0, %c0_i32, %c0_i32_0 : i32, i32, i32
  }
}

</mosaic_0001>

<llo_original>
// kernel: tpu_custom_call.1
$region0: #{tpu_custom_call.1}
  #allocation0 [shape = 'u32[]', space=smem, size = 0x4, offset = 0x4, fixed_abs, tag = 'smem constant byte address 0x4 - core index']
  #allocation1 [shape = 'u32[72,128]{1,0:T(1,128)}', space=vmem, size = 0x9000, scoped, tag = 'internal scratch']
  %s0 = inlined_call_operand.hbm [shape: f32[2,328,128], index: 0, kind: input, shape index: {}]
  %s1 = inlined_call_operand.hbm [shape: f32[9,128,128], index: 1, kind: input, shape index: {}]
  %s2 = inlined_call_operand.hbm [shape: f32[9,128,128], index: 2, kind: input, shape index: {}]
  %s3 = inlined_call_operand.vmem [shape: f32[1,128], index: 3, kind: input, shape index: {}]
  %s4 = inlined_call_operand.vmem [shape: f32[1,128], index: 4, kind: input, shape index: {}]
  %s5 = inlined_call_operand.vmem [shape: f32[1,128], index: 5, kind: input, shape index: {}]
  %s6 = inlined_call_operand.vmem [shape: f32[328,1], index: 6, kind: input, shape index: {}]
  %s7 = inlined_call_operand.hbm [shape: f32[2,328,128], index: 7, kind: output, shape index: {}]
  %s8 = sld [smem:[#allocation0]]
  $region73: #{tpu_custom_call.1} parent=0
    _
  %s10 = ssub.s32 1, %s8
  %s11 = scalar_select 0, %s10, %s8
  $region1: #{tpu_custom_call.1} parent=0
    #allocation2 [shape = 'u8[335872]{0}', space=vmem, size = 0x52000, scoped, tag = 'input window, operand 0']
    #allocation3 [shape = 's32[2]{0}', space=sflag, size = 0x8, scoped, tag = 'scoped memory for tpu_custom_call.1']
    #allocation4 [shape = 's32[2]{0}', space=sflag, size = 0x8, scoped, tag = 'scoped memory for tpu_custom_call.1']
    #allocation5 [shape = 'u8[589824]{0}', space=vmem, size = 0x90000, scoped, tag = 'input window, operand 1, single buffered']
    #allocation6 [shape = 's32[1]{0}', space=sflag, size = 0x4, scoped, tag = 'scoped memory for tpu_custom_call.1']
    #allocation7 [shape = 'u8[589824]{0}', space=vmem, size = 0x90000, scoped, tag = 'input window, operand 2, single buffered']
    #allocation8 [shape = 'u8[335872]{0}', space=vmem, size = 0x52000, scoped, tag = 'output window, operand 0']
    %12 = vsyncpa [#allocation3], 0
    %s13 = scalar_lea.sflag [#allocation3], 1
    %14 = vsyncpa %s13, 0
    %15 = vsyncpa [#allocation6], 0
    %16 = vsyncpa [#allocation4], 0
    %s17 = scalar_lea.sflag [#allocation4], 1
    %18 = vsyncpa %s17, 0
    loop: start=0, step=1, limit=4
    $region2: #{tpu_custom_call.1} parent=1 // loop_pre_header
      _
    $region3: #{tpu_custom_call.1} parent=1 // loop_header
      %s20 = sphi 0, %s24
      %p21 = scmp.ge.s32.totalorder %s20, 4
      %s30 = sphi 0, %s32
      %s33 = sphi 0, %s30
      %s34 = sphi 0, %s33
      %s50 = sphi 0, %s34
      %s54 = sphi 0, %s54
      %s56 = sphi 0, %s54
      %s57 = sphi 0, %s56
      %s71 = sphi 0, %s57
      %s75 = sphi 0, %s75
      %s77 = sphi 0, %s75
      %s78 = sphi 0, %s77
      %s92 = sphi 0, %s78
      %s96 = sphi 0, %s96
      %s98 = sphi 0, %s96
      %s99 = sphi 0, %s98
      %s113 = sphi 0, %s99
      %s117 = sphi 0, %s117
      %s119 = sphi 0, %s117
      %s120 = sphi 0, %s119
      %s134 = sphi 0, %s120
      %s138 = sphi 0, %s138
      %s140 = sphi 0, %s138
      %s141 = sphi 0, %s140
      %s155 = sphi 0, %s141
      %s159 = sphi 0, %s159
      %s161 = sphi 0, %s159
      %s162 = sphi 0, %s161
      %s176 = sphi 0, %s162
      %s182 = sphi 0, %s184
      %s185 = sphi 0, %s182
      %s186 = sphi 0, %s185
      %s202 = sphi 0, %s186
    $region4: #{tpu_custom_call.1} parent=1 // loop_header_branch
      %23 = sbr.rel (%p21) target = $region8
    $region5: #{tpu_custom_call.1} parent=1 // loop_body
      %s25 = ssub.s32 %s20, 1
      %s26 = ssub.s32 %s20, 2
      %s27 = sadd.s32 %s20, 1
      %s28 = ssub.s32 %s20, %s27
      %p29 = scmp.eq.s32.totalorder %s28, 0
      %s31 = sadd.s32 %s30, 1
      %s32 = scalar_select %p29, %s30, %s31
      %p35 = pneg %p29
      %p36 = scmp.eq.s32.totalorder %s20, 1
      %p37 = por %p35, %p36
      %p38 = scmp.ne.s32.totalorder %s30, %s33
      %p39 = scmp.eq.s32.totalorder %s20, 0
      %p40 = por %p38, %p39
      %p41 = scmp.ne.s32.totalorder %s30, %s33
      %p42 = scmp.eq.s32.totalorder %s25, 1
      %p43 = por %p41, %p42
      %p44 = scmp.ne.s32.totalorder %s33, %s34
      %p45 = scmp.eq.s32.totalorder %s25, 0
      %p46 = por %p44, %p45
      %p47 = scmp.ne.s32.totalorder %s33, %s34
      %p48 = scmp.eq.s32.totalorder %s26, 1
      %p49 = por %p47, %p48
      %p51 = scmp.ne.s32.totalorder %s34, %s50
      %p52 = scmp.eq.s32.totalorder %s26, 0
      %p53 = por %p51, %p52
      %s55 = sadd.s32 %s54, 1
      %p58 = scmp.eq.s32.totalorder %s20, 1
      %p59 = scmp.ne.s32.totalorder %s54, %s56
      %p60 = scmp.eq.s32.totalorder %s20, 0
      %p61 = por %p59, %p60
      %p62 = scmp.ne.s32.totalorder %s54, %s56
      %p63 = scmp.eq.s32.totalorder %s25, 1
      %p64 = por %p62, %p63
      %p65 = scmp.ne.s32.totalorder %s56, %s57
      %p66 = scmp.eq.s32.totalorder %s25, 0
      %p67 = por %p65, %p66
      %p68 = scmp.ne.s32.totalorder %s56, %s57
      %p69 = scmp.eq.s32.totalorder %s26, 1
      %p70 = por %p68, %p69
      %p72 = scmp.ne.s32.totalorder %s57, %s71
      %p73 = scmp.eq.s32.totalorder %s26, 0
      %p74 = por %p72, %p73
      %s76 = sadd.s32 %s75, 1
      %p79 = scmp.eq.s32.totalorder %s20, 1
      %p80 = scmp.ne.s32.totalorder %s75, %s77
      %p81 = scmp.eq.s32.totalorder %s20, 0
      %p82 = por %p80, %p81
      %p83 = scmp.ne.s32.totalorder %s75, %s77
      %p84 = scmp.eq.s32.totalorder %s25, 1
      %p85 = por %p83, %p84
      %p86 = scmp.ne.s32.totalorder %s77, %s78
      %p87 = scmp.eq.s32.totalorder %s25, 0
      %p88 = por %p86, %p87
      %p89 = scmp.ne.s32.totalorder %s77, %s78
      %p90 = scmp.eq.s32.totalorder %s26, 1
      %p91 = por %p89, %p90
      %p93 = scmp.ne.s32.totalorder %s78, %s92
      %p94 = scmp.eq.s32.totalorder %s26, 0
      %p95 = por %p93, %p94
      %s97 = sadd.s32 %s96, 1
      %p100 = scmp.eq.s32.totalorder %s20, 1
      %p101 = scmp.ne.s32.totalorder %s96, %s98
      %p102 = scmp.eq.s32.totalorder %s20, 0
      %p103 = por %p101, %p102
      %p104 = scmp.ne.s32.totalorder %s96, %s98
      %p105 = scmp.eq.s32.totalorder %s25, 1
      %p106 = por %p104, %p105
      %p107 = scmp.ne.s32.totalorder %s98, %s99
      %p108 = scmp.eq.s32.totalorder %s25, 0
      %p109 = por %p107, %p108
      %p110 = scmp.ne.s32.totalorder %s98, %s99
      %p111 = scmp.eq.s32.totalorder %s26, 1
      %p112 = por %p110, %p111
      %p114 = scmp.ne.s32.totalorder %s99, %s113
      %p115 = scmp.eq.s32.totalorder %s26, 0
      %p116 = por %p114, %p115
      %s118 = sadd.s32 %s117, 1
      %p121 = scmp.eq.s32.totalorder %s20, 1
      %p122 = scmp.ne.s32.totalorder %s117, %s119
      %p123 = scmp.eq.s32.totalorder %s20, 0
      %p124 = por %p122, %p123
      %p125 = scmp.ne.s32.totalorder %s117, %s119
      %p126 = scmp.eq.s32.totalorder %s25, 1
      %p127 = por %p125, %p126
      %p128 = scmp.ne.s32.totalorder %s119, %s120
      %p129 = scmp.eq.s32.totalorder %s25, 0
      %p130 = por %p128, %p129
      %p131 = scmp.ne.s32.totalorder %s119, %s120
      %p132 = scmp.eq.s32.totalorder %s26, 1
      %p133 = por %p131, %p132
      %p135 = scmp.ne.s32.totalorder %s120, %s134
      %p136 = scmp.eq.s32.totalorder %s26, 0
      %p137 = por %p135, %p136
      %s139 = sadd.s32 %s138, 1
      %p142 = scmp.eq.s32.totalorder %s20, 1
      %p143 = scmp.ne.s32.totalorder %s138, %s140
      %p144 = scmp.eq.s32.totalorder %s20, 0
      %p145 = por %p143, %p144
      %p146 = scmp.ne.s32.totalorder %s138, %s140
      %p147 = scmp.eq.s32.totalorder %s25, 1
      %p148 = por %p146, %p147
      %p149 = scmp.ne.s32.totalorder %s140, %s141
      %p150 = scmp.eq.s32.totalorder %s25, 0
      %p151 = por %p149, %p150
      %p152 = scmp.ne.s32.totalorder %s140, %s141
      %p153 = scmp.eq.s32.totalorder %s26, 1
      %p154 = por %p152, %p153
      %p156 = scmp.ne.s32.totalorder %s141, %s155
      %p157 = scmp.eq.s32.totalorder %s26, 0
      %p158 = por %p156, %p157
      %s160 = sadd.s32 %s159, 1
      %p163 = scmp.eq.s32.totalorder %s20, 1
      %p164 = scmp.ne.s32.totalorder %s159, %s161
      %p165 = scmp.eq.s32.totalorder %s20, 0
      %p166 = por %p164, %p165
      %p167 = scmp.ne.s32.totalorder %s159, %s161
      %p168 = scmp.eq.s32.totalorder %s25, 1
      %p169 = por %p167, %p168
      %p170 = scmp.ne.s32.totalorder %s161, %s162
      %p171 = scmp.eq.s32.totalorder %s25, 0
      %p172 = por %p170, %p171
      %p173 = scmp.ne.s32.totalorder %s161, %s162
      %p174 = scmp.eq.s32.totalorder %s26, 1
      %p175 = por %p173, %p174
      %p177 = scmp.ne.s32.totalorder %s162, %s176
      %p178 = scmp.eq.s32.totalorder %s26, 0
      %p179 = por %p177, %p178
      %s180 = ssub.s32 %s20, %s27
      %p181 = scmp.eq.s32.totalorder %s180, 0
      %s183 = sadd.s32 %s182, 1
      %s184 = scalar_select %p181, %s182, %s183
      %p187 = pneg %p181
      %p188 = scmp.eq.s32.totalorder %s20, 1
      %p189 = por %p187, %p188
      %p190 = scmp.ne.s32.totalorder %s182, %s185
      %p191 = scmp.eq.s32.totalorder %s20, 0
      %p192 = por %p190, %p191
      %p193 = scmp.ne.s32.totalorder %s182, %s185
      %p194 = scmp.eq.s32.totalorder %s25, 1
      %p195 = por %p193, %p194
      %p196 = scmp.ne.s32.totalorder %s185, %s186
      %p197 = scmp.eq.s32.totalorder %s25, 0
      %p198 = por %p196, %p197
      %p199 = scmp.ne.s32.totalorder %s185, %s186
      %p200 = scmp.eq.s32.totalorder %s26, 1
      %p201 = por %p199, %p200
      %p203 = scmp.ne.s32.totalorder %s186, %s202
      %p204 = scmp.eq.s32.totalorder %s26, 0
      %p205 = por %p203, %p204
      %p206 = scmp.le.s32.totalorder 1, %s20
      %p207 = scmp.lt.s32.totalorder %s20, 3
      %p208 = pnand %p206, %p207
      %p209 = pneg %p208
      // Predicated region
      $region9: #{tpu_custom_call.1} parent=5 // pred_check
        _
      $region10: #{tpu_custom_call.1} parent=5 // pred_check_branch
        %211 = sbr.rel (%p208) target = $region12
      $region11: #{tpu_custom_call.1} parent=5 // pred_region
        %s212 = ssub.s32 %s20, 1
        // Predicated region
        $region13: #{tpu_custom_call.1} parent=11 // pred_check
          %p213 = pneg %p67
        $region14: #{tpu_custom_call.1} parent=11 // pred_check_branch
          %215 = sbr.rel (%p213) target = $region16
        $region15: #{tpu_custom_call.1} parent=11 // pred_region
          %217 = vsyncadd [#allocation6], 0
          %s218 = sshll.u32 %s1, 4
          %s219 = int_to_ptr.hbm [resolvable:$true] %s218
          %s220 = sshll.u32 [#allocation5], 4
          %s221 = int_to_ptr.vmem [resolvable:$true] %s220
          %226 = dma.hbm_to_vmem [thread:$0]  %s219, 18432, %s221, [#allocation6], 128, 128, 8
        $region16: #{tpu_custom_call.1} parent=11 // pred_fallthru
          _
        // Predicated region
        $region17: #{tpu_custom_call.1} parent=11 // pred_check
          %p227 = pneg %p88
        $region18: #{tpu_custom_call.1} parent=11 // pred_check_branch
          %229 = sbr.rel (%p227) target = $region20
        $region19: #{tpu_custom_call.1} parent=11 // pred_region
          %231 = vsyncadd [#allocation6], 0
          %s232 = sshll.u32 %s2, 4
          %s233 = int_to_ptr.hbm [resolvable:$true] %s232
          %s234 = sshll.u32 [#allocation7], 4
          %s235 = int_to_ptr.vmem [resolvable:$true] %s234
          %240 = dma.hbm_to_vmem [thread:$0]  %s233, 18432, %s235, [#allocation6], 128, 128, 8
        $region20: #{tpu_custom_call.1} parent=11 // pred_fallthru
          _
        // Predicated region
        $region21: #{tpu_custom_call.1} parent=11 // pred_check
          %p241 = pneg %p109
        $region22: #{tpu_custom_call.1} parent=11 // pred_check_branch
          %243 = sbr.rel (%p241) target = $region24
        $region23: #{tpu_custom_call.1} parent=11 // pred_region
          _
        $region24: #{tpu_custom_call.1} parent=11 // pred_fallthru
          _
        // Predicated region
        $region25: #{tpu_custom_call.1} parent=11 // pred_check
          %p244 = pneg %p130
        $region26: #{tpu_custom_call.1} parent=11 // pred_check_branch
          %246 = sbr.rel (%p244) target = $region28
        $region27: #{tpu_custom_call.1} parent=11 // pred_region
          _
        $region28: #{tpu_custom_call.1} parent=11 // pred_fallthru
          _
        // Predicated region
        $region29: #{tpu_custom_call.1} parent=11 // pred_check
          %p247 = pneg %p151
        $region30: #{tpu_custom_call.1} parent=11 // pred_check_branch
          %249 = sbr.rel (%p247) target = $region32
        $region31: #{tpu_custom_call.1} parent=11 // pred_region
          _
        $region32: #{tpu_custom_call.1} parent=11 // pred_fallthru
          _
        // Predicated region
        $region33: #{tpu_custom_call.1} parent=11 // pred_check
          %p250 = pneg %p172
        $region34: #{tpu_custom_call.1} parent=11 // pred_check_branch
          %252 = sbr.rel (%p250) target = $region36
        $region35: #{tpu_custom_call.1} parent=11 // pred_region
          _
        $region36: #{tpu_custom_call.1} parent=11 // pred_fallthru
          _
      $region12: #{tpu_custom_call.1} parent=5 // pred_fallthru
        _
      %p253 = scmp.lt.s32.totalorder %s20, 2
      // Predicated region
      $region37: #{tpu_custom_call.1} parent=5 // pred_check
        %p254 = pneg %p253
      $region38: #{tpu_custom_call.1} parent=5 // pred_check_branch
        %256 = sbr.rel (%p254) target = $region40
      $region39: #{tpu_custom_call.1} parent=5 // pred_region
        // Predicated region
        $region41: #{tpu_custom_call.1} parent=39 // pred_check
          %p257 = pneg %p40
        $region42: #{tpu_custom_call.1} parent=39 // pred_check_branch
          %259 = sbr.rel (%p257) target = $region44
        $region43: #{tpu_custom_call.1} parent=39 // pred_region
          %s260 = sand.u32 %s30, 1
          %s261 = scalar_lea.sflag [#allocation3], %s260
          %s262 = sand.u32 %s30, 1
          %s263 = smul.addr %s262, 328
          %s264 = scalar_lea.vmem [#allocation2], %s263
          %266 = vsyncadd %s261, 0
          %s267 = smul.addr %s20, 41
          %s268 = smul.addr %s267, 8
          %s269 = scalar_lea.hbm %s0, %s268
          %s270 = sshll.u32 %s269, 4
          %s271 = int_to_ptr.hbm [resolvable:$true] %s270
          %s272 = sshll.u32 %s264, 4
          %s273 = int_to_ptr.vmem [resolvable:$true] %s272
          %278 = dma.hbm_to_vmem [thread:$0]  %s271, 5248, %s273, %s261, 128, 128, 8
        $region44: #{tpu_custom_call.1} parent=39 // pred_fallthru
          _
      $region40: #{tpu_custom_call.1} parent=5 // pred_fallthru
        _
      %p279 = scmp.le.s32.totalorder 1, %s20
      %p280 = scmp.lt.s32.totalorder %s20, 3
      %p281 = pnand %p279, %p280
      %p282 = pneg %p281
      // Predicated region
      $region45: #{tpu_custom_call.1} parent=5 // pred_check
        _
      $region46: #{tpu_custom_call.1} parent=5 // pred_check_branch
        %284 = sbr.rel (%p281) target = $region48
      $region47: #{tpu_custom_call.1} parent=5 // pred_region
        %s285 = ssub.s32 %s20, 1
        %s286 = sand.u32 %s33, 1
        %s287 = scalar_lea.sflag [#allocation3], %s286
        %s288 = sand.u32 %s33, 1
        %s289 = smul.addr %s288, 328
        %s290 = scalar_lea.vmem [#allocation2], %s289
        // Predicated region
        $region49: #{tpu_custom_call.1} parent=47 // pred_check
          %p291 = pneg %p46
        $region50: #{tpu_custom_call.1} parent=47 // pred_check_branch
          %293 = sbr.rel (%p291) target = $region52
        $region51: #{tpu_custom_call.1} parent=47 // pred_region
          %295 = dma.done %s287, 5248
        $region52: #{tpu_custom_call.1} parent=47 // pred_fallthru
          _
        // Predicated region
        $region53: #{tpu_custom_call.1} parent=47 // pred_check
          %p296 = pneg %p67
        $region54: #{tpu_custom_call.1} parent=47 // pred_check_branch
          %298 = sbr.rel (%p296) target = $region56
        $region55: #{tpu_custom_call.1} parent=47 // pred_region
          %300 = dma.done [#allocation6], 18432
        $region56: #{tpu_custom_call.1} parent=47 // pred_fallthru
          _
        // Predicated region
        $region57: #{tpu_custom_call.1} parent=47 // pred_check
          %p301 = pneg %p88
        $region58: #{tpu_custom_call.1} parent=47 // pred_check_branch
          %303 = sbr.rel (%p301) target = $region60
        $region59: #{tpu_custom_call.1} parent=47 // pred_region
          %305 = dma.done [#allocation6], 18432
        $region60: #{tpu_custom_call.1} parent=47 // pred_fallthru
          _
        %s306 = sand.u32 %s33, 1
        %s307 = scalar_lea.sflag [#allocation3], %s306
        %s308 = sand.u32 %s33, 1
        %s309 = smul.addr %s308, 328
        %s310 = scalar_lea.vmem [#allocation2], %s309
        %p311 = pneg %p46
        %p312 = pneg %p43
        %p313 = pneg %p67
        %p314 = pneg %p64
        %p315 = pneg %p88
        %p316 = pneg %p85
        %p317 = pneg %p109
        %p318 = pneg %p106
        %p319 = pneg %p130
        %p320 = pneg %p127
        %p321 = pneg %p151
        %p322 = pneg %p148
        %p323 = pneg %p172
        %p324 = pneg %p169
        %p325 = pneg %p198
        %p326 = pneg %p195
        %s327 = sand.u32 %s185, 1
        %s328 = scalar_lea.sflag [#allocation4], %s327
        %s329 = sand.u32 %s185, 1
        %s330 = smul.addr %s329, 328
        %s331 = scalar_lea.vmem [#allocation8], %s330
        %v332 = vld [vmem:[%s290] sm:$0xff]
        %v333 = vld [vmem:[%s290 + $0x8] sm:$0xff]
        %v334 = vld [vmem:[%s290 + $0x10] sm:$0xff]
        %v335 = vld [vmem:[%s290 + $0x18] sm:$0xff]
        %v336 = vld [vmem:[%s290 + $0x20] sm:$0xff]
        %v337 = vld [vmem:[%s290 + $0x28] sm:$0xff]
        %v338 = vld [vmem:[%s290 + $0x30] sm:$0xff]
        %v339 = vld [vmem:[%s290 + $0x38] sm:$0xff]
        %v340 = vld [vmem:[%s290 + $0x40] sm:$0xff]
        %v341 = vld [vmem:[%s290 + $0x48] sm:$0xff]
        %v342 = vld [vmem:[%s290 + $0x50] sm:$0xff]
        %v343 = vld [vmem:[%s290 + $0x58] sm:$0xff]
        %v344 = vld [vmem:[%s290 + $0x60] sm:$0xff]
        %v345 = vld [vmem:[%s290 + $0x68] sm:$0xff]
        %v346 = vld [vmem:[%s290 + $0x70] sm:$0xff]
        %v347 = vld [vmem:[%s290 + $0x78] sm:$0xff]
        %v348 = vld [vmem:[%s290 + $0x80] sm:$0xff]
        %v349 = vld [vmem:[%s290 + $0x88] sm:$0xff]
        %v350 = vld [vmem:[%s290 + $0x90] sm:$0xff]
        %v351 = vld [vmem:[%s290 + $0x98] sm:$0xff]
        %v352 = vld [vmem:[%s290 + $0xa0] sm:$0xff]
        %v353 = vld [vmem:[%s290 + $0xa8] sm:$0xff]
        %v354 = vld [vmem:[%s290 + $0xb0] sm:$0xff]
        %v355 = vld [vmem:[%s290 + $0xb8] sm:$0xff]
        %v356 = vld [vmem:[%s290 + $0xc0] sm:$0xff]
        %v357 = vld [vmem:[%s290 + $0xc8] sm:$0xff]
        %v358 = vld [vmem:[%s290 + $0xd0] sm:$0xff]
        %v359 = vld [vmem:[%s290 + $0xd8] sm:$0xff]
        %v360 = vld [vmem:[%s290 + $0xe0] sm:$0xff]
        %v361 = vld [vmem:[%s290 + $0xe8] sm:$0xff]
        %v362 = vld [vmem:[%s290 + $0xf0] sm:$0xff]
        %v363 = vld [vmem:[%s290 + $0xf8] sm:$0xff]
        %v364 = vld [vmem:[%s290 + $0x100] sm:$0xff]
        %v365 = vld [vmem:[%s290 + $0x108] sm:$0xff]
        %v366 = vld [vmem:[%s290 + $0x110] sm:$0xff]
        %v367 = vld [vmem:[%s290 + $0x118] sm:$0xff]
        %v368 = vld [vmem:[%s290 + $0x120] sm:$0xff]
        %v369 = vld [vmem:[%s290 + $0x128] sm:$0xff]
        %v370 = vld [vmem:[%s290 + $0x130] sm:$0xff]
        %v371 = vld [vmem:[%s290 + $0x138] sm:$0xff]
        %v372 = vld [vmem:[%s290 + $0x140] sm:$0xff]
        %v373 = vld [vmem:[%s3] sm:$0x1]
        %v374 = vld [vmem:[%s4] sm:$0x1]
        %v375 = vld [vmem:[%s5] sm:$0x1]
        %v376 = vld [vmem:[%s6] sm:$0xff]
        %v377 = vld [vmem:[%s6 + $0x8] sm:$0xff]
        %v378 = vld [vmem:[%s6 + $0x10] sm:$0xff]
        %v379 = vld [vmem:[%s6 + $0x18] sm:$0xff]
        %v380 = vld [vmem:[%s6 + $0x20] sm:$0xff]
        %v381 = vld [vmem:[%s6 + $0x28] sm:$0xff]
        %v382 = vld [vmem:[%s6 + $0x30] sm:$0xff]
        %v383 = vld [vmem:[%s6 + $0x38] sm:$0xff]
        %v384 = vld [vmem:[%s6 + $0x40] sm:$0xff]
        %v385 = vld [vmem:[%s6 + $0x48] sm:$0xff]
        %v386 = vld [vmem:[%s6 + $0x50] sm:$0xff]
        %v387 = vld [vmem:[%s6 + $0x58] sm:$0xff]
        %v388 = vld [vmem:[%s6 + $0x60] sm:$0xff]
        %v389 = vld [vmem:[%s6 + $0x68] sm:$0xff]
        %v390 = vld [vmem:[%s6 + $0x70] sm:$0xff]
        %v391 = vld [vmem:[%s6 + $0x78] sm:$0xff]
        %v392 = vld [vmem:[%s6 + $0x80] sm:$0xff]
        %v393 = vld [vmem:[%s6 + $0x88] sm:$0xff]
        %v394 = vld [vmem:[%s6 + $0x90] sm:$0xff]
        %v395 = vld [vmem:[%s6 + $0x98] sm:$0xff]
        %v396 = vld [vmem:[%s6 + $0xa0] sm:$0xff]
        %v397 = vld [vmem:[%s6 + $0xa8] sm:$0xff]
        %v398 = vld [vmem:[%s6 + $0xb0] sm:$0xff]
        %v399 = vld [vmem:[%s6 + $0xb8] sm:$0xff]
        %v400 = vld [vmem:[%s6 + $0xc0] sm:$0xff]
        %v401 = vld [vmem:[%s6 + $0xc8] sm:$0xff]
        %v402 = vld [vmem:[%s6 + $0xd0] sm:$0xff]
        %v403 = vld [vmem:[%s6 + $0xd8] sm:$0xff]
        %v404 = vld [vmem:[%s6 + $0xe0] sm:$0xff]
        %v405 = vld [vmem:[%s6 + $0xe8] sm:$0xff]
        %v406 = vld [vmem:[%s6 + $0xf0] sm:$0xff]
        %v407 = vld [vmem:[%s6 + $0xf8] sm:$0xff]
        %v408 = vld [vmem:[%s6 + $0x100] sm:$0xff]
        %v409 = vld [vmem:[%s6 + $0x108] sm:$0xff]
        %v410 = vld [vmem:[%s6 + $0x110] sm:$0xff]
        %v411 = vld [vmem:[%s6 + $0x118] sm:$0xff]
        %v412 = vld [vmem:[%s6 + $0x120] sm:$0xff]
        %v413 = vld [vmem:[%s6 + $0x128] sm:$0xff]
        %v414 = vld [vmem:[%s6 + $0x130] sm:$0xff]
        %v415 = vld [vmem:[%s6 + $0x138] sm:$0xff]
        %v416 = vld [vmem:[%s6 + $0x140] sm:$0xff]
        %v417 = vld [vmem:[#allocation5] sm:$0xff]
        %v418 = vld [vmem:[#allocation5 + $0x8] sm:$0xff]
        %v419 = vld [vmem:[#allocation5 + $0x10] sm:$0xff]
        %v420 = vld [vmem:[#allocation5 + $0x18] sm:$0xff]
        %v421 = vld [vmem:[#allocation5 + $0x20] sm:$0xff]
        %v422 = vld [vmem:[#allocation5 + $0x28] sm:$0xff]
        %v423 = vld [vmem:[#allocation5 + $0x30] sm:$0xff]
        %v424 = vld [vmem:[#allocation5 + $0x38] sm:$0xff]
        %v425 = vld [vmem:[#allocation5 + $0x40] sm:$0xff]
        %v426 = vld [vmem:[#allocation5 + $0x48] sm:$0xff]
        %v427 = vld [vmem:[#allocation5 + $0x50] sm:$0xff]
        %v428 = vld [vmem:[#allocation5 + $0x58] sm:$0xff]
        %v429 = vld [vmem:[#allocation5 + $0x60] sm:$0xff]
        %v430 = vld [vmem:[#allocation5 + $0x68] sm:$0xff]
        %v431 = vld [vmem:[#allocation5 + $0x70] sm:$0xff]
        %v432 = vld [vmem:[#allocation5 + $0x78] sm:$0xff]
        %s433 = scalar_lea.vmem [#allocation5], 128
        %v434 = vld [vmem:[%s433] sm:$0xff]
        %v435 = vld [vmem:[%s433 + $0x8] sm:$0xff]
        %v436 = vld [vmem:[%s433 + $0x10] sm:$0xff]
        %v437 = vld [vmem:[%s433 + $0x18] sm:$0xff]
        %v438 = vld [vmem:[%s433 + $0x20] sm:$0xff]
        %v439 = vld [vmem:[%s433 + $0x28] sm:$0xff]
        %v440 = vld [vmem:[%s433 + $0x30] sm:$0xff]
        %v441 = vld [vmem:[%s433 + $0x38] sm:$0xff]
        %v442 = vld [vmem:[%s433 + $0x40] sm:$0xff]
        %v443 = vld [vmem:[%s433 + $0x48] sm:$0xff]
        %v444 = vld [vmem:[%s433 + $0x50] sm:$0xff]
        %v445 = vld [vmem:[%s433 + $0x58] sm:$0xff]
        %v446 = vld [vmem:[%s433 + $0x60] sm:$0xff]
        %v447 = vld [vmem:[%s433 + $0x68] sm:$0xff]
        %v448 = vld [vmem:[%s433 + $0x70] sm:$0xff]
        %v449 = vld [vmem:[%s433 + $0x78] sm:$0xff]
        %450 = vmatpush.msra.mxu0 %v449
        %451 = vmatpush.msra.mxu0 %v448
        %452 = vmatpush.msra.mxu0 %v447
        %453 = vmatpush.msra.mxu0 %v446
        %454 = vmatpush.msra.mxu0 %v445
        %455 = vmatpush.msra.mxu0 %v444
        %456 = vmatpush.msra.mxu0 %v443
        %457 = vmatpush.msra.mxu0 %v442
        %458 = vmatpush.msra.mxu0 %v441
        %459 = vmatpush.msra.mxu0 %v440
        %460 = vmatpush.msra.mxu0 %v439
        %461 = vmatpush.msra.mxu0 %v438
        %462 = vmatpush.msra.mxu0 %v437
        %463 = vmatpush.msra.mxu0 %v436
        %464 = vmatpush.msra.mxu0 %v435
        %465 = vmatpush.msra.mxu0 %v434
        %466 = vmatmul.f32.gmra.mxu0 %v332
        %v467 = vpop.f32.mrf.mxu0
        %v468 = vadd.f32 0.0, %v467
        %469 = vmatmul.f32.gmra.mxu0 %v333
        %v470 = vpop.f32.mrf.mxu0
        %v471 = vadd.f32 0.0, %v470
        %472 = vmatmul.f32.gmra.mxu0 %v334
        %v473 = vpop.f32.mrf.mxu0
        %v474 = vadd.f32 0.0, %v473
        %475 = vmatmul.f32.gmra.mxu0 %v335
        %v476 = vpop.f32.mrf.mxu0
        %v477 = vadd.f32 0.0, %v476
        %478 = vmatmul.f32.gmra.mxu0 %v336
        %v479 = vpop.f32.mrf.mxu0
        %v480 = vadd.f32 0.0, %v479
        %481 = vmatmul.f32.gmra.mxu0 %v337
        %v482 = vpop.f32.mrf.mxu0
        %v483 = vadd.f32 0.0, %v482
        %484 = vmatmul.f32.gmra.mxu0 %v338
        %v485 = vpop.f32.mrf.mxu0
        %v486 = vadd.f32 0.0, %v485
        %487 = vmatmul.f32.gmra.mxu0 %v339
        %v488 = vpop.f32.mrf.mxu0
        %v489 = vadd.f32 0.0, %v488
        %490 = vmatmul.f32.gmra.mxu0 %v340
        %v491 = vpop.f32.mrf.mxu0
        %v492 = vadd.f32 0.0, %v491
        %493 = vmatmul.f32.gmra.mxu0 %v341
        %v494 = vpop.f32.mrf.mxu0
        %v495 = vadd.f32 0.0, %v494
        %496 = vmatmul.f32.gmra.mxu0 %v342
        %v497 = vpop.f32.mrf.mxu0
        %v498 = vadd.f32 0.0, %v497
        %499 = vmatmul.f32.gmra.mxu0 %v343
        %v500 = vpop.f32.mrf.mxu0
        %v501 = vadd.f32 0.0, %v500
        %502 = vmatmul.f32.gmra.mxu0 %v344
        %v503 = vpop.f32.mrf.mxu0
        %v504 = vadd.f32 0.0, %v503
        %505 = vmatmul.f32.gmra.mxu0 %v345
        %v506 = vpop.f32.mrf.mxu0
        %v507 = vadd.f32 0.0, %v506
        %508 = vmatmul.f32.gmra.mxu0 %v346
        %v509 = vpop.f32.mrf.mxu0
        %v510 = vadd.f32 0.0, %v509
        %511 = vmatmul.f32.gmra.mxu0 %v347
        %v512 = vpop.f32.mrf.mxu0
        %v513 = vadd.f32 0.0, %v512
        %514 = vmatmul.f32.gmra.mxu0 %v348
        %v515 = vpop.f32.mrf.mxu0
        %v516 = vadd.f32 0.0, %v515
        %517 = vmatmul.f32.gmra.mxu0 %v349
        %v518 = vpop.f32.mrf.mxu0
        %v519 = vadd.f32 0.0, %v518
        %520 = vmatmul.f32.gmra.mxu0 %v350
        %v521 = vpop.f32.mrf.mxu0
        %v522 = vadd.f32 0.0, %v521
        %523 = vmatmul.f32.gmra.mxu0 %v351
        %v524 = vpop.f32.mrf.mxu0
        %v525 = vadd.f32 0.0, %v524
        %526 = vmatmul.f32.gmra.mxu0 %v352
        %v527 = vpop.f32.mrf.mxu0
        %v528 = vadd.f32 0.0, %v527
        %529 = vmatmul.f32.gmra.mxu0 %v353
        %v530 = vpop.f32.mrf.mxu0
        %v531 = vadd.f32 0.0, %v530
        %532 = vmatmul.f32.gmra.mxu0 %v354
        %v533 = vpop.f32.mrf.mxu0
        %v534 = vadd.f32 0.0, %v533
        %535 = vmatmul.f32.gmra.mxu0 %v355
        %v536 = vpop.f32.mrf.mxu0
        %v537 = vadd.f32 0.0, %v536
        %538 = vmatmul.f32.gmra.mxu0 %v356
        %v539 = vpop.f32.mrf.mxu0
        %v540 = vadd.f32 0.0, %v539
        %541 = vmatmul.f32.gmra.mxu0 %v357
        %v542 = vpop.f32.mrf.mxu0
        %v543 = vadd.f32 0.0, %v542
        %544 = vmatmul.f32.gmra.mxu0 %v358
        %v545 = vpop.f32.mrf.mxu0
        %v546 = vadd.f32 0.0, %v545
        %547 = vmatmul.f32.gmra.mxu0 %v359
        %v548 = vpop.f32.mrf.mxu0
        %v549 = vadd.f32 0.0, %v548
        %550 = vmatmul.f32.gmra.mxu0 %v360
        %v551 = vpop.f32.mrf.mxu0
        %v552 = vadd.f32 0.0, %v551
        %553 = vmatmul.f32.gmra.mxu0 %v361
        %v554 = vpop.f32.mrf.mxu0
        %v555 = vadd.f32 0.0, %v554
        %556 = vmatmul.f32.gmra.mxu0 %v362
        %v557 = vpop.f32.mrf.mxu0
        %v558 = vadd.f32 0.0, %v557
        %559 = vmatmul.f32.gmra.mxu0 %v363
        %v560 = vpop.f32.mrf.mxu0
        %v561 = vadd.f32 0.0, %v560
        %562 = vmatmul.f32.gmra.mxu0 %v364
        %v563 = vpop.f32.mrf.mxu0
        %v564 = vadd.f32 0.0, %v563
        %565 = vmatmul.f32.gmra.mxu0 %v365
        %v566 = vpop.f32.mrf.mxu0
        %v567 = vadd.f32 0.0, %v566
        %568 = vmatmul.f32.gmra.mxu0 %v366
        %v569 = vpop.f32.mrf.mxu0
        %v570 = vadd.f32 0.0, %v569
        %571 = vmatmul.f32.gmra.mxu0 %v367
        %v572 = vpop.f32.mrf.mxu0
        %v573 = vadd.f32 0.0, %v572
        %574 = vmatmul.f32.gmra.mxu0 %v368
        %v575 = vpop.f32.mrf.mxu0
        %v576 = vadd.f32 0.0, %v575
        %577 = vmatmul.f32.gmra.mxu0 %v369
        %v578 = vpop.f32.mrf.mxu0
        %v579 = vadd.f32 0.0, %v578
        %580 = vmatmul.f32.gmra.mxu0 %v370
        %v581 = vpop.f32.mrf.mxu0
        %v582 = vadd.f32 0.0, %v581
        %583 = vmatmul.f32.gmra.mxu0 %v371
        %v584 = vpop.f32.mrf.mxu0
        %v585 = vadd.f32 0.0, %v584
        %586 = vmatmul.f32.gmra.mxu0 %v372
        %v587 = vpop.f32.mrf.mxu0
        %v588 = vadd.f32 0.0, %v587
        %589 = vdwg.mxu0
        %v590 = vrot.slane %v468, 1
        %v591 = vrot.slane %v471, 1
        %v592 = vrot.slane %v474, 1
        %v593 = vrot.slane %v477, 1
        %v594 = vrot.slane %v480, 1
        %v595 = vrot.slane %v483, 1
        %v596 = vrot.slane %v486, 1
        %v597 = vrot.slane %v489, 1
        %v598 = vrot.slane %v492, 1
        %v599 = vrot.slane %v495, 1
        %v600 = vrot.slane %v498, 1
        %v601 = vrot.slane %v501, 1
        %v602 = vrot.slane %v504, 1
        %v603 = vrot.slane %v507, 1
        %v604 = vrot.slane %v510, 1
        %v605 = vrot.slane %v513, 1
        %v606 = vrot.slane %v516, 1
        %v607 = vrot.slane %v519, 1
        %v608 = vrot.slane %v522, 1
        %v609 = vrot.slane %v525, 1
        %v610 = vrot.slane %v528, 1
        %v611 = vrot.slane %v531, 1
        %v612 = vrot.slane %v534, 1
        %v613 = vrot.slane %v537, 1
        %v614 = vrot.slane %v540, 1
        %v615 = vrot.slane %v543, 1
        %v616 = vrot.slane %v546, 1
        %v617 = vrot.slane %v549, 1
        %v618 = vrot.slane %v552, 1
        %v619 = vrot.slane %v555, 1
        %v620 = vrot.slane %v558, 1
        %v621 = vrot.slane %v561, 1
        %v622 = vrot.slane %v564, 1
        %v623 = vrot.slane %v567, 1
        %v624 = vrot.slane %v570, 1
        %v625 = vrot.slane %v573, 1
        %v626 = vrot.slane %v576, 1
        %v627 = vrot.slane %v579, 1
        %v628 = vrot.slane %v582, 1
        %v629 = vrot.slane %v585, 1
        %v630 = vrot.slane %v588, 1
        %v631 = vlaneseq
        %v632 = vshrl.u32 %v631, 7
        %vm633 = vcmp.lt.s32.totalorder %v632, 7
        %v634 = vsel %vm633, %v629, %v630
        %v635 = vsel %vm633, %v628, %v629
        %v636 = vsel %vm633, %v627, %v628
        %v637 = vsel %vm633, %v626, %v627
        %v638 = vsel %vm633, %v625, %v626
        %v639 = vsel %vm633, %v624, %v625
        %v640 = vsel %vm633, %v623, %v624
        %v641 = vsel %vm633, %v622, %v623
        %v642 = vsel %vm633, %v621, %v622
        %v643 = vsel %vm633, %v620, %v621
        %v644 = vsel %vm633, %v619, %v620
        %v645 = vsel %vm633, %v618, %v619
        %v646 = vsel %vm633, %v617, %v618
        %v647 = vsel %vm633, %v616, %v617
        %v648 = vsel %vm633, %v615, %v616
        %v649 = vsel %vm633, %v614, %v615
        %v650 = vsel %vm633, %v613, %v614
        %v651 = vsel %vm633, %v612, %v613
        %v652 = vsel %vm633, %v611, %v612
        %v653 = vsel %vm633, %v610, %v611
        %v654 = vsel %vm633, %v609, %v610
        %v655 = vsel %vm633, %v608, %v609
        %v656 = vsel %vm633, %v607, %v608
        %v657 = vsel %vm633, %v606, %v607
        %v658 = vsel %vm633, %v605, %v606
        %v659 = vsel %vm633, %v604, %v605
        %v660 = vsel %vm633, %v603, %v604
        %v661 = vsel %vm633, %v602, %v603
        %v662 = vsel %vm633, %v601, %v602
        %v663 = vsel %vm633, %v600, %v601
        %v664 = vsel %vm633, %v599, %v600
        %v665 = vsel %vm633, %v598, %v599
        %v666 = vsel %vm633, %v597, %v598
        %v667 = vsel %vm633, %v596, %v597
        %v668 = vsel %vm633, %v595, %v596
        %v669 = vsel %vm633, %v594, %v595
        %v670 = vsel %vm633, %v593, %v594
        %v671 = vsel %vm633, %v592, %v593
        %v672 = vsel %vm633, %v591, %v592
        %v673 = vsel %vm633, %v590, %v591
        %v674 = vsel %vm633, %v630, %v590
        %675 = vmatpush.msra.mxu0 %v432
        %676 = vmatpush.msra.mxu0 %v431
        %677 = vmatpush.msra.mxu0 %v430
        %678 = vmatpush.msra.mxu0 %v429
        %679 = vmatpush.msra.mxu0 %v428
        %680 = vmatpush.msra.mxu0 %v427
        %681 = vmatpush.msra.mxu0 %v426
        %682 = vmatpush.msra.mxu0 %v425
        %683 = vmatpush.msra.mxu0 %v424
        %684 = vmatpush.msra.mxu0 %v423
        %685 = vmatpush.msra.mxu0 %v422
        %686 = vmatpush.msra.mxu0 %v421
        %687 = vmatpush.msra.mxu0 %v420
        %688 = vmatpush.msra.mxu0 %v419
        %689 = vmatpush.msra.mxu0 %v418
        %690 = vmatpush.msra.mxu0 %v417
        %691 = vmatmul.f32.gmra.mxu0 %v332
        %v692 = vpop.f32.mrf.mxu0
        %v693 = vadd.f32 %v673, %v692
        %694 = vmatmul.f32.gmra.mxu0 %v333
        %v695 = vpop.f32.mrf.mxu0
        %v696 = vadd.f32 %v672, %v695
        %697 = vmatmul.f32.gmra.mxu0 %v334
        %v698 = vpop.f32.mrf.mxu0
        %v699 = vadd.f32 %v671, %v698
        %700 = vmatmul.f32.gmra.mxu0 %v335
        %v701 = vpop.f32.mrf.mxu0
        %v702 = vadd.f32 %v670, %v701
        %703 = vmatmul.f32.gmra.mxu0 %v336
        %v704 = vpop.f32.mrf.mxu0
        %v705 = vadd.f32 %v669, %v704
        %706 = vmatmul.f32.gmra.mxu0 %v337
        %v707 = vpop.f32.mrf.mxu0
        %v708 = vadd.f32 %v668, %v707
        %709 = vmatmul.f32.gmra.mxu0 %v338
        %v710 = vpop.f32.mrf.mxu0
        %v711 = vadd.f32 %v667, %v710
        %712 = vmatmul.f32.gmra.mxu0 %v339
        %v713 = vpop.f32.mrf.mxu0
        %v714 = vadd.f32 %v666, %v713
        %715 = vmatmul.f32.gmra.mxu0 %v340
        %v716 = vpop.f32.mrf.mxu0
        %v717 = vadd.f32 %v665, %v716
        %718 = vmatmul.f32.gmra.mxu0 %v341
        %v719 = vpop.f32.mrf.mxu0
        %v720 = vadd.f32 %v664, %v719
        %721 = vmatmul.f32.gmra.mxu0 %v342
        %v722 = vpop.f32.mrf.mxu0
        %v723 = vadd.f32 %v663, %v722
        %724 = vmatmul.f32.gmra.mxu0 %v343
        %v725 = vpop.f32.mrf.mxu0
        %v726 = vadd.f32 %v662, %v725
        %727 = vmatmul.f32.gmra.mxu0 %v344
        %v728 = vpop.f32.mrf.mxu0
        %v729 = vadd.f32 %v661, %v728
        %730 = vmatmul.f32.gmra.mxu0 %v345
        %v731 = vpop.f32.mrf.mxu0
        %v732 = vadd.f32 %v660, %v731
        %733 = vmatmul.f32.gmra.mxu0 %v346
        %v734 = vpop.f32.mrf.mxu0
        %v735 = vadd.f32 %v659, %v734
        %736 = vmatmul.f32.gmra.mxu0 %v347
        %v737 = vpop.f32.mrf.mxu0
        %v738 = vadd.f32 %v658, %v737
        %739 = vmatmul.f32.gmra.mxu0 %v348
        %v740 = vpop.f32.mrf.mxu0
        %v741 = vadd.f32 %v657, %v740
        %742 = vmatmul.f32.gmra.mxu0 %v349
        %v743 = vpop.f32.mrf.mxu0
        %v744 = vadd.f32 %v656, %v743
        %745 = vmatmul.f32.gmra.mxu0 %v350
        %v746 = vpop.f32.mrf.mxu0
        %v747 = vadd.f32 %v655, %v746
        %748 = vmatmul.f32.gmra.mxu0 %v351
        %v749 = vpop.f32.mrf.mxu0
        %v750 = vadd.f32 %v654, %v749
        %751 = vmatmul.f32.gmra.mxu0 %v352
        %v752 = vpop.f32.mrf.mxu0
        %v753 = vadd.f32 %v653, %v752
        %754 = vmatmul.f32.gmra.mxu0 %v353
        %v755 = vpop.f32.mrf.mxu0
        %v756 = vadd.f32 %v652, %v755
        %757 = vmatmul.f32.gmra.mxu0 %v354
        %v758 = vpop.f32.mrf.mxu0
        %v759 = vadd.f32 %v651, %v758
        %760 = vmatmul.f32.gmra.mxu0 %v355
        %v761 = vpop.f32.mrf.mxu0
        %v762 = vadd.f32 %v650, %v761
        %763 = vmatmul.f32.gmra.mxu0 %v356
        %v764 = vpop.f32.mrf.mxu0
        %v765 = vadd.f32 %v649, %v764
        %766 = vmatmul.f32.gmra.mxu0 %v357
        %v767 = vpop.f32.mrf.mxu0
        %v768 = vadd.f32 %v648, %v767
        %769 = vmatmul.f32.gmra.mxu0 %v358
        %v770 = vpop.f32.mrf.mxu0
        %v771 = vadd.f32 %v647, %v770
        %772 = vmatmul.f32.gmra.mxu0 %v359
        %v773 = vpop.f32.mrf.mxu0
        %v774 = vadd.f32 %v646, %v773
        %775 = vmatmul.f32.gmra.mxu0 %v360
        %v776 = vpop.f32.mrf.mxu0
        %v777 = vadd.f32 %v645, %v776
        %778 = vmatmul.f32.gmra.mxu0 %v361
        %v779 = vpop.f32.mrf.mxu0
        %v780 = vadd.f32 %v644, %v779
        %781 = vmatmul.f32.gmra.mxu0 %v362
        %v782 = vpop.f32.mrf.mxu0
        %v783 = vadd.f32 %v643, %v782
        %784 = vmatmul.f32.gmra.mxu0 %v363
        %v785 = vpop.f32.mrf.mxu0
        %v786 = vadd.f32 %v642, %v785
        %787 = vmatmul.f32.gmra.mxu0 %v364
        %v788 = vpop.f32.mrf.mxu0
        %v789 = vadd.f32 %v641, %v788
        %790 = vmatmul.f32.gmra.mxu0 %v365
        %v791 = vpop.f32.mrf.mxu0
        %v792 = vadd.f32 %v640, %v791
        %793 = vmatmul.f32.gmra.mxu0 %v366
        %v794 = vpop.f32.mrf.mxu0
        %v795 = vadd.f32 %v639, %v794
        %796 = vmatmul.f32.gmra.mxu0 %v367
        %v797 = vpop.f32.mrf.mxu0
        %v798 = vadd.f32 %v638, %v797
        %799 = vmatmul.f32.gmra.mxu0 %v368
        %v800 = vpop.f32.mrf.mxu0
        %v801 = vadd.f32 %v637, %v800
        %802 = vmatmul.f32.gmra.mxu0 %v369
        %v803 = vpop.f32.mrf.mxu0
        %v804 = vadd.f32 %v636, %v803
        %805 = vmatmul.f32.gmra.mxu0 %v370
        %v806 = vpop.f32.mrf.mxu0
        %v807 = vadd.f32 %v635, %v806
        %808 = vmatmul.f32.gmra.mxu0 %v371
        %v809 = vpop.f32.mrf.mxu0
        %v810 = vadd.f32 %v634, %v809
        %811 = vmatmul.f32.gmra.mxu0 %v372
        %v812 = vpop.f32.mrf.mxu0
        %v813 = vadd.f32 %v674, %v812
        %814 = vdwg.mxu0
        %s815 = scalar_lea.vmem [#allocation5], 256
        %v816 = vld [vmem:[%s815] sm:$0xff]
        %v817 = vld [vmem:[%s815 + $0x8] sm:$0xff]
        %v818 = vld [vmem:[%s815 + $0x10] sm:$0xff]
        %v819 = vld [vmem:[%s815 + $0x18] sm:$0xff]
        %v820 = vld [vmem:[%s815 + $0x20] sm:$0xff]
        %v821 = vld [vmem:[%s815 + $0x28] sm:$0xff]
        %v822 = vld [vmem:[%s815 + $0x30] sm:$0xff]
        %v823 = vld [vmem:[%s815 + $0x38] sm:$0xff]
        %v824 = vld [vmem:[%s815 + $0x40] sm:$0xff]
        %v825 = vld [vmem:[%s815 + $0x48] sm:$0xff]
        %v826 = vld [vmem:[%s815 + $0x50] sm:$0xff]
        %v827 = vld [vmem:[%s815 + $0x58] sm:$0xff]
        %v828 = vld [vmem:[%s815 + $0x60] sm:$0xff]
        %v829 = vld [vmem:[%s815 + $0x68] sm:$0xff]
        %v830 = vld [vmem:[%s815 + $0x70] sm:$0xff]
        %v831 = vld [vmem:[%s815 + $0x78] sm:$0xff]
        %832 = vmatpush.msra.mxu0 %v831
        %833 = vmatpush.msra.mxu0 %v830
        %834 = vmatpush.msra.mxu0 %v829
        %835 = vmatpush.msra.mxu0 %v828
        %836 = vmatpush.msra.mxu0 %v827
        %837 = vmatpush.msra.mxu0 %v826
        %838 = vmatpush.msra.mxu0 %v825
        %839 = vmatpush.msra.mxu0 %v824
        %840 = vmatpush.msra.mxu0 %v823
        %841 = vmatpush.msra.mxu0 %v822
        %842 = vmatpush.msra.mxu0 %v821
        %843 = vmatpush.msra.mxu0 %v820
        %844 = vmatpush.msra.mxu0 %v819
        %845 = vmatpush.msra.mxu0 %v818
        %846 = vmatpush.msra.mxu0 %v817
        %847 = vmatpush.msra.mxu0 %v816
        %848 = vmatmul.f32.gmra.mxu0 %v332
        %v849 = vpop.f32.mrf.mxu0
        %v850 = vadd.f32 0.0, %v849
        %851 = vmatmul.f32.gmra.mxu0 %v333
        %v852 = vpop.f32.mrf.mxu0
        %v853 = vadd.f32 0.0, %v852
        %854 = vmatmul.f32.gmra.mxu0 %v334
        %v855 = vpop.f32.mrf.mxu0
        %v856 = vadd.f32 0.0, %v855
        %857 = vmatmul.f32.gmra.mxu0 %v335
        %v858 = vpop.f32.mrf.mxu0
        %v859 = vadd.f32 0.0, %v858
        %860 = vmatmul.f32.gmra.mxu0 %v336
        %v861 = vpop.f32.mrf.mxu0
        %v862 = vadd.f32 0.0, %v861
        %863 = vmatmul.f32.gmra.mxu0 %v337
        %v864 = vpop.f32.mrf.mxu0
        %v865 = vadd.f32 0.0, %v864
        %866 = vmatmul.f32.gmra.mxu0 %v338
        %v867 = vpop.f32.mrf.mxu0
        %v868 = vadd.f32 0.0, %v867
        %869 = vmatmul.f32.gmra.mxu0 %v339
        %v870 = vpop.f32.mrf.mxu0
        %v871 = vadd.f32 0.0, %v870
        %872 = vmatmul.f32.gmra.mxu0 %v340
        %v873 = vpop.f32.mrf.mxu0
        %v874 = vadd.f32 0.0, %v873
        %875 = vmatmul.f32.gmra.mxu0 %v341
        %v876 = vpop.f32.mrf.mxu0
        %v877 = vadd.f32 0.0, %v876
        %878 = vmatmul.f32.gmra.mxu0 %v342
        %v879 = vpop.f32.mrf.mxu0
        %v880 = vadd.f32 0.0, %v879
        %881 = vmatmul.f32.gmra.mxu0 %v343
        %v882 = vpop.f32.mrf.mxu0
        %v883 = vadd.f32 0.0, %v882
        %884 = vmatmul.f32.gmra.mxu0 %v344
        %v885 = vpop.f32.mrf.mxu0
        %v886 = vadd.f32 0.0, %v885
        %887 = vmatmul.f32.gmra.mxu0 %v345
        %v888 = vpop.f32.mrf.mxu0
        %v889 = vadd.f32 0.0, %v888
        %890 = vmatmul.f32.gmra.mxu0 %v346
        %v891 = vpop.f32.mrf.mxu0
        %v892 = vadd.f32 0.0, %v891
        %893 = vmatmul.f32.gmra.mxu0 %v347
        %v894 = vpop.f32.mrf.mxu0
        %v895 = vadd.f32 0.0, %v894
        %896 = vmatmul.f32.gmra.mxu0 %v348
        %v897 = vpop.f32.mrf.mxu0
        %v898 = vadd.f32 0.0, %v897
        %899 = vmatmul.f32.gmra.mxu0 %v349
        %v900 = vpop.f32.mrf.mxu0
        %v901 = vadd.f32 0.0, %v900
        %902 = vmatmul.f32.gmra.mxu0 %v350
        %v903 = vpop.f32.mrf.mxu0
        %v904 = vadd.f32 0.0, %v903
        %905 = vmatmul.f32.gmra.mxu0 %v351
        %v906 = vpop.f32.mrf.mxu0
        %v907 = vadd.f32 0.0, %v906
        %908 = vmatmul.f32.gmra.mxu0 %v352
        %v909 = vpop.f32.mrf.mxu0
        %v910 = vadd.f32 0.0, %v909
        %911 = vmatmul.f32.gmra.mxu0 %v353
        %v912 = vpop.f32.mrf.mxu0
        %v913 = vadd.f32 0.0, %v912
        %914 = vmatmul.f32.gmra.mxu0 %v354
        %v915 = vpop.f32.mrf.mxu0
        %v916 = vadd.f32 0.0, %v915
        %917 = vmatmul.f32.gmra.mxu0 %v355
        %v918 = vpop.f32.mrf.mxu0
        %v919 = vadd.f32 0.0, %v918
        %920 = vmatmul.f32.gmra.mxu0 %v356
        %v921 = vpop.f32.mrf.mxu0
        %v922 = vadd.f32 0.0, %v921
        %923 = vmatmul.f32.gmra.mxu0 %v357
        %v924 = vpop.f32.mrf.mxu0
        %v925 = vadd.f32 0.0, %v924
        %926 = vmatmul.f32.gmra.mxu0 %v358
        %v927 = vpop.f32.mrf.mxu0
        %v928 = vadd.f32 0.0, %v927
        %929 = vmatmul.f32.gmra.mxu0 %v359
        %v930 = vpop.f32.mrf.mxu0
        %v931 = vadd.f32 0.0, %v930
        %932 = vmatmul.f32.gmra.mxu0 %v360
        %v933 = vpop.f32.mrf.mxu0
        %v934 = vadd.f32 0.0, %v933
        %935 = vmatmul.f32.gmra.mxu0 %v361
        %v936 = vpop.f32.mrf.mxu0
        %v937 = vadd.f32 0.0, %v936
        %938 = vmatmul.f32.gmra.mxu0 %v362
        %v939 = vpop.f32.mrf.mxu0
        %v940 = vadd.f32 0.0, %v939
        %941 = vmatmul.f32.gmra.mxu0 %v363
        %v942 = vpop.f32.mrf.mxu0
        %v943 = vadd.f32 0.0, %v942
        %944 = vmatmul.f32.gmra.mxu0 %v364
        %v945 = vpop.f32.mrf.mxu0
        %v946 = vadd.f32 0.0, %v945
        %947 = vmatmul.f32.gmra.mxu0 %v365
        %v948 = vpop.f32.mrf.mxu0
        %v949 = vadd.f32 0.0, %v948
        %950 = vmatmul.f32.gmra.mxu0 %v366
        %v951 = vpop.f32.mrf.mxu0
        %v952 = vadd.f32 0.0, %v951
        %953 = vmatmul.f32.gmra.mxu0 %v367
        %v954 = vpop.f32.mrf.mxu0
        %v955 = vadd.f32 0.0, %v954
        %956 = vmatmul.f32.gmra.mxu0 %v368
        %v957 = vpop.f32.mrf.mxu0
        %v958 = vadd.f32 0.0, %v957
        %959 = vmatmul.f32.gmra.mxu0 %v369
        %v960 = vpop.f32.mrf.mxu0
        %v961 = vadd.f32 0.0, %v960
        %962 = vmatmul.f32.gmra.mxu0 %v370
        %v963 = vpop.f32.mrf.mxu0
        %v964 = vadd.f32 0.0, %v963
        %965 = vmatmul.f32.gmra.mxu0 %v371
        %v966 = vpop.f32.mrf.mxu0
        %v967 = vadd.f32 0.0, %v966
        %968 = vmatmul.f32.gmra.mxu0 %v372
        %v969 = vpop.f32.mrf.mxu0
        %v970 = vadd.f32 0.0, %v969
        %971 = vdwg.mxu0
        %v972 = vrot.slane %v850, 2
        %v973 = vrot.slane %v853, 2
        %v974 = vrot.slane %v856, 2
        %v975 = vrot.slane %v859, 2
        %v976 = vrot.slane %v862, 2
        %v977 = vrot.slane %v865, 2
        %v978 = vrot.slane %v868, 2
        %v979 = vrot.slane %v871, 2
        %v980 = vrot.slane %v874, 2
        %v981 = vrot.slane %v877, 2
        %v982 = vrot.slane %v880, 2
        %v983 = vrot.slane %v883, 2
        %v984 = vrot.slane %v886, 2
        %v985 = vrot.slane %v889, 2
        %v986 = vrot.slane %v892, 2
        %v987 = vrot.slane %v895, 2
        %v988 = vrot.slane %v898, 2
        %v989 = vrot.slane %v901, 2
        %v990 = vrot.slane %v904, 2
        %v991 = vrot.slane %v907, 2
        %v992 = vrot.slane %v910, 2
        %v993 = vrot.slane %v913, 2
        %v994 = vrot.slane %v916, 2
        %v995 = vrot.slane %v919, 2
        %v996 = vrot.slane %v922, 2
        %v997 = vrot.slane %v925, 2
        %v998 = vrot.slane %v928, 2
        %v999 = vrot.slane %v931, 2
        %v1000 = vrot.slane %v934, 2
        %v1001 = vrot.slane %v937, 2
        %v1002 = vrot.slane %v940, 2
        %v1003 = vrot.slane %v943, 2
        %v1004 = vrot.slane %v946, 2
        %v1005 = vrot.slane %v949, 2
        %v1006 = vrot.slane %v952, 2
        %v1007 = vrot.slane %v955, 2
        %v1008 = vrot.slane %v958, 2
        %v1009 = vrot.slane %v961, 2
        %v1010 = vrot.slane %v964, 2
        %v1011 = vrot.slane %v967, 2
        %v1012 = vrot.slane %v970, 2
        %vm1013 = vcmp.lt.s32.totalorder %v632, 6
        %v1014 = vsel %vm1013, %v1011, %v1012
        %v1015 = vsel %vm1013, %v1010, %v1011
        %v1016 = vsel %vm1013, %v1009, %v1010
        %v1017 = vsel %vm1013, %v1008, %v1009
        %v1018 = vsel %vm1013, %v1007, %v1008
        %v1019 = vsel %vm1013, %v1006, %v1007
        %v1020 = vsel %vm1013, %v1005, %v1006
        %v1021 = vsel %vm1013, %v1004, %v1005
        %v1022 = vsel %vm1013, %v1003, %v1004
        %v1023 = vsel %vm1013, %v1002, %v1003
        %v1024 = vsel %vm1013, %v1001, %v1002
        %v1025 = vsel %vm1013, %v1000, %v1001
        %v1026 = vsel %vm1013, %v999, %v1000
        %v1027 = vsel %vm1013, %v998, %v999
        %v1028 = vsel %vm1013, %v997, %v998
        %v1029 = vsel %vm1013, %v996, %v997
        %v1030 = vsel %vm1013, %v995, %v996
        %v1031 = vsel %vm1013, %v994, %v995
        %v1032 = vsel %vm1013, %v993, %v994
        %v1033 = vsel %vm1013, %v992, %v993
        %v1034 = vsel %vm1013, %v991, %v992
        %v1035 = vsel %vm1013, %v990, %v991
        %v1036 = vsel %vm1013, %v989, %v990
        %v1037 = vsel %vm1013, %v988, %v989
        %v1038 = vsel %vm1013, %v987, %v988
        %v1039 = vsel %vm1013, %v986, %v987
        %v1040 = vsel %vm1013, %v985, %v986
        %v1041 = vsel %vm1013, %v984, %v985
        %v1042 = vsel %vm1013, %v983, %v984
        %v1043 = vsel %vm1013, %v982, %v983
        %v1044 = vsel %vm1013, %v981, %v982
        %v1045 = vsel %vm1013, %v980, %v981
        %v1046 = vsel %vm1013, %v979, %v980
        %v1047 = vsel %vm1013, %v978, %v979
        %v1048 = vsel %vm1013, %v977, %v978
        %v1049 = vsel %vm1013, %v976, %v977
        %v1050 = vsel %vm1013, %v975, %v976
        %v1051 = vsel %vm1013, %v974, %v975
        %v1052 = vsel %vm1013, %v973, %v974
        %v1053 = vsel %vm1013, %v972, %v973
        %v1054 = vsel %vm1013, %v1012, %v972
        %v1055 = vadd.f32 %v693, %v1053
        %v1056 = vadd.f32 %v696, %v1052
        %v1057 = vadd.f32 %v699, %v1051
        %v1058 = vadd.f32 %v702, %v1050
        %v1059 = vadd.f32 %v705, %v1049
        %v1060 = vadd.f32 %v708, %v1048
        %v1061 = vadd.f32 %v711, %v1047
        %v1062 = vadd.f32 %v714, %v1046
        %v1063 = vadd.f32 %v717, %v1045
        %v1064 = vadd.f32 %v720, %v1044
        %v1065 = vadd.f32 %v723, %v1043
        %v1066 = vadd.f32 %v726, %v1042
        %v1067 = vadd.f32 %v729, %v1041
        %v1068 = vadd.f32 %v732, %v1040
        %v1069 = vadd.f32 %v735, %v1039
        %v1070 = vadd.f32 %v738, %v1038
        %v1071 = vadd.f32 %v741, %v1037
        %v1072 = vadd.f32 %v744, %v1036
        %v1073 = vadd.f32 %v747, %v1035
        %v1074 = vadd.f32 %v750, %v1034
        %v1075 = vadd.f32 %v753, %v1033
        %v1076 = vadd.f32 %v756, %v1032
        %v1077 = vadd.f32 %v759, %v1031
        %v1078 = vadd.f32 %v762, %v1030
        %v1079 = vadd.f32 %v765, %v1029
        %v1080 = vadd.f32 %v768, %v1028
        %v1081 = vadd.f32 %v771, %v1027
        %v1082 = vadd.f32 %v774, %v1026
        %v1083 = vadd.f32 %v777, %v1025
        %v1084 = vadd.f32 %v780, %v1024
        %v1085 = vadd.f32 %v783, %v1023
        %v1086 = vadd.f32 %v786, %v1022
        %v1087 = vadd.f32 %v789, %v1021
        %v1088 = vadd.f32 %v792, %v1020
        %v1089 = vadd.f32 %v795, %v1019
        %v1090 = vadd.f32 %v798, %v1018
        %v1091 = vadd.f32 %v801, %v1017
        %v1092 = vadd.f32 %v804, %v1016
        %v1093 = vadd.f32 %v807, %v1015
        %v1094 = vadd.f32 %v810, %v1014
        %v1095 = vadd.f32 %v813, %v1054
        %s1096 = scalar_lea.vmem [#allocation5], 384
        %v1097 = vld [vmem:[%s1096] sm:$0xff]
        %v1098 = vld [vmem:[%s1096 + $0x8] sm:$0xff]
        %v1099 = vld [vmem:[%s1096 + $0x10] sm:$0xff]
        %v1100 = vld [vmem:[%s1096 + $0x18] sm:$0xff]
        %v1101 = vld [vmem:[%s1096 + $0x20] sm:$0xff]
        %v1102 = vld [vmem:[%s1096 + $0x28] sm:$0xff]
        %v1103 = vld [vmem:[%s1096 + $0x30] sm:$0xff]
        %v1104 = vld [vmem:[%s1096 + $0x38] sm:$0xff]
        %v1105 = vld [vmem:[%s1096 + $0x40] sm:$0xff]
        %v1106 = vld [vmem:[%s1096 + $0x48] sm:$0xff]
        %v1107 = vld [vmem:[%s1096 + $0x50] sm:$0xff]
        %v1108 = vld [vmem:[%s1096 + $0x58] sm:$0xff]
        %v1109 = vld [vmem:[%s1096 + $0x60] sm:$0xff]
        %v1110 = vld [vmem:[%s1096 + $0x68] sm:$0xff]
        %v1111 = vld [vmem:[%s1096 + $0x70] sm:$0xff]
        %v1112 = vld [vmem:[%s1096 + $0x78] sm:$0xff]
        %1113 = vmatpush.msra.mxu0 %v1112
        %1114 = vmatpush.msra.mxu0 %v1111
        %1115 = vmatpush.msra.mxu0 %v1110
        %1116 = vmatpush.msra.mxu0 %v1109
        %1117 = vmatpush.msra.mxu0 %v1108
        %1118 = vmatpush.msra.mxu0 %v1107
        %1119 = vmatpush.msra.mxu0 %v1106
        %1120 = vmatpush.msra.mxu0 %v1105
        %1121 = vmatpush.msra.mxu0 %v1104
        %1122 = vmatpush.msra.mxu0 %v1103
        %1123 = vmatpush.msra.mxu0 %v1102
        %1124 = vmatpush.msra.mxu0 %v1101
        %1125 = vmatpush.msra.mxu0 %v1100
        %1126 = vmatpush.msra.mxu0 %v1099
        %1127 = vmatpush.msra.mxu0 %v1098
        %1128 = vmatpush.msra.mxu0 %v1097
        %1129 = vmatmul.f32.gmra.mxu0 %v332
        %v1130 = vpop.f32.mrf.mxu0
        %v1131 = vadd.f32 0.0, %v1130
        %1132 = vmatmul.f32.gmra.mxu0 %v333
        %v1133 = vpop.f32.mrf.mxu0
        %v1134 = vadd.f32 0.0, %v1133
        %1135 = vmatmul.f32.gmra.mxu0 %v334
        %v1136 = vpop.f32.mrf.mxu0
        %v1137 = vadd.f32 0.0, %v1136
        %1138 = vmatmul.f32.gmra.mxu0 %v335
        %v1139 = vpop.f32.mrf.mxu0
        %v1140 = vadd.f32 0.0, %v1139
        %1141 = vmatmul.f32.gmra.mxu0 %v336
        %v1142 = vpop.f32.mrf.mxu0
        %v1143 = vadd.f32 0.0, %v1142
        %1144 = vmatmul.f32.gmra.mxu0 %v337
        %v1145 = vpop.f32.mrf.mxu0
        %v1146 = vadd.f32 0.0, %v1145
        %1147 = vmatmul.f32.gmra.mxu0 %v338
        %v1148 = vpop.f32.mrf.mxu0
        %v1149 = vadd.f32 0.0, %v1148
        %1150 = vmatmul.f32.gmra.mxu0 %v339
        %v1151 = vpop.f32.mrf.mxu0
        %v1152 = vadd.f32 0.0, %v1151
        %1153 = vmatmul.f32.gmra.mxu0 %v340
        %v1154 = vpop.f32.mrf.mxu0
        %v1155 = vadd.f32 0.0, %v1154
        %1156 = vmatmul.f32.gmra.mxu0 %v341
        %v1157 = vpop.f32.mrf.mxu0
        %v1158 = vadd.f32 0.0, %v1157
        %1159 = vmatmul.f32.gmra.mxu0 %v342
        %v1160 = vpop.f32.mrf.mxu0
        %v1161 = vadd.f32 0.0, %v1160
        %1162 = vmatmul.f32.gmra.mxu0 %v343
        %v1163 = vpop.f32.mrf.mxu0
        %v1164 = vadd.f32 0.0, %v1163
        %1165 = vmatmul.f32.gmra.mxu0 %v344
        %v1166 = vpop.f32.mrf.mxu0
        %v1167 = vadd.f32 0.0, %v1166
        %1168 = vmatmul.f32.gmra.mxu0 %v345
        %v1169 = vpop.f32.mrf.mxu0
        %v1170 = vadd.f32 0.0, %v1169
        %1171 = vmatmul.f32.gmra.mxu0 %v346
        %v1172 = vpop.f32.mrf.mxu0
        %v1173 = vadd.f32 0.0, %v1172
        %1174 = vmatmul.f32.gmra.mxu0 %v347
        %v1175 = vpop.f32.mrf.mxu0
        %v1176 = vadd.f32 0.0, %v1175
        %1177 = vmatmul.f32.gmra.mxu0 %v348
        %v1178 = vpop.f32.mrf.mxu0
        %v1179 = vadd.f32 0.0, %v1178
        %1180 = vmatmul.f32.gmra.mxu0 %v349
        %v1181 = vpop.f32.mrf.mxu0
        %v1182 = vadd.f32 0.0, %v1181
        %1183 = vmatmul.f32.gmra.mxu0 %v350
        %v1184 = vpop.f32.mrf.mxu0
        %v1185 = vadd.f32 0.0, %v1184
        %1186 = vmatmul.f32.gmra.mxu0 %v351
        %v1187 = vpop.f32.mrf.mxu0
        %v1188 = vadd.f32 0.0, %v1187
        %1189 = vmatmul.f32.gmra.mxu0 %v352
        %v1190 = vpop.f32.mrf.mxu0
        %v1191 = vadd.f32 0.0, %v1190
        %1192 = vmatmul.f32.gmra.mxu0 %v353
        %v1193 = vpop.f32.mrf.mxu0
        %v1194 = vadd.f32 0.0, %v1193
        %1195 = vmatmul.f32.gmra.mxu0 %v354
        %v1196 = vpop.f32.mrf.mxu0
        %v1197 = vadd.f32 0.0, %v1196
        %1198 = vmatmul.f32.gmra.mxu0 %v355
        %v1199 = vpop.f32.mrf.mxu0
        %v1200 = vadd.f32 0.0, %v1199
        %1201 = vmatmul.f32.gmra.mxu0 %v356
        %v1202 = vpop.f32.mrf.mxu0
        %v1203 = vadd.f32 0.0, %v1202
        %1204 = vmatmul.f32.gmra.mxu0 %v357
        %v1205 = vpop.f32.mrf.mxu0
        %v1206 = vadd.f32 0.0, %v1205
        %1207 = vmatmul.f32.gmra.mxu0 %v358
        %v1208 = vpop.f32.mrf.mxu0
        %v1209 = vadd.f32 0.0, %v1208
        %1210 = vmatmul.f32.gmra.mxu0 %v359
        %v1211 = vpop.f32.mrf.mxu0
        %v1212 = vadd.f32 0.0, %v1211
        %1213 = vmatmul.f32.gmra.mxu0 %v360
        %v1214 = vpop.f32.mrf.mxu0
        %v1215 = vadd.f32 0.0, %v1214
        %1216 = vmatmul.f32.gmra.mxu0 %v361
        %v1217 = vpop.f32.mrf.mxu0
        %v1218 = vadd.f32 0.0, %v1217
        %1219 = vmatmul.f32.gmra.mxu0 %v362
        %v1220 = vpop.f32.mrf.mxu0
        %v1221 = vadd.f32 0.0, %v1220
        %1222 = vmatmul.f32.gmra.mxu0 %v363
        %v1223 = vpop.f32.mrf.mxu0
        %v1224 = vadd.f32 0.0, %v1223
        %1225 = vmatmul.f32.gmra.mxu0 %v364
        %v1226 = vpop.f32.mrf.mxu0
        %v1227 = vadd.f32 0.0, %v1226
        %1228 = vmatmul.f32.gmra.mxu0 %v365
        %v1229 = vpop.f32.mrf.mxu0
        %v1230 = vadd.f32 0.0, %v1229
        %1231 = vmatmul.f32.gmra.mxu0 %v366
        %v1232 = vpop.f32.mrf.mxu0
        %v1233 = vadd.f32 0.0, %v1232
        %1234 = vmatmul.f32.gmra.mxu0 %v367
        %v1235 = vpop.f32.mrf.mxu0
        %v1236 = vadd.f32 0.0, %v1235
        %1237 = vmatmul.f32.gmra.mxu0 %v368
        %v1238 = vpop.f32.mrf.mxu0
        %v1239 = vadd.f32 0.0, %v1238
        %1240 = vmatmul.f32.gmra.mxu0 %v369
        %v1241 = vpop.f32.mrf.mxu0
        %v1242 = vadd.f32 0.0, %v1241
        %1243 = vmatmul.f32.gmra.mxu0 %v370
        %v1244 = vpop.f32.mrf.mxu0
        %v1245 = vadd.f32 0.0, %v1244
        %1246 = vmatmul.f32.gmra.mxu0 %v371
        %v1247 = vpop.f32.mrf.mxu0
        %v1248 = vadd.f32 0.0, %v1247
        %1249 = vmatmul.f32.gmra.mxu0 %v372
        %v1250 = vpop.f32.mrf.mxu0
        %v1251 = vadd.f32 0.0, %v1250
        %1252 = vdwg.mxu0
        %v1253 = vrot.slane %v1131, 2
        %v1254 = vrot.slane %v1134, 2
        %v1255 = vrot.slane %v1137, 2
        %v1256 = vrot.slane %v1140, 2
        %v1257 = vrot.slane %v1143, 2
        %v1258 = vrot.slane %v1146, 2
        %v1259 = vrot.slane %v1149, 2
        %v1260 = vrot.slane %v1152, 2
        %v1261 = vrot.slane %v1155, 2
        %v1262 = vrot.slane %v1158, 2
        %v1263 = vrot.slane %v1161, 2
        %v1264 = vrot.slane %v1164, 2
        %v1265 = vrot.slane %v1167, 2
        %v1266 = vrot.slane %v1170, 2
        %v1267 = vrot.slane %v1173, 2
        %v1268 = vrot.slane %v1176, 2
        %v1269 = vrot.slane %v1179, 2
        %v1270 = vrot.slane %v1182, 2
        %v1271 = vrot.slane %v1185, 2
        %v1272 = vrot.slane %v1188, 2
        %v1273 = vrot.slane %v1191, 2
        %v1274 = vrot.slane %v1194, 2
        %v1275 = vrot.slane %v1197, 2
        %v1276 = vrot.slane %v1200, 2
        %v1277 = vrot.slane %v1203, 2
        %v1278 = vrot.slane %v1206, 2
        %v1279 = vrot.slane %v1209, 2
        %v1280 = vrot.slane %v1212, 2
        %v1281 = vrot.slane %v1215, 2
        %v1282 = vrot.slane %v1218, 2
        %v1283 = vrot.slane %v1221, 2
        %v1284 = vrot.slane %v1224, 2
        %v1285 = vrot.slane %v1227, 2
        %v1286 = vrot.slane %v1230, 2
        %v1287 = vrot.slane %v1233, 2
        %v1288 = vrot.slane %v1236, 2
        %v1289 = vrot.slane %v1239, 2
        %v1290 = vrot.slane %v1242, 2
        %v1291 = vrot.slane %v1245, 2
        %v1292 = vrot.slane %v1248, 2
        %v1293 = vrot.slane %v1251, 2
        %v1294 = vsel %vm1013, %v1292, %v1293
        %v1295 = vsel %vm1013, %v1291, %v1292
        %v1296 = vsel %vm1013, %v1290, %v1291
        %v1297 = vsel %vm1013, %v1289, %v1290
        %v1298 = vsel %vm1013, %v1288, %v1289
        %v1299 = vsel %vm1013, %v1287, %v1288
        %v1300 = vsel %vm1013, %v1286, %v1287
        %v1301 = vsel %vm1013, %v1285, %v1286
        %v1302 = vsel %vm1013, %v1284, %v1285
        %v1303 = vsel %vm1013, %v1283, %v1284
        %v1304 = vsel %vm1013, %v1282, %v1283
        %v1305 = vsel %vm1013, %v1281, %v1282
        %v1306 = vsel %vm1013, %v1280, %v1281
        %v1307 = vsel %vm1013, %v1279, %v1280
        %v1308 = vsel %vm1013, %v1278, %v1279
        %v1309 = vsel %vm1013, %v1277, %v1278
        %v1310 = vsel %vm1013, %v1276, %v1277
        %v1311 = vsel %vm1013, %v1275, %v1276
        %v1312 = vsel %vm1013, %v1274, %v1275
        %v1313 = vsel %vm1013, %v1273, %v1274
        %v1314 = vsel %vm1013, %v1272, %v1273
        %v1315 = vsel %vm1013, %v1271, %v1272
        %v1316 = vsel %vm1013, %v1270, %v1271
        %v1317 = vsel %vm1013, %v1269, %v1270
        %v1318 = vsel %vm1013, %v1268, %v1269
        %v1319 = vsel %vm1013, %v1267, %v1268
        %v1320 = vsel %vm1013, %v1266, %v1267
        %v1321 = vsel %vm1013, %v1265, %v1266
        %v1322 = vsel %vm1013, %v1264, %v1265
        %v1323 = vsel %vm1013, %v1263, %v1264
        %v1324 = vsel %vm1013, %v1262, %v1263
        %v1325 = vsel %vm1013, %v1261, %v1262
        %v1326 = vsel %vm1013, %v1260, %v1261
        %v1327 = vsel %vm1013, %v1259, %v1260
        %v1328 = vsel %vm1013, %v1258, %v1259
        %v1329 = vsel %vm1013, %v1257, %v1258
        %v1330 = vsel %vm1013, %v1256, %v1257
        %v1331 = vsel %vm1013, %v1255, %v1256
        %v1332 = vsel %vm1013, %v1254, %v1255
        %v1333 = vsel %vm1013, %v1253, %v1254
        %v1334 = vsel %vm1013, %v1293, %v1253
        %v1335 = vadd.f32 %v1055, %v1331
        %v1336 = vadd.f32 %v1056, %v1330
        %v1337 = vadd.f32 %v1057, %v1329
        %v1338 = vadd.f32 %v1058, %v1328
        %v1339 = vadd.f32 %v1059, %v1327
        %v1340 = vadd.f32 %v1060, %v1326
        %v1341 = vadd.f32 %v1061, %v1325
        %v1342 = vadd.f32 %v1062, %v1324
        %v1343 = vadd.f32 %v1063, %v1323
        %v1344 = vadd.f32 %v1064, %v1322
        %v1345 = vadd.f32 %v1065, %v1321
        %v1346 = vadd.f32 %v1066, %v1320
        %v1347 = vadd.f32 %v1067, %v1319
        %v1348 = vadd.f32 %v1068, %v1318
        %v1349 = vadd.f32 %v1069, %v1317
        %v1350 = vadd.f32 %v1070, %v1316
        %v1351 = vadd.f32 %v1071, %v1315
        %v1352 = vadd.f32 %v1072, %v1314
        %v1353 = vadd.f32 %v1073, %v1313
        %v1354 = vadd.f32 %v1074, %v1312
        %v1355 = vadd.f32 %v1075, %v1311
        %v1356 = vadd.f32 %v1076, %v1310
        %v1357 = vadd.f32 %v1077, %v1309
        %v1358 = vadd.f32 %v1078, %v1308
        %v1359 = vadd.f32 %v1079, %v1307
        %v1360 = vadd.f32 %v1080, %v1306
        %v1361 = vadd.f32 %v1081, %v1305
        %v1362 = vadd.f32 %v1082, %v1304
        %v1363 = vadd.f32 %v1083, %v1303
        %v1364 = vadd.f32 %v1084, %v1302
        %v1365 = vadd.f32 %v1085, %v1301
        %v1366 = vadd.f32 %v1086, %v1300
        %v1367 = vadd.f32 %v1087, %v1299
        %v1368 = vadd.f32 %v1088, %v1298
        %v1369 = vadd.f32 %v1089, %v1297
        %v1370 = vadd.f32 %v1090, %v1296
        %v1371 = vadd.f32 %v1091, %v1295
        %v1372 = vadd.f32 %v1092, %v1294
        %v1373 = vadd.f32 %v1093, %v1334
        %v1374 = vadd.f32 %v1094, %v1333
        %v1375 = vadd.f32 %v1095, %v1332
        %s1376 = scalar_lea.vmem [#allocation5], 512
        %v1377 = vld [vmem:[%s1376] sm:$0xff]
        %v1378 = vld [vmem:[%s1376 + $0x8] sm:$0xff]
        %v1379 = vld [vmem:[%s1376 + $0x10] sm:$0xff]
        %v1380 = vld [vmem:[%s1376 + $0x18] sm:$0xff]
        %v1381 = vld [vmem:[%s1376 + $0x20] sm:$0xff]
        %v1382 = vld [vmem:[%s1376 + $0x28] sm:$0xff]
        %v1383 = vld [vmem:[%s1376 + $0x30] sm:$0xff]
        %v1384 = vld [vmem:[%s1376 + $0x38] sm:$0xff]
        %v1385 = vld [vmem:[%s1376 + $0x40] sm:$0xff]
        %v1386 = vld [vmem:[%s1376 + $0x48] sm:$0xff]
        %v1387 = vld [vmem:[%s1376 + $0x50] sm:$0xff]
        %v1388 = vld [vmem:[%s1376 + $0x58] sm:$0xff]
        %v1389 = vld [vmem:[%s1376 + $0x60] sm:$0xff]
        %v1390 = vld [vmem:[%s1376 + $0x68] sm:$0xff]
        %v1391 = vld [vmem:[%s1376 + $0x70] sm:$0xff]
        %v1392 = vld [vmem:[%s1376 + $0x78] sm:$0xff]
        %1393 = vmatpush.msra.mxu0 %v1392
        %1394 = vmatpush.msra.mxu0 %v1391
        %1395 = vmatpush.msra.mxu0 %v1390
        %1396 = vmatpush.msra.mxu0 %v1389
        %1397 = vmatpush.msra.mxu0 %v1388
        %1398 = vmatpush.msra.mxu0 %v1387
        %1399 = vmatpush.msra.mxu0 %v1386
        %1400 = vmatpush.msra.mxu0 %v1385
        %1401 = vmatpush.msra.mxu0 %v1384
        %1402 = vmatpush.msra.mxu0 %v1383
        %1403 = vmatpush.msra.mxu0 %v1382
        %1404 = vmatpush.msra.mxu0 %v1381
        %1405 = vmatpush.msra.mxu0 %v1380
        %1406 = vmatpush.msra.mxu0 %v1379
        %1407 = vmatpush.msra.mxu0 %v1378
        %1408 = vmatpush.msra.mxu0 %v1377
        %1409 = vmatmul.f32.gmra.mxu0 %v332
        %v1410 = vpop.f32.mrf.mxu0
        %v1411 = vadd.f32 0.0, %v1410
        %1412 = vmatmul.f32.gmra.mxu0 %v333
        %v1413 = vpop.f32.mrf.mxu0
        %v1414 = vadd.f32 0.0, %v1413
        %1415 = vmatmul.f32.gmra.mxu0 %v334
        %v1416 = vpop.f32.mrf.mxu0
        %v1417 = vadd.f32 0.0, %v1416
        %1418 = vmatmul.f32.gmra.mxu0 %v335
        %v1419 = vpop.f32.mrf.mxu0
        %v1420 = vadd.f32 0.0, %v1419
        %1421 = vmatmul.f32.gmra.mxu0 %v336
        %v1422 = vpop.f32.mrf.mxu0
        %v1423 = vadd.f32 0.0, %v1422
        %1424 = vmatmul.f32.gmra.mxu0 %v337
        %v1425 = vpop.f32.mrf.mxu0
        %v1426 = vadd.f32 0.0, %v1425
        %1427 = vmatmul.f32.gmra.mxu0 %v338
        %v1428 = vpop.f32.mrf.mxu0
        %v1429 = vadd.f32 0.0, %v1428
        %1430 = vmatmul.f32.gmra.mxu0 %v339
        %v1431 = vpop.f32.mrf.mxu0
        %v1432 = vadd.f32 0.0, %v1431
        %1433 = vmatmul.f32.gmra.mxu0 %v340
        %v1434 = vpop.f32.mrf.mxu0
        %v1435 = vadd.f32 0.0, %v1434
        %1436 = vmatmul.f32.gmra.mxu0 %v341
        %v1437 = vpop.f32.mrf.mxu0
        %v1438 = vadd.f32 0.0, %v1437
        %1439 = vmatmul.f32.gmra.mxu0 %v342
        %v1440 = vpop.f32.mrf.mxu0
        %v1441 = vadd.f32 0.0, %v1440
        %1442 = vmatmul.f32.gmra.mxu0 %v343
        %v1443 = vpop.f32.mrf.mxu0
        %v1444 = vadd.f32 0.0, %v1443
        %1445 = vmatmul.f32.gmra.mxu0 %v344
        %v1446 = vpop.f32.mrf.mxu0
        %v1447 = vadd.f32 0.0, %v1446
        %1448 = vmatmul.f32.gmra.mxu0 %v345
        %v1449 = vpop.f32.mrf.mxu0
        %v1450 = vadd.f32 0.0, %v1449
        %1451 = vmatmul.f32.gmra.mxu0 %v346
        %v1452 = vpop.f32.mrf.mxu0
        %v1453 = vadd.f32 0.0, %v1452
        %1454 = vmatmul.f32.gmra.mxu0 %v347
        %v1455 = vpop.f32.mrf.mxu0
        %v1456 = vadd.f32 0.0, %v1455
        %1457 = vmatmul.f32.gmra.mxu0 %v348
        %v1458 = vpop.f32.mrf.mxu0
        %v1459 = vadd.f32 0.0, %v1458
        %1460 = vmatmul.f32.gmra.mxu0 %v349
        %v1461 = vpop.f32.mrf.mxu0
        %v1462 = vadd.f32 0.0, %v1461
        %1463 = vmatmul.f32.gmra.mxu0 %v350
        %v1464 = vpop.f32.mrf.mxu0
        %v1465 = vadd.f32 0.0, %v1464
        %1466 = vmatmul.f32.gmra.mxu0 %v351
        %v1467 = vpop.f32.mrf.mxu0
        %v1468 = vadd.f32 0.0, %v1467
        %1469 = vmatmul.f32.gmra.mxu0 %v352
        %v1470 = vpop.f32.mrf.mxu0
        %v1471 = vadd.f32 0.0, %v1470
        %1472 = vmatmul.f32.gmra.mxu0 %v353
        %v1473 = vpop.f32.mrf.mxu0
        %v1474 = vadd.f32 0.0, %v1473
        %1475 = vmatmul.f32.gmra.mxu0 %v354
        %v1476 = vpop.f32.mrf.mxu0
        %v1477 = vadd.f32 0.0, %v1476
        %1478 = vmatmul.f32.gmra.mxu0 %v355
        %v1479 = vpop.f32.mrf.mxu0
        %v1480 = vadd.f32 0.0, %v1479
        %1481 = vmatmul.f32.gmra.mxu0 %v356
        %v1482 = vpop.f32.mrf.mxu0
        %v1483 = vadd.f32 0.0, %v1482
        %1484 = vmatmul.f32.gmra.mxu0 %v357
        %v1485 = vpop.f32.mrf.mxu0
        %v1486 = vadd.f32 0.0, %v1485
        %1487 = vmatmul.f32.gmra.mxu0 %v358
        %v1488 = vpop.f32.mrf.mxu0
        %v1489 = vadd.f32 0.0, %v1488
        %1490 = vmatmul.f32.gmra.mxu0 %v359
        %v1491 = vpop.f32.mrf.mxu0
        %v1492 = vadd.f32 0.0, %v1491
        %1493 = vmatmul.f32.gmra.mxu0 %v360
        %v1494 = vpop.f32.mrf.mxu0
        %v1495 = vadd.f32 0.0, %v1494
        %1496 = vmatmul.f32.gmra.mxu0 %v361
        %v1497 = vpop.f32.mrf.mxu0
        %v1498 = vadd.f32 0.0, %v1497
        %1499 = vmatmul.f32.gmra.mxu0 %v362
        %v1500 = vpop.f32.mrf.mxu0
        %v1501 = vadd.f32 0.0, %v1500
        %1502 = vmatmul.f32.gmra.mxu0 %v363
        %v1503 = vpop.f32.mrf.mxu0
        %v1504 = vadd.f32 0.0, %v1503
        %1505 = vmatmul.f32.gmra.mxu0 %v364
        %v1506 = vpop.f32.mrf.mxu0
        %v1507 = vadd.f32 0.0, %v1506
        %1508 = vmatmul.f32.gmra.mxu0 %v365
        %v1509 = vpop.f32.mrf.mxu0
        %v1510 = vadd.f32 0.0, %v1509
        %1511 = vmatmul.f32.gmra.mxu0 %v366
        %v1512 = vpop.f32.mrf.mxu0
        %v1513 = vadd.f32 0.0, %v1512
        %1514 = vmatmul.f32.gmra.mxu0 %v367
        %v1515 = vpop.f32.mrf.mxu0
        %v1516 = vadd.f32 0.0, %v1515
        %1517 = vmatmul.f32.gmra.mxu0 %v368
        %v1518 = vpop.f32.mrf.mxu0
        %v1519 = vadd.f32 0.0, %v1518
        %1520 = vmatmul.f32.gmra.mxu0 %v369
        %v1521 = vpop.f32.mrf.mxu0
        %v1522 = vadd.f32 0.0, %v1521
        %1523 = vmatmul.f32.gmra.mxu0 %v370
        %v1524 = vpop.f32.mrf.mxu0
        %v1525 = vadd.f32 0.0, %v1524
        %1526 = vmatmul.f32.gmra.mxu0 %v371
        %v1527 = vpop.f32.mrf.mxu0
        %v1528 = vadd.f32 0.0, %v1527
        %1529 = vmatmul.f32.gmra.mxu0 %v372
        %v1530 = vpop.f32.mrf.mxu0
        %v1531 = vadd.f32 0.0, %v1530
        %1532 = vdwg.mxu0
        %v1533 = vrot.slane %v1411, 3
        %v1534 = vrot.slane %v1414, 3
        %v1535 = vrot.slane %v1417, 3
        %v1536 = vrot.slane %v1420, 3
        %v1537 = vrot.slane %v1423, 3
        %v1538 = vrot.slane %v1426, 3
        %v1539 = vrot.slane %v1429, 3
        %v1540 = vrot.slane %v1432, 3
        %v1541 = vrot.slane %v1435, 3
        %v1542 = vrot.slane %v1438, 3
        %v1543 = vrot.slane %v1441, 3
        %v1544 = vrot.slane %v1444, 3
        %v1545 = vrot.slane %v1447, 3
        %v1546 = vrot.slane %v1450, 3
        %v1547 = vrot.slane %v1453, 3
        %v1548 = vrot.slane %v1456, 3
        %v1549 = vrot.slane %v1459, 3
        %v1550 = vrot.slane %v1462, 3
        %v1551 = vrot.slane %v1465, 3
        %v1552 = vrot.slane %v1468, 3
        %v1553 = vrot.slane %v1471, 3
        %v1554 = vrot.slane %v1474, 3
        %v1555 = vrot.slane %v1477, 3
        %v1556 = vrot.slane %v1480, 3
        %v1557 = vrot.slane %v1483, 3
        %v1558 = vrot.slane %v1486, 3
        %v1559 = vrot.slane %v1489, 3
        %v1560 = vrot.slane %v1492, 3
        %v1561 = vrot.slane %v1495, 3
        %v1562 = vrot.slane %v1498, 3
        %v1563 = vrot.slane %v1501, 3
        %v1564 = vrot.slane %v1504, 3
        %v1565 = vrot.slane %v1507, 3
        %v1566 = vrot.slane %v1510, 3
        %v1567 = vrot.slane %v1513, 3
        %v1568 = vrot.slane %v1516, 3
        %v1569 = vrot.slane %v1519, 3
        %v1570 = vrot.slane %v1522, 3
        %v1571 = vrot.slane %v1525, 3
        %v1572 = vrot.slane %v1528, 3
        %v1573 = vrot.slane %v1531, 3
        %vm1574 = vcmp.lt.s32.totalorder %v632, 5
        %v1575 = vsel %vm1574, %v1572, %v1573
        %v1576 = vsel %vm1574, %v1571, %v1572
        %v1577 = vsel %vm1574, %v1570, %v1571
        %v1578 = vsel %vm1574, %v1569, %v1570
        %v1579 = vsel %vm1574, %v1568, %v1569
        %v1580 = vsel %vm1574, %v1567, %v1568
        %v1581 = vsel %vm1574, %v1566, %v1567
        %v1582 = vsel %vm1574, %v1565, %v1566
        %v1583 = vsel %vm1574, %v1564, %v1565
        %v1584 = vsel %vm1574, %v1563, %v1564
        %v1585 = vsel %vm1574, %v1562, %v1563
        %v1586 = vsel %vm1574, %v1561, %v1562
        %v1587 = vsel %vm1574, %v1560, %v1561
        %v1588 = vsel %vm1574, %v1559, %v1560
        %v1589 = vsel %vm1574, %v1558, %v1559
        %v1590 = vsel %vm1574, %v1557, %v1558
        %v1591 = vsel %vm1574, %v1556, %v1557
        %v1592 = vsel %vm1574, %v1555, %v1556
        %v1593 = vsel %vm1574, %v1554, %v1555
        %v1594 = vsel %vm1574, %v1553, %v1554
        %v1595 = vsel %vm1574, %v1552, %v1553
        %v1596 = vsel %vm1574, %v1551, %v1552
        %v1597 = vsel %vm1574, %v1550, %v1551
        %v1598 = vsel %vm1574, %v1549, %v1550
        %v1599 = vsel %vm1574, %v1548, %v1549
        %v1600 = vsel %vm1574, %v1547, %v1548
        %v1601 = vsel %vm1574, %v1546, %v1547
        %v1602 = vsel %vm1574, %v1545, %v1546
        %v1603 = vsel %vm1574, %v1544, %v1545
        %v1604 = vsel %vm1574, %v1543, %v1544
        %v1605 = vsel %vm1574, %v1542, %v1543
        %v1606 = vsel %vm1574, %v1541, %v1542
        %v1607 = vsel %vm1574, %v1540, %v1541
        %v1608 = vsel %vm1574, %v1539, %v1540
        %v1609 = vsel %vm1574, %v1538, %v1539
        %v1610 = vsel %vm1574, %v1537, %v1538
        %v1611 = vsel %vm1574, %v1536, %v1537
        %v1612 = vsel %vm1574, %v1535, %v1536
        %v1613 = vsel %vm1574, %v1534, %v1535
        %v1614 = vsel %vm1574, %v1533, %v1534
        %v1615 = vsel %vm1574, %v1573, %v1533
        %v1616 = vadd.f32 %v1335, %v1612
        %v1617 = vadd.f32 %v1336, %v1611
        %v1618 = vadd.f32 %v1337, %v1610
        %v1619 = vadd.f32 %v1338, %v1609
        %v1620 = vadd.f32 %v1339, %v1608
        %v1621 = vadd.f32 %v1340, %v1607
        %v1622 = vadd.f32 %v1341, %v1606
        %v1623 = vadd.f32 %v1342, %v1605
        %v1624 = vadd.f32 %v1343, %v1604
        %v1625 = vadd.f32 %v1344, %v1603
        %v1626 = vadd.f32 %v1345, %v1602
        %v1627 = vadd.f32 %v1346, %v1601
        %v1628 = vadd.f32 %v1347, %v1600
        %v1629 = vadd.f32 %v1348, %v1599
        %v1630 = vadd.f32 %v1349, %v1598
        %v1631 = vadd.f32 %v1350, %v1597
        %v1632 = vadd.f32 %v1351, %v1596
        %v1633 = vadd.f32 %v1352, %v1595
        %v1634 = vadd.f32 %v1353, %v1594
        %v1635 = vadd.f32 %v1354, %v1593
        %v1636 = vadd.f32 %v1355, %v1592
        %v1637 = vadd.f32 %v1356, %v1591
        %v1638 = vadd.f32 %v1357, %v1590
        %v1639 = vadd.f32 %v1358, %v1589
        %v1640 = vadd.f32 %v1359, %v1588
        %v1641 = vadd.f32 %v1360, %v1587
        %v1642 = vadd.f32 %v1361, %v1586
        %v1643 = vadd.f32 %v1362, %v1585
        %v1644 = vadd.f32 %v1363, %v1584
        %v1645 = vadd.f32 %v1364, %v1583
        %v1646 = vadd.f32 %v1365, %v1582
        %v1647 = vadd.f32 %v1366, %v1581
        %v1648 = vadd.f32 %v1367, %v1580
        %v1649 = vadd.f32 %v1368, %v1579
        %v1650 = vadd.f32 %v1369, %v1578
        %v1651 = vadd.f32 %v1370, %v1577
        %v1652 = vadd.f32 %v1371, %v1576
        %v1653 = vadd.f32 %v1372, %v1575
        %v1654 = vadd.f32 %v1373, %v1615
        %v1655 = vadd.f32 %v1374, %v1614
        %v1656 = vadd.f32 %v1375, %v1613
        %s1657 = scalar_lea.vmem [#allocation5], 640
        %v1658 = vld [vmem:[%s1657] sm:$0xff]
        %v1659 = vld [vmem:[%s1657 + $0x8] sm:$0xff]
        %v1660 = vld [vmem:[%s1657 + $0x10] sm:$0xff]
        %v1661 = vld [vmem:[%s1657 + $0x18] sm:$0xff]
        %v1662 = vld [vmem:[%s1657 + $0x20] sm:$0xff]
        %v1663 = vld [vmem:[%s1657 + $0x28] sm:$0xff]
        %v1664 = vld [vmem:[%s1657 + $0x30] sm:$0xff]
        %v1665 = vld [vmem:[%s1657 + $0x38] sm:$0xff]
        %v1666 = vld [vmem:[%s1657 + $0x40] sm:$0xff]
        %v1667 = vld [vmem:[%s1657 + $0x48] sm:$0xff]
        %v1668 = vld [vmem:[%s1657 + $0x50] sm:$0xff]
        %v1669 = vld [vmem:[%s1657 + $0x58] sm:$0xff]
        %v1670 = vld [vmem:[%s1657 + $0x60] sm:$0xff]
        %v1671 = vld [vmem:[%s1657 + $0x68] sm:$0xff]
        %v1672 = vld [vmem:[%s1657 + $0x70] sm:$0xff]
        %v1673 = vld [vmem:[%s1657 + $0x78] sm:$0xff]
        %1674 = vmatpush.msra.mxu0 %v1673
        %1675 = vmatpush.msra.mxu0 %v1672
        %1676 = vmatpush.msra.mxu0 %v1671
        %1677 = vmatpush.msra.mxu0 %v1670
        %1678 = vmatpush.msra.mxu0 %v1669
        %1679 = vmatpush.msra.mxu0 %v1668
        %1680 = vmatpush.msra.mxu0 %v1667
        %1681 = vmatpush.msra.mxu0 %v1666
        %1682 = vmatpush.msra.mxu0 %v1665
        %1683 = vmatpush.msra.mxu0 %v1664
        %1684 = vmatpush.msra.mxu0 %v1663
        %1685 = vmatpush.msra.mxu0 %v1662
        %1686 = vmatpush.msra.mxu0 %v1661
        %1687 = vmatpush.msra.mxu0 %v1660
        %1688 = vmatpush.msra.mxu0 %v1659
        %1689 = vmatpush.msra.mxu0 %v1658
        %1690 = vmatmul.f32.gmra.mxu0 %v332
        %v1691 = vpop.f32.mrf.mxu0
        %v1692 = vadd.f32 0.0, %v1691
        %1693 = vmatmul.f32.gmra.mxu0 %v333
        %v1694 = vpop.f32.mrf.mxu0
        %v1695 = vadd.f32 0.0, %v1694
        %1696 = vmatmul.f32.gmra.mxu0 %v334
        %v1697 = vpop.f32.mrf.mxu0
        %v1698 = vadd.f32 0.0, %v1697
        %1699 = vmatmul.f32.gmra.mxu0 %v335
        %v1700 = vpop.f32.mrf.mxu0
        %v1701 = vadd.f32 0.0, %v1700
        %1702 = vmatmul.f32.gmra.mxu0 %v336
        %v1703 = vpop.f32.mrf.mxu0
        %v1704 = vadd.f32 0.0, %v1703
        %1705 = vmatmul.f32.gmra.mxu0 %v337
        %v1706 = vpop.f32.mrf.mxu0
        %v1707 = vadd.f32 0.0, %v1706
        %1708 = vmatmul.f32.gmra.mxu0 %v338
        %v1709 = vpop.f32.mrf.mxu0
        %v1710 = vadd.f32 0.0, %v1709
        %1711 = vmatmul.f32.gmra.mxu0 %v339
        %v1712 = vpop.f32.mrf.mxu0
        %v1713 = vadd.f32 0.0, %v1712
        %1714 = vmatmul.f32.gmra.mxu0 %v340
        %v1715 = vpop.f32.mrf.mxu0
        %v1716 = vadd.f32 0.0, %v1715
        %1717 = vmatmul.f32.gmra.mxu0 %v341
        %v1718 = vpop.f32.mrf.mxu0
        %v1719 = vadd.f32 0.0, %v1718
        %1720 = vmatmul.f32.gmra.mxu0 %v342
        %v1721 = vpop.f32.mrf.mxu0
        %v1722 = vadd.f32 0.0, %v1721
        %1723 = vmatmul.f32.gmra.mxu0 %v343
        %v1724 = vpop.f32.mrf.mxu0
        %v1725 = vadd.f32 0.0, %v1724
        %1726 = vmatmul.f32.gmra.mxu0 %v344
        %v1727 = vpop.f32.mrf.mxu0
        %v1728 = vadd.f32 0.0, %v1727
        %1729 = vmatmul.f32.gmra.mxu0 %v345
        %v1730 = vpop.f32.mrf.mxu0
        %v1731 = vadd.f32 0.0, %v1730
        %1732 = vmatmul.f32.gmra.mxu0 %v346
        %v1733 = vpop.f32.mrf.mxu0
        %v1734 = vadd.f32 0.0, %v1733
        %1735 = vmatmul.f32.gmra.mxu0 %v347
        %v1736 = vpop.f32.mrf.mxu0
        %v1737 = vadd.f32 0.0, %v1736
        %1738 = vmatmul.f32.gmra.mxu0 %v348
        %v1739 = vpop.f32.mrf.mxu0
        %v1740 = vadd.f32 0.0, %v1739
        %1741 = vmatmul.f32.gmra.mxu0 %v349
        %v1742 = vpop.f32.mrf.mxu0
        %v1743 = vadd.f32 0.0, %v1742
        %1744 = vmatmul.f32.gmra.mxu0 %v350
        %v1745 = vpop.f32.mrf.mxu0
        %v1746 = vadd.f32 0.0, %v1745
        %1747 = vmatmul.f32.gmra.mxu0 %v351
        %v1748 = vpop.f32.mrf.mxu0
        %v1749 = vadd.f32 0.0, %v1748
        %1750 = vmatmul.f32.gmra.mxu0 %v352
        %v1751 = vpop.f32.mrf.mxu0
        %v1752 = vadd.f32 0.0, %v1751
        %1753 = vmatmul.f32.gmra.mxu0 %v353
        %v1754 = vpop.f32.mrf.mxu0
        %v1755 = vadd.f32 0.0, %v1754
        %1756 = vmatmul.f32.gmra.mxu0 %v354
        %v1757 = vpop.f32.mrf.mxu0
        %v1758 = vadd.f32 0.0, %v1757
        %1759 = vmatmul.f32.gmra.mxu0 %v355
        %v1760 = vpop.f32.mrf.mxu0
        %v1761 = vadd.f32 0.0, %v1760
        %1762 = vmatmul.f32.gmra.mxu0 %v356
        %v1763 = vpop.f32.mrf.mxu0
        %v1764 = vadd.f32 0.0, %v1763
        %1765 = vmatmul.f32.gmra.mxu0 %v357
        %v1766 = vpop.f32.mrf.mxu0
        %v1767 = vadd.f32 0.0, %v1766
        %1768 = vmatmul.f32.gmra.mxu0 %v358
        %v1769 = vpop.f32.mrf.mxu0
        %v1770 = vadd.f32 0.0, %v1769
        %1771 = vmatmul.f32.gmra.mxu0 %v359
        %v1772 = vpop.f32.mrf.mxu0
        %v1773 = vadd.f32 0.0, %v1772
        %1774 = vmatmul.f32.gmra.mxu0 %v360
        %v1775 = vpop.f32.mrf.mxu0
        %v1776 = vadd.f32 0.0, %v1775
        %1777 = vmatmul.f32.gmra.mxu0 %v361
        %v1778 = vpop.f32.mrf.mxu0
        %v1779 = vadd.f32 0.0, %v1778
        %1780 = vmatmul.f32.gmra.mxu0 %v362
        %v1781 = vpop.f32.mrf.mxu0
        %v1782 = vadd.f32 0.0, %v1781
        %1783 = vmatmul.f32.gmra.mxu0 %v363
        %v1784 = vpop.f32.mrf.mxu0
        %v1785 = vadd.f32 0.0, %v1784
        %1786 = vmatmul.f32.gmra.mxu0 %v364
        %v1787 = vpop.f32.mrf.mxu0
        %v1788 = vadd.f32 0.0, %v1787
        %1789 = vmatmul.f32.gmra.mxu0 %v365
        %v1790 = vpop.f32.mrf.mxu0
        %v1791 = vadd.f32 0.0, %v1790
        %1792 = vmatmul.f32.gmra.mxu0 %v366
        %v1793 = vpop.f32.mrf.mxu0
        %v1794 = vadd.f32 0.0, %v1793
        %1795 = vmatmul.f32.gmra.mxu0 %v367
        %v1796 = vpop.f32.mrf.mxu0
        %v1797 = vadd.f32 0.0, %v1796
        %1798 = vmatmul.f32.gmra.mxu0 %v368
        %v1799 = vpop.f32.mrf.mxu0
        %v1800 = vadd.f32 0.0, %v1799
        %1801 = vmatmul.f32.gmra.mxu0 %v369
        %v1802 = vpop.f32.mrf.mxu0
        %v1803 = vadd.f32 0.0, %v1802
        %1804 = vmatmul.f32.gmra.mxu0 %v370
        %v1805 = vpop.f32.mrf.mxu0
        %v1806 = vadd.f32 0.0, %v1805
        %1807 = vmatmul.f32.gmra.mxu0 %v371
        %v1808 = vpop.f32.mrf.mxu0
        %v1809 = vadd.f32 0.0, %v1808
        %1810 = vmatmul.f32.gmra.mxu0 %v372
        %v1811 = vpop.f32.mrf.mxu0
        %v1812 = vadd.f32 0.0, %v1811
        %1813 = vdwg.mxu0
        %v1814 = vrot.slane %v1692, 4
        %v1815 = vrot.slane %v1695, 4
        %v1816 = vrot.slane %v1698, 4
        %v1817 = vrot.slane %v1701, 4
        %v1818 = vrot.slane %v1704, 4
        %v1819 = vrot.slane %v1707, 4
        %v1820 = vrot.slane %v1710, 4
        %v1821 = vrot.slane %v1713, 4
        %v1822 = vrot.slane %v1716, 4
        %v1823 = vrot.slane %v1719, 4
        %v1824 = vrot.slane %v1722, 4
        %v1825 = vrot.slane %v1725, 4
        %v1826 = vrot.slane %v1728, 4
        %v1827 = vrot.slane %v1731, 4
        %v1828 = vrot.slane %v1734, 4
        %v1829 = vrot.slane %v1737, 4
        %v1830 = vrot.slane %v1740, 4
        %v1831 = vrot.slane %v1743, 4
        %v1832 = vrot.slane %v1746, 4
        %v1833 = vrot.slane %v1749, 4
        %v1834 = vrot.slane %v1752, 4
        %v1835 = vrot.slane %v1755, 4
        %v1836 = vrot.slane %v1758, 4
        %v1837 = vrot.slane %v1761, 4
        %v1838 = vrot.slane %v1764, 4
        %v1839 = vrot.slane %v1767, 4
        %v1840 = vrot.slane %v1770, 4
        %v1841 = vrot.slane %v1773, 4
        %v1842 = vrot.slane %v1776, 4
        %v1843 = vrot.slane %v1779, 4
        %v1844 = vrot.slane %v1782, 4
        %v1845 = vrot.slane %v1785, 4
        %v1846 = vrot.slane %v1788, 4
        %v1847 = vrot.slane %v1791, 4
        %v1848 = vrot.slane %v1794, 4
        %v1849 = vrot.slane %v1797, 4
        %v1850 = vrot.slane %v1800, 4
        %v1851 = vrot.slane %v1803, 4
        %v1852 = vrot.slane %v1806, 4
        %v1853 = vrot.slane %v1809, 4
        %v1854 = vrot.slane %v1812, 4
        %vm1855 = vcmp.lt.s32.totalorder %v632, 4
        %v1856 = vsel %vm1855, %v1853, %v1854
        %v1857 = vsel %vm1855, %v1852, %v1853
        %v1858 = vsel %vm1855, %v1851, %v1852
        %v1859 = vsel %vm1855, %v1850, %v1851
        %v1860 = vsel %vm1855, %v1849, %v1850
        %v1861 = vsel %vm1855, %v1848, %v1849
        %v1862 = vsel %vm1855, %v1847, %v1848
        %v1863 = vsel %vm1855, %v1846, %v1847
        %v1864 = vsel %vm1855, %v1845, %v1846
        %v1865 = vsel %vm1855, %v1844, %v1845
        %v1866 = vsel %vm1855, %v1843, %v1844
        %v1867 = vsel %vm1855, %v1842, %v1843
        %v1868 = vsel %vm1855, %v1841, %v1842
        %v1869 = vsel %vm1855, %v1840, %v1841
        %v1870 = vsel %vm1855, %v1839, %v1840
        %v1871 = vsel %vm1855, %v1838, %v1839
        %v1872 = vsel %vm1855, %v1837, %v1838
        %v1873 = vsel %vm1855, %v1836, %v1837
        %v1874 = vsel %vm1855, %v1835, %v1836
        %v1875 = vsel %vm1855, %v1834, %v1835
        %v1876 = vsel %vm1855, %v1833, %v1834
        %v1877 = vsel %vm1855, %v1832, %v1833
        %v1878 = vsel %vm1855, %v1831, %v1832
        %v1879 = vsel %vm1855, %v1830, %v1831
        %v1880 = vsel %vm1855, %v1829, %v1830
        %v1881 = vsel %vm1855, %v1828, %v1829
        %v1882 = vsel %vm1855, %v1827, %v1828
        %v1883 = vsel %vm1855, %v1826, %v1827
        %v1884 = vsel %vm1855, %v1825, %v1826
        %v1885 = vsel %vm1855, %v1824, %v1825
        %v1886 = vsel %vm1855, %v1823, %v1824
        %v1887 = vsel %vm1855, %v1822, %v1823
        %v1888 = vsel %vm1855, %v1821, %v1822
        %v1889 = vsel %vm1855, %v1820, %v1821
        %v1890 = vsel %vm1855, %v1819, %v1820
        %v1891 = vsel %vm1855, %v1818, %v1819
        %v1892 = vsel %vm1855, %v1817, %v1818
        %v1893 = vsel %vm1855, %v1816, %v1817
        %v1894 = vsel %vm1855, %v1815, %v1816
        %v1895 = vsel %vm1855, %v1814, %v1815
        %v1896 = vsel %vm1855, %v1854, %v1814
        %v1897 = vadd.f32 %v1616, %v1893
        %v1898 = vadd.f32 %v1617, %v1892
        %v1899 = vadd.f32 %v1618, %v1891
        %v1900 = vadd.f32 %v1619, %v1890
        %v1901 = vadd.f32 %v1620, %v1889
        %v1902 = vadd.f32 %v1621, %v1888
        %v1903 = vadd.f32 %v1622, %v1887
        %v1904 = vadd.f32 %v1623, %v1886
        %v1905 = vadd.f32 %v1624, %v1885
        %v1906 = vadd.f32 %v1625, %v1884
        %v1907 = vadd.f32 %v1626, %v1883
        %v1908 = vadd.f32 %v1627, %v1882
        %v1909 = vadd.f32 %v1628, %v1881
        %v1910 = vadd.f32 %v1629, %v1880
        %v1911 = vadd.f32 %v1630, %v1879
        %v1912 = vadd.f32 %v1631, %v1878
        %v1913 = vadd.f32 %v1632, %v1877
        %v1914 = vadd.f32 %v1633, %v1876
        %v1915 = vadd.f32 %v1634, %v1875
        %v1916 = vadd.f32 %v1635, %v1874
        %v1917 = vadd.f32 %v1636, %v1873
        %v1918 = vadd.f32 %v1637, %v1872
        %v1919 = vadd.f32 %v1638, %v1871
        %v1920 = vadd.f32 %v1639, %v1870
        %v1921 = vadd.f32 %v1640, %v1869
        %v1922 = vadd.f32 %v1641, %v1868
        %v1923 = vadd.f32 %v1642, %v1867
        %v1924 = vadd.f32 %v1643, %v1866
        %v1925 = vadd.f32 %v1644, %v1865
        %v1926 = vadd.f32 %v1645, %v1864
        %v1927 = vadd.f32 %v1646, %v1863
        %v1928 = vadd.f32 %v1647, %v1862
        %v1929 = vadd.f32 %v1648, %v1861
        %v1930 = vadd.f32 %v1649, %v1860
        %v1931 = vadd.f32 %v1650, %v1859
        %v1932 = vadd.f32 %v1651, %v1858
        %v1933 = vadd.f32 %v1652, %v1857
        %v1934 = vadd.f32 %v1653, %v1856
        %v1935 = vadd.f32 %v1654, %v1896
        %v1936 = vadd.f32 %v1655, %v1895
        %v1937 = vadd.f32 %v1656, %v1894
        %s1938 = scalar_lea.vmem [#allocation5], 768
        %v1939 = vld [vmem:[%s1938] sm:$0xff]
        %v1940 = vld [vmem:[%s1938 + $0x8] sm:$0xff]
        %v1941 = vld [vmem:[%s1938 + $0x10] sm:$0xff]
        %v1942 = vld [vmem:[%s1938 + $0x18] sm:$0xff]
        %v1943 = vld [vmem:[%s1938 + $0x20] sm:$0xff]
        %v1944 = vld [vmem:[%s1938 + $0x28] sm:$0xff]
        %v1945 = vld [vmem:[%s1938 + $0x30] sm:$0xff]
        %v1946 = vld [vmem:[%s1938 + $0x38] sm:$0xff]
        %v1947 = vld [vmem:[%s1938 + $0x40] sm:$0xff]
        %v1948 = vld [vmem:[%s1938 + $0x48] sm:$0xff]
        %v1949 = vld [vmem:[%s1938 + $0x50] sm:$0xff]
        %v1950 = vld [vmem:[%s1938 + $0x58] sm:$0xff]
        %v1951 = vld [vmem:[%s1938 + $0x60] sm:$0xff]
        %v1952 = vld [vmem:[%s1938 + $0x68] sm:$0xff]
        %v1953 = vld [vmem:[%s1938 + $0x70] sm:$0xff]
        %v1954 = vld [vmem:[%s1938 + $0x78] sm:$0xff]
        %1955 = vmatpush.msra.mxu0 %v1954
        %1956 = vmatpush.msra.mxu0 %v1953
        %1957 = vmatpush.msra.mxu0 %v1952
        %1958 = vmatpush.msra.mxu0 %v1951
        %1959 = vmatpush.msra.mxu0 %v1950
        %1960 = vmatpush.msra.mxu0 %v1949
        %1961 = vmatpush.msra.mxu0 %v1948
        %1962 = vmatpush.msra.mxu0 %v1947
        %1963 = vmatpush.msra.mxu0 %v1946
        %1964 = vmatpush.msra.mxu0 %v1945
        %1965 = vmatpush.msra.mxu0 %v1944
        %1966 = vmatpush.msra.mxu0 %v1943
        %1967 = vmatpush.msra.mxu0 %v1942
        %1968 = vmatpush.msra.mxu0 %v1941
        %1969 = vmatpush.msra.mxu0 %v1940
        %1970 = vmatpush.msra.mxu0 %v1939
        %1971 = vmatmul.f32.gmra.mxu0 %v332
        %v1972 = vpop.f32.mrf.mxu0
        %v1973 = vadd.f32 0.0, %v1972
        %1974 = vmatmul.f32.gmra.mxu0 %v333
        %v1975 = vpop.f32.mrf.mxu0
        %v1976 = vadd.f32 0.0, %v1975
        %1977 = vmatmul.f32.gmra.mxu0 %v334
        %v1978 = vpop.f32.mrf.mxu0
        %v1979 = vadd.f32 0.0, %v1978
        %1980 = vmatmul.f32.gmra.mxu0 %v335
        %v1981 = vpop.f32.mrf.mxu0
        %v1982 = vadd.f32 0.0, %v1981
        %1983 = vmatmul.f32.gmra.mxu0 %v336
        %v1984 = vpop.f32.mrf.mxu0
        %v1985 = vadd.f32 0.0, %v1984
        %1986 = vmatmul.f32.gmra.mxu0 %v337
        %v1987 = vpop.f32.mrf.mxu0
        %v1988 = vadd.f32 0.0, %v1987
        %1989 = vmatmul.f32.gmra.mxu0 %v338
        %v1990 = vpop.f32.mrf.mxu0
        %v1991 = vadd.f32 0.0, %v1990
        %1992 = vmatmul.f32.gmra.mxu0 %v339
        %v1993 = vpop.f32.mrf.mxu0
        %v1994 = vadd.f32 0.0, %v1993
        %1995 = vmatmul.f32.gmra.mxu0 %v340
        %v1996 = vpop.f32.mrf.mxu0
        %v1997 = vadd.f32 0.0, %v1996
        %1998 = vmatmul.f32.gmra.mxu0 %v341
        %v1999 = vpop.f32.mrf.mxu0
        %v2000 = vadd.f32 0.0, %v1999
        %2001 = vmatmul.f32.gmra.mxu0 %v342
        %v2002 = vpop.f32.mrf.mxu0
        %v2003 = vadd.f32 0.0, %v2002
        %2004 = vmatmul.f32.gmra.mxu0 %v343
        %v2005 = vpop.f32.mrf.mxu0
        %v2006 = vadd.f32 0.0, %v2005
        %2007 = vmatmul.f32.gmra.mxu0 %v344
        %v2008 = vpop.f32.mrf.mxu0
        %v2009 = vadd.f32 0.0, %v2008
        %2010 = vmatmul.f32.gmra.mxu0 %v345
        %v2011 = vpop.f32.mrf.mxu0
        %v2012 = vadd.f32 0.0, %v2011
        %2013 = vmatmul.f32.gmra.mxu0 %v346
        %v2014 = vpop.f32.mrf.mxu0
        %v2015 = vadd.f32 0.0, %v2014
        %2016 = vmatmul.f32.gmra.mxu0 %v347
        %v2017 = vpop.f32.mrf.mxu0
        %v2018 = vadd.f32 0.0, %v2017
        %2019 = vmatmul.f32.gmra.mxu0 %v348
        %v2020 = vpop.f32.mrf.mxu0
        %v2021 = vadd.f32 0.0, %v2020
        %2022 = vmatmul.f32.gmra.mxu0 %v349
        %v2023 = vpop.f32.mrf.mxu0
        %v2024 = vadd.f32 0.0, %v2023
        %2025 = vmatmul.f32.gmra.mxu0 %v350
        %v2026 = vpop.f32.mrf.mxu0
        %v2027 = vadd.f32 0.0, %v2026
        %2028 = vmatmul.f32.gmra.mxu0 %v351
        %v2029 = vpop.f32.mrf.mxu0
        %v2030 = vadd.f32 0.0, %v2029
        %2031 = vmatmul.f32.gmra.mxu0 %v352
        %v2032 = vpop.f32.mrf.mxu0
        %v2033 = vadd.f32 0.0, %v2032
        %2034 = vmatmul.f32.gmra.mxu0 %v353
        %v2035 = vpop.f32.mrf.mxu0
        %v2036 = vadd.f32 0.0, %v2035
        %2037 = vmatmul.f32.gmra.mxu0 %v354
        %v2038 = vpop.f32.mrf.mxu0
        %v2039 = vadd.f32 0.0, %v2038
        %2040 = vmatmul.f32.gmra.mxu0 %v355
        %v2041 = vpop.f32.mrf.mxu0
        %v2042 = vadd.f32 0.0, %v2041
        %2043 = vmatmul.f32.gmra.mxu0 %v356
        %v2044 = vpop.f32.mrf.mxu0
        %v2045 = vadd.f32 0.0, %v2044
        %2046 = vmatmul.f32.gmra.mxu0 %v357
        %v2047 = vpop.f32.mrf.mxu0
        %v2048 = vadd.f32 0.0, %v2047
        %2049 = vmatmul.f32.gmra.mxu0 %v358
        %v2050 = vpop.f32.mrf.mxu0
        %v2051 = vadd.f32 0.0, %v2050
        %2052 = vmatmul.f32.gmra.mxu0 %v359
        %v2053 = vpop.f32.mrf.mxu0
        %v2054 = vadd.f32 0.0, %v2053
        %2055 = vmatmul.f32.gmra.mxu0 %v360
        %v2056 = vpop.f32.mrf.mxu0
        %v2057 = vadd.f32 0.0, %v2056
        %2058 = vmatmul.f32.gmra.mxu0 %v361
        %v2059 = vpop.f32.mrf.mxu0
        %v2060 = vadd.f32 0.0, %v2059
        %2061 = vmatmul.f32.gmra.mxu0 %v362
        %v2062 = vpop.f32.mrf.mxu0
        %v2063 = vadd.f32 0.0, %v2062
        %2064 = vmatmul.f32.gmra.mxu0 %v363
        %v2065 = vpop.f32.mrf.mxu0
        %v2066 = vadd.f32 0.0, %v2065
        %2067 = vmatmul.f32.gmra.mxu0 %v364
        %v2068 = vpop.f32.mrf.mxu0
        %v2069 = vadd.f32 0.0, %v2068
        %2070 = vmatmul.f32.gmra.mxu0 %v365
        %v2071 = vpop.f32.mrf.mxu0
        %v2072 = vadd.f32 0.0, %v2071
        %2073 = vmatmul.f32.gmra.mxu0 %v366
        %v2074 = vpop.f32.mrf.mxu0
        %v2075 = vadd.f32 0.0, %v2074
        %2076 = vmatmul.f32.gmra.mxu0 %v367
        %v2077 = vpop.f32.mrf.mxu0
        %v2078 = vadd.f32 0.0, %v2077
        %2079 = vmatmul.f32.gmra.mxu0 %v368
        %v2080 = vpop.f32.mrf.mxu0
        %v2081 = vadd.f32 0.0, %v2080
        %2082 = vmatmul.f32.gmra.mxu0 %v369
        %v2083 = vpop.f32.mrf.mxu0
        %v2084 = vadd.f32 0.0, %v2083
        %2085 = vmatmul.f32.gmra.mxu0 %v370
        %v2086 = vpop.f32.mrf.mxu0
        %v2087 = vadd.f32 0.0, %v2086
        %2088 = vmatmul.f32.gmra.mxu0 %v371
        %v2089 = vpop.f32.mrf.mxu0
        %v2090 = vadd.f32 0.0, %v2089
        %2091 = vmatmul.f32.gmra.mxu0 %v372
        %v2092 = vpop.f32.mrf.mxu0
        %v2093 = vadd.f32 0.0, %v2092
        %2094 = vdwg.mxu0
        %v2095 = vrot.slane %v1973, 4
        %v2096 = vrot.slane %v1976, 4
        %v2097 = vrot.slane %v1979, 4
        %v2098 = vrot.slane %v1982, 4
        %v2099 = vrot.slane %v1985, 4
        %v2100 = vrot.slane %v1988, 4
        %v2101 = vrot.slane %v1991, 4
        %v2102 = vrot.slane %v1994, 4
        %v2103 = vrot.slane %v1997, 4
        %v2104 = vrot.slane %v2000, 4
        %v2105 = vrot.slane %v2003, 4
        %v2106 = vrot.slane %v2006, 4
        %v2107 = vrot.slane %v2009, 4
        %v2108 = vrot.slane %v2012, 4
        %v2109 = vrot.slane %v2015, 4
        %v2110 = vrot.slane %v2018, 4
        %v2111 = vrot.slane %v2021, 4
        %v2112 = vrot.slane %v2024, 4
        %v2113 = vrot.slane %v2027, 4
        %v2114 = vrot.slane %v2030, 4
        %v2115 = vrot.slane %v2033, 4
        %v2116 = vrot.slane %v2036, 4
        %v2117 = vrot.slane %v2039, 4
        %v2118 = vrot.slane %v2042, 4
        %v2119 = vrot.slane %v2045, 4
        %v2120 = vrot.slane %v2048, 4
        %v2121 = vrot.slane %v2051, 4
        %v2122 = vrot.slane %v2054, 4
        %v2123 = vrot.slane %v2057, 4
        %v2124 = vrot.slane %v2060, 4
        %v2125 = vrot.slane %v2063, 4
        %v2126 = vrot.slane %v2066, 4
        %v2127 = vrot.slane %v2069, 4
        %v2128 = vrot.slane %v2072, 4
        %v2129 = vrot.slane %v2075, 4
        %v2130 = vrot.slane %v2078, 4
        %v2131 = vrot.slane %v2081, 4
        %v2132 = vrot.slane %v2084, 4
        %v2133 = vrot.slane %v2087, 4
        %v2134 = vrot.slane %v2090, 4
        %v2135 = vrot.slane %v2093, 4
        %v2136 = vsel %vm1855, %v2134, %v2135
        %v2137 = vsel %vm1855, %v2133, %v2134
        %v2138 = vsel %vm1855, %v2132, %v2133
        %v2139 = vsel %vm1855, %v2131, %v2132
        %v2140 = vsel %vm1855, %v2130, %v2131
        %v2141 = vsel %vm1855, %v2129, %v2130
        %v2142 = vsel %vm1855, %v2128, %v2129
        %v2143 = vsel %vm1855, %v2127, %v2128
        %v2144 = vsel %vm1855, %v2126, %v2127
        %v2145 = vsel %vm1855, %v2125, %v2126
        %v2146 = vsel %vm1855, %v2124, %v2125
        %v2147 = vsel %vm1855, %v2123, %v2124
        %v2148 = vsel %vm1855, %v2122, %v2123
        %v2149 = vsel %vm1855, %v2121, %v2122
        %v2150 = vsel %vm1855, %v2120, %v2121
        %v2151 = vsel %vm1855, %v2119, %v2120
        %v2152 = vsel %vm1855, %v2118, %v2119
        %v2153 = vsel %vm1855, %v2117, %v2118
        %v2154 = vsel %vm1855, %v2116, %v2117
        %v2155 = vsel %vm1855, %v2115, %v2116
        %v2156 = vsel %vm1855, %v2114, %v2115
        %v2157 = vsel %vm1855, %v2113, %v2114
        %v2158 = vsel %vm1855, %v2112, %v2113
        %v2159 = vsel %vm1855, %v2111, %v2112
        %v2160 = vsel %vm1855, %v2110, %v2111
        %v2161 = vsel %vm1855, %v2109, %v2110
        %v2162 = vsel %vm1855, %v2108, %v2109
        %v2163 = vsel %vm1855, %v2107, %v2108
        %v2164 = vsel %vm1855, %v2106, %v2107
        %v2165 = vsel %vm1855, %v2105, %v2106
        %v2166 = vsel %vm1855, %v2104, %v2105
        %v2167 = vsel %vm1855, %v2103, %v2104
        %v2168 = vsel %vm1855, %v2102, %v2103
        %v2169 = vsel %vm1855, %v2101, %v2102
        %v2170 = vsel %vm1855, %v2100, %v2101
        %v2171 = vsel %vm1855, %v2099, %v2100
        %v2172 = vsel %vm1855, %v2098, %v2099
        %v2173 = vsel %vm1855, %v2097, %v2098
        %v2174 = vsel %vm1855, %v2096, %v2097
        %v2175 = vsel %vm1855, %v2095, %v2096
        %v2176 = vsel %vm1855, %v2135, %v2095
        %v2177 = vadd.f32 %v1897, %v2171
        %v2178 = vadd.f32 %v1898, %v2170
        %v2179 = vadd.f32 %v1899, %v2169
        %v2180 = vadd.f32 %v1900, %v2168
        %v2181 = vadd.f32 %v1901, %v2167
        %v2182 = vadd.f32 %v1902, %v2166
        %v2183 = vadd.f32 %v1903, %v2165
        %v2184 = vadd.f32 %v1904, %v2164
        %v2185 = vadd.f32 %v1905, %v2163
        %v2186 = vadd.f32 %v1906, %v2162
        %v2187 = vadd.f32 %v1907, %v2161
        %v2188 = vadd.f32 %v1908, %v2160
        %v2189 = vadd.f32 %v1909, %v2159
        %v2190 = vadd.f32 %v1910, %v2158
        %v2191 = vadd.f32 %v1911, %v2157
        %v2192 = vadd.f32 %v1912, %v2156
        %v2193 = vadd.f32 %v1913, %v2155
        %v2194 = vadd.f32 %v1914, %v2154
        %v2195 = vadd.f32 %v1915, %v2153
        %v2196 = vadd.f32 %v1916, %v2152
        %v2197 = vadd.f32 %v1917, %v2151
        %v2198 = vadd.f32 %v1918, %v2150
        %v2199 = vadd.f32 %v1919, %v2149
        %v2200 = vadd.f32 %v1920, %v2148
        %v2201 = vadd.f32 %v1921, %v2147
        %v2202 = vadd.f32 %v1922, %v2146
        %v2203 = vadd.f32 %v1923, %v2145
        %v2204 = vadd.f32 %v1924, %v2144
        %v2205 = vadd.f32 %v1925, %v2143
        %v2206 = vadd.f32 %v1926, %v2142
        %v2207 = vadd.f32 %v1927, %v2141
        %v2208 = vadd.f32 %v1928, %v2140
        %v2209 = vadd.f32 %v1929, %v2139
        %v2210 = vadd.f32 %v1930, %v2138
        %v2211 = vadd.f32 %v1931, %v2137
        %v2212 = vadd.f32 %v1932, %v2136
        %v2213 = vadd.f32 %v1933, %v2176
        %v2214 = vadd.f32 %v1934, %v2175
        %v2215 = vadd.f32 %v1935, %v2174
        %v2216 = vadd.f32 %v1936, %v2173
        %v2217 = vadd.f32 %v1937, %v2172
        %s2218 = scalar_lea.vmem [#allocation5], 896
        %v2219 = vld [vmem:[%s2218] sm:$0xff]
        %v2220 = vld [vmem:[%s2218 + $0x8] sm:$0xff]
        %v2221 = vld [vmem:[%s2218 + $0x10] sm:$0xff]
        %v2222 = vld [vmem:[%s2218 + $0x18] sm:$0xff]
        %v2223 = vld [vmem:[%s2218 + $0x20] sm:$0xff]
        %v2224 = vld [vmem:[%s2218 + $0x28] sm:$0xff]
        %v2225 = vld [vmem:[%s2218 + $0x30] sm:$0xff]
        %v2226 = vld [vmem:[%s2218 + $0x38] sm:$0xff]
        %v2227 = vld [vmem:[%s2218 + $0x40] sm:$0xff]
        %v2228 = vld [vmem:[%s2218 + $0x48] sm:$0xff]
        %v2229 = vld [vmem:[%s2218 + $0x50] sm:$0xff]
        %v2230 = vld [vmem:[%s2218 + $0x58] sm:$0xff]
        %v2231 = vld [vmem:[%s2218 + $0x60] sm:$0xff]
        %v2232 = vld [vmem:[%s2218 + $0x68] sm:$0xff]
        %v2233 = vld [vmem:[%s2218 + $0x70] sm:$0xff]
        %v2234 = vld [vmem:[%s2218 + $0x78] sm:$0xff]
        %2235 = vmatpush.msra.mxu0 %v2234
        %2236 = vmatpush.msra.mxu0 %v2233
        %2237 = vmatpush.msra.mxu0 %v2232
        %2238 = vmatpush.msra.mxu0 %v2231
        %2239 = vmatpush.msra.mxu0 %v2230
        %2240 = vmatpush.msra.mxu0 %v2229
        %2241 = vmatpush.msra.mxu0 %v2228
        %2242 = vmatpush.msra.mxu0 %v2227
        %2243 = vmatpush.msra.mxu0 %v2226
        %2244 = vmatpush.msra.mxu0 %v2225
        %2245 = vmatpush.msra.mxu0 %v2224
        %2246 = vmatpush.msra.mxu0 %v2223
        %2247 = vmatpush.msra.mxu0 %v2222
        %2248 = vmatpush.msra.mxu0 %v2221
        %2249 = vmatpush.msra.mxu0 %v2220
        %2250 = vmatpush.msra.mxu0 %v2219
        %2251 = vmatmul.f32.gmra.mxu0 %v332
        %v2252 = vpop.f32.mrf.mxu0
        %v2253 = vadd.f32 0.0, %v2252
        %2254 = vmatmul.f32.gmra.mxu0 %v333
        %v2255 = vpop.f32.mrf.mxu0
        %v2256 = vadd.f32 0.0, %v2255
        %2257 = vmatmul.f32.gmra.mxu0 %v334
        %v2258 = vpop.f32.mrf.mxu0
        %v2259 = vadd.f32 0.0, %v2258
        %2260 = vmatmul.f32.gmra.mxu0 %v335
        %v2261 = vpop.f32.mrf.mxu0
        %v2262 = vadd.f32 0.0, %v2261
        %2263 = vmatmul.f32.gmra.mxu0 %v336
        %v2264 = vpop.f32.mrf.mxu0
        %v2265 = vadd.f32 0.0, %v2264
        %2266 = vmatmul.f32.gmra.mxu0 %v337
        %v2267 = vpop.f32.mrf.mxu0
        %v2268 = vadd.f32 0.0, %v2267
        %2269 = vmatmul.f32.gmra.mxu0 %v338
        %v2270 = vpop.f32.mrf.mxu0
        %v2271 = vadd.f32 0.0, %v2270
        %2272 = vmatmul.f32.gmra.mxu0 %v339
        %v2273 = vpop.f32.mrf.mxu0
        %v2274 = vadd.f32 0.0, %v2273
        %2275 = vmatmul.f32.gmra.mxu0 %v340
        %v2276 = vpop.f32.mrf.mxu0
        %v2277 = vadd.f32 0.0, %v2276
        %2278 = vmatmul.f32.gmra.mxu0 %v341
        %v2279 = vpop.f32.mrf.mxu0
        %v2280 = vadd.f32 0.0, %v2279
        %2281 = vmatmul.f32.gmra.mxu0 %v342
        %v2282 = vpop.f32.mrf.mxu0
        %v2283 = vadd.f32 0.0, %v2282
        %2284 = vmatmul.f32.gmra.mxu0 %v343
        %v2285 = vpop.f32.mrf.mxu0
        %v2286 = vadd.f32 0.0, %v2285
        %2287 = vmatmul.f32.gmra.mxu0 %v344
        %v2288 = vpop.f32.mrf.mxu0
        %v2289 = vadd.f32 0.0, %v2288
        %2290 = vmatmul.f32.gmra.mxu0 %v345
        %v2291 = vpop.f32.mrf.mxu0
        %v2292 = vadd.f32 0.0, %v2291
        %2293 = vmatmul.f32.gmra.mxu0 %v346
        %v2294 = vpop.f32.mrf.mxu0
        %v2295 = vadd.f32 0.0, %v2294
        %2296 = vmatmul.f32.gmra.mxu0 %v347
        %v2297 = vpop.f32.mrf.mxu0
        %v2298 = vadd.f32 0.0, %v2297
        %2299 = vmatmul.f32.gmra.mxu0 %v348
        %v2300 = vpop.f32.mrf.mxu0
        %v2301 = vadd.f32 0.0, %v2300
        %2302 = vmatmul.f32.gmra.mxu0 %v349
        %v2303 = vpop.f32.mrf.mxu0
        %v2304 = vadd.f32 0.0, %v2303
        %2305 = vmatmul.f32.gmra.mxu0 %v350
        %v2306 = vpop.f32.mrf.mxu0
        %v2307 = vadd.f32 0.0, %v2306
        %2308 = vmatmul.f32.gmra.mxu0 %v351
        %v2309 = vpop.f32.mrf.mxu0
        %v2310 = vadd.f32 0.0, %v2309
        %2311 = vmatmul.f32.gmra.mxu0 %v352
        %v2312 = vpop.f32.mrf.mxu0
        %v2313 = vadd.f32 0.0, %v2312
        %2314 = vmatmul.f32.gmra.mxu0 %v353
        %v2315 = vpop.f32.mrf.mxu0
        %v2316 = vadd.f32 0.0, %v2315
        %2317 = vmatmul.f32.gmra.mxu0 %v354
        %v2318 = vpop.f32.mrf.mxu0
        %v2319 = vadd.f32 0.0, %v2318
        %2320 = vmatmul.f32.gmra.mxu0 %v355
        %v2321 = vpop.f32.mrf.mxu0
        %v2322 = vadd.f32 0.0, %v2321
        %2323 = vmatmul.f32.gmra.mxu0 %v356
        %v2324 = vpop.f32.mrf.mxu0
        %v2325 = vadd.f32 0.0, %v2324
        %2326 = vmatmul.f32.gmra.mxu0 %v357
        %v2327 = vpop.f32.mrf.mxu0
        %v2328 = vadd.f32 0.0, %v2327
        %2329 = vmatmul.f32.gmra.mxu0 %v358
        %v2330 = vpop.f32.mrf.mxu0
        %v2331 = vadd.f32 0.0, %v2330
        %2332 = vmatmul.f32.gmra.mxu0 %v359
        %v2333 = vpop.f32.mrf.mxu0
        %v2334 = vadd.f32 0.0, %v2333
        %2335 = vmatmul.f32.gmra.mxu0 %v360
        %v2336 = vpop.f32.mrf.mxu0
        %v2337 = vadd.f32 0.0, %v2336
        %2338 = vmatmul.f32.gmra.mxu0 %v361
        %v2339 = vpop.f32.mrf.mxu0
        %v2340 = vadd.f32 0.0, %v2339
        %2341 = vmatmul.f32.gmra.mxu0 %v362
        %v2342 = vpop.f32.mrf.mxu0
        %v2343 = vadd.f32 0.0, %v2342
        %2344 = vmatmul.f32.gmra.mxu0 %v363
        %v2345 = vpop.f32.mrf.mxu0
        %v2346 = vadd.f32 0.0, %v2345
        %2347 = vmatmul.f32.gmra.mxu0 %v364
        %v2348 = vpop.f32.mrf.mxu0
        %v2349 = vadd.f32 0.0, %v2348
        %2350 = vmatmul.f32.gmra.mxu0 %v365
        %v2351 = vpop.f32.mrf.mxu0
        %v2352 = vadd.f32 0.0, %v2351
        %2353 = vmatmul.f32.gmra.mxu0 %v366
        %v2354 = vpop.f32.mrf.mxu0
        %v2355 = vadd.f32 0.0, %v2354
        %2356 = vmatmul.f32.gmra.mxu0 %v367
        %v2357 = vpop.f32.mrf.mxu0
        %v2358 = vadd.f32 0.0, %v2357
        %2359 = vmatmul.f32.gmra.mxu0 %v368
        %v2360 = vpop.f32.mrf.mxu0
        %v2361 = vadd.f32 0.0, %v2360
        %2362 = vmatmul.f32.gmra.mxu0 %v369
        %v2363 = vpop.f32.mrf.mxu0
        %v2364 = vadd.f32 0.0, %v2363
        %2365 = vmatmul.f32.gmra.mxu0 %v370
        %v2366 = vpop.f32.mrf.mxu0
        %v2367 = vadd.f32 0.0, %v2366
        %2368 = vmatmul.f32.gmra.mxu0 %v371
        %v2369 = vpop.f32.mrf.mxu0
        %v2370 = vadd.f32 0.0, %v2369
        %2371 = vmatmul.f32.gmra.mxu0 %v372
        %v2372 = vpop.f32.mrf.mxu0
        %v2373 = vadd.f32 0.0, %v2372
        %2374 = vdwg.mxu0
        %v2375 = vrot.slane %v2253, 5
        %v2376 = vrot.slane %v2256, 5
        %v2377 = vrot.slane %v2259, 5
        %v2378 = vrot.slane %v2262, 5
        %v2379 = vrot.slane %v2265, 5
        %v2380 = vrot.slane %v2268, 5
        %v2381 = vrot.slane %v2271, 5
        %v2382 = vrot.slane %v2274, 5
        %v2383 = vrot.slane %v2277, 5
        %v2384 = vrot.slane %v2280, 5
        %v2385 = vrot.slane %v2283, 5
        %v2386 = vrot.slane %v2286, 5
        %v2387 = vrot.slane %v2289, 5
        %v2388 = vrot.slane %v2292, 5
        %v2389 = vrot.slane %v2295, 5
        %v2390 = vrot.slane %v2298, 5
        %v2391 = vrot.slane %v2301, 5
        %v2392 = vrot.slane %v2304, 5
        %v2393 = vrot.slane %v2307, 5
        %v2394 = vrot.slane %v2310, 5
        %v2395 = vrot.slane %v2313, 5
        %v2396 = vrot.slane %v2316, 5
        %v2397 = vrot.slane %v2319, 5
        %v2398 = vrot.slane %v2322, 5
        %v2399 = vrot.slane %v2325, 5
        %v2400 = vrot.slane %v2328, 5
        %v2401 = vrot.slane %v2331, 5
        %v2402 = vrot.slane %v2334, 5
        %v2403 = vrot.slane %v2337, 5
        %v2404 = vrot.slane %v2340, 5
        %v2405 = vrot.slane %v2343, 5
        %v2406 = vrot.slane %v2346, 5
        %v2407 = vrot.slane %v2349, 5
        %v2408 = vrot.slane %v2352, 5
        %v2409 = vrot.slane %v2355, 5
        %v2410 = vrot.slane %v2358, 5
        %v2411 = vrot.slane %v2361, 5
        %v2412 = vrot.slane %v2364, 5
        %v2413 = vrot.slane %v2367, 5
        %v2414 = vrot.slane %v2370, 5
        %v2415 = vrot.slane %v2373, 5
        %vm2416 = vcmp.lt.s32.totalorder %v632, 3
        %v2417 = vsel %vm2416, %v2414, %v2415
        %v2418 = vsel %vm2416, %v2413, %v2414
        %v2419 = vsel %vm2416, %v2412, %v2413
        %v2420 = vsel %vm2416, %v2411, %v2412
        %v2421 = vsel %vm2416, %v2410, %v2411
        %v2422 = vsel %vm2416, %v2409, %v2410
        %v2423 = vsel %vm2416, %v2408, %v2409
        %v2424 = vsel %vm2416, %v2407, %v2408
        %v2425 = vsel %vm2416, %v2406, %v2407
        %v2426 = vsel %vm2416, %v2405, %v2406
        %v2427 = vsel %vm2416, %v2404, %v2405
        %v2428 = vsel %vm2416, %v2403, %v2404
        %v2429 = vsel %vm2416, %v2402, %v2403
        %v2430 = vsel %vm2416, %v2401, %v2402
        %v2431 = vsel %vm2416, %v2400, %v2401
        %v2432 = vsel %vm2416, %v2399, %v2400
        %v2433 = vsel %vm2416, %v2398, %v2399
        %v2434 = vsel %vm2416, %v2397, %v2398
        %v2435 = vsel %vm2416, %v2396, %v2397
        %v2436 = vsel %vm2416, %v2395, %v2396
        %v2437 = vsel %vm2416, %v2394, %v2395
        %v2438 = vsel %vm2416, %v2393, %v2394
        %v2439 = vsel %vm2416, %v2392, %v2393
        %v2440 = vsel %vm2416, %v2391, %v2392
        %v2441 = vsel %vm2416, %v2390, %v2391
        %v2442 = vsel %vm2416, %v2389, %v2390
        %v2443 = vsel %vm2416, %v2388, %v2389
        %v2444 = vsel %vm2416, %v2387, %v2388
        %v2445 = vsel %vm2416, %v2386, %v2387
        %v2446 = vsel %vm2416, %v2385, %v2386
        %v2447 = vsel %vm2416, %v2384, %v2385
        %v2448 = vsel %vm2416, %v2383, %v2384
        %v2449 = vsel %vm2416, %v2382, %v2383
        %v2450 = vsel %vm2416, %v2381, %v2382
        %v2451 = vsel %vm2416, %v2380, %v2381
        %v2452 = vsel %vm2416, %v2379, %v2380
        %v2453 = vsel %vm2416, %v2378, %v2379
        %v2454 = vsel %vm2416, %v2377, %v2378
        %v2455 = vsel %vm2416, %v2376, %v2377
        %v2456 = vsel %vm2416, %v2375, %v2376
        %v2457 = vsel %vm2416, %v2415, %v2375
        %v2458 = vadd.f32 %v2177, %v2452
        %v2459 = vadd.f32 %v2178, %v2451
        %v2460 = vadd.f32 %v2179, %v2450
        %v2461 = vadd.f32 %v2180, %v2449
        %v2462 = vadd.f32 %v2181, %v2448
        %v2463 = vadd.f32 %v2182, %v2447
        %v2464 = vadd.f32 %v2183, %v2446
        %v2465 = vadd.f32 %v2184, %v2445
        %v2466 = vadd.f32 %v2185, %v2444
        %v2467 = vadd.f32 %v2186, %v2443
        %v2468 = vadd.f32 %v2187, %v2442
        %v2469 = vadd.f32 %v2188, %v2441
        %v2470 = vadd.f32 %v2189, %v2440
        %v2471 = vadd.f32 %v2190, %v2439
        %v2472 = vadd.f32 %v2191, %v2438
        %v2473 = vadd.f32 %v2192, %v2437
        %v2474 = vadd.f32 %v2193, %v2436
        %v2475 = vadd.f32 %v2194, %v2435
        %v2476 = vadd.f32 %v2195, %v2434
        %v2477 = vadd.f32 %v2196, %v2433
        %v2478 = vadd.f32 %v2197, %v2432
        %v2479 = vadd.f32 %v2198, %v2431
        %v2480 = vadd.f32 %v2199, %v2430
        %v2481 = vadd.f32 %v2200, %v2429
        %v2482 = vadd.f32 %v2201, %v2428
        %v2483 = vadd.f32 %v2202, %v2427
        %v2484 = vadd.f32 %v2203, %v2426
        %v2485 = vadd.f32 %v2204, %v2425
        %v2486 = vadd.f32 %v2205, %v2424
        %v2487 = vadd.f32 %v2206, %v2423
        %v2488 = vadd.f32 %v2207, %v2422
        %v2489 = vadd.f32 %v2208, %v2421
        %v2490 = vadd.f32 %v2209, %v2420
        %v2491 = vadd.f32 %v2210, %v2419
        %v2492 = vadd.f32 %v2211, %v2418
        %v2493 = vadd.f32 %v2212, %v2417
        %v2494 = vadd.f32 %v2213, %v2457
        %v2495 = vadd.f32 %v2214, %v2456
        %v2496 = vadd.f32 %v2215, %v2455
        %v2497 = vadd.f32 %v2216, %v2454
        %v2498 = vadd.f32 %v2217, %v2453
        %s2499 = scalar_lea.vmem [#allocation5], 1024
        %v2500 = vld [vmem:[%s2499] sm:$0xff]
        %v2501 = vld [vmem:[%s2499 + $0x8] sm:$0xff]
        %v2502 = vld [vmem:[%s2499 + $0x10] sm:$0xff]
        %v2503 = vld [vmem:[%s2499 + $0x18] sm:$0xff]
        %v2504 = vld [vmem:[%s2499 + $0x20] sm:$0xff]
        %v2505 = vld [vmem:[%s2499 + $0x28] sm:$0xff]
        %v2506 = vld [vmem:[%s2499 + $0x30] sm:$0xff]
        %v2507 = vld [vmem:[%s2499 + $0x38] sm:$0xff]
        %v2508 = vld [vmem:[%s2499 + $0x40] sm:$0xff]
        %v2509 = vld [vmem:[%s2499 + $0x48] sm:$0xff]
        %v2510 = vld [vmem:[%s2499 + $0x50] sm:$0xff]
        %v2511 = vld [vmem:[%s2499 + $0x58] sm:$0xff]
        %v2512 = vld [vmem:[%s2499 + $0x60] sm:$0xff]
        %v2513 = vld [vmem:[%s2499 + $0x68] sm:$0xff]
        %v2514 = vld [vmem:[%s2499 + $0x70] sm:$0xff]
        %v2515 = vld [vmem:[%s2499 + $0x78] sm:$0xff]
        %2516 = vmatpush.msra.mxu0 %v2515
        %2517 = vmatpush.msra.mxu0 %v2514
        %2518 = vmatpush.msra.mxu0 %v2513
        %2519 = vmatpush.msra.mxu0 %v2512
        %2520 = vmatpush.msra.mxu0 %v2511
        %2521 = vmatpush.msra.mxu0 %v2510
        %2522 = vmatpush.msra.mxu0 %v2509
        %2523 = vmatpush.msra.mxu0 %v2508
        %2524 = vmatpush.msra.mxu0 %v2507
        %2525 = vmatpush.msra.mxu0 %v2506
        %2526 = vmatpush.msra.mxu0 %v2505
        %2527 = vmatpush.msra.mxu0 %v2504
        %2528 = vmatpush.msra.mxu0 %v2503
        %2529 = vmatpush.msra.mxu0 %v2502
        %2530 = vmatpush.msra.mxu0 %v2501
        %2531 = vmatpush.msra.mxu0 %v2500
        %2532 = vmatmul.f32.gmra.mxu0 %v332
        %v2533 = vpop.f32.mrf.mxu0
        %v2534 = vadd.f32 0.0, %v2533
        %2535 = vmatmul.f32.gmra.mxu0 %v333
        %v2536 = vpop.f32.mrf.mxu0
        %v2537 = vadd.f32 0.0, %v2536
        %2538 = vmatmul.f32.gmra.mxu0 %v334
        %v2539 = vpop.f32.mrf.mxu0
        %v2540 = vadd.f32 0.0, %v2539
        %2541 = vmatmul.f32.gmra.mxu0 %v335
        %v2542 = vpop.f32.mrf.mxu0
        %v2543 = vadd.f32 0.0, %v2542
        %2544 = vmatmul.f32.gmra.mxu0 %v336
        %v2545 = vpop.f32.mrf.mxu0
        %v2546 = vadd.f32 0.0, %v2545
        %2547 = vmatmul.f32.gmra.mxu0 %v337
        %v2548 = vpop.f32.mrf.mxu0
        %v2549 = vadd.f32 0.0, %v2548
        %2550 = vmatmul.f32.gmra.mxu0 %v338
        %v2551 = vpop.f32.mrf.mxu0
        %v2552 = vadd.f32 0.0, %v2551
        %2553 = vmatmul.f32.gmra.mxu0 %v339
        %v2554 = vpop.f32.mrf.mxu0
        %v2555 = vadd.f32 0.0, %v2554
        %2556 = vmatmul.f32.gmra.mxu0 %v340
        %v2557 = vpop.f32.mrf.mxu0
        %v2558 = vadd.f32 0.0, %v2557
        %2559 = vmatmul.f32.gmra.mxu0 %v341
        %v2560 = vpop.f32.mrf.mxu0
        %v2561 = vadd.f32 0.0, %v2560
        %2562 = vmatmul.f32.gmra.mxu0 %v342
        %v2563 = vpop.f32.mrf.mxu0
        %v2564 = vadd.f32 0.0, %v2563
        %2565 = vmatmul.f32.gmra.mxu0 %v343
        %v2566 = vpop.f32.mrf.mxu0
        %v2567 = vadd.f32 0.0, %v2566
        %2568 = vmatmul.f32.gmra.mxu0 %v344
        %v2569 = vpop.f32.mrf.mxu0
        %v2570 = vadd.f32 0.0, %v2569
        %2571 = vmatmul.f32.gmra.mxu0 %v345
        %v2572 = vpop.f32.mrf.mxu0
        %v2573 = vadd.f32 0.0, %v2572
        %2574 = vmatmul.f32.gmra.mxu0 %v346
        %v2575 = vpop.f32.mrf.mxu0
        %v2576 = vadd.f32 0.0, %v2575
        %2577 = vmatmul.f32.gmra.mxu0 %v347
        %v2578 = vpop.f32.mrf.mxu0
        %v2579 = vadd.f32 0.0, %v2578
        %2580 = vmatmul.f32.gmra.mxu0 %v348
        %v2581 = vpop.f32.mrf.mxu0
        %v2582 = vadd.f32 0.0, %v2581
        %2583 = vmatmul.f32.gmra.mxu0 %v349
        %v2584 = vpop.f32.mrf.mxu0
        %v2585 = vadd.f32 0.0, %v2584
        %2586 = vmatmul.f32.gmra.mxu0 %v350
        %v2587 = vpop.f32.mrf.mxu0
        %v2588 = vadd.f32 0.0, %v2587
        %2589 = vmatmul.f32.gmra.mxu0 %v351
        %v2590 = vpop.f32.mrf.mxu0
        %v2591 = vadd.f32 0.0, %v2590
        %2592 = vmatmul.f32.gmra.mxu0 %v352
        %v2593 = vpop.f32.mrf.mxu0
        %v2594 = vadd.f32 0.0, %v2593
        %2595 = vmatmul.f32.gmra.mxu0 %v353
        %v2596 = vpop.f32.mrf.mxu0
        %v2597 = vadd.f32 0.0, %v2596
        %2598 = vmatmul.f32.gmra.mxu0 %v354
        %v2599 = vpop.f32.mrf.mxu0
        %v2600 = vadd.f32 0.0, %v2599
        %2601 = vmatmul.f32.gmra.mxu0 %v355
        %v2602 = vpop.f32.mrf.mxu0
        %v2603 = vadd.f32 0.0, %v2602
        %2604 = vmatmul.f32.gmra.mxu0 %v356
        %v2605 = vpop.f32.mrf.mxu0
        %v2606 = vadd.f32 0.0, %v2605
        %2607 = vmatmul.f32.gmra.mxu0 %v357
        %v2608 = vpop.f32.mrf.mxu0
        %v2609 = vadd.f32 0.0, %v2608
        %2610 = vmatmul.f32.gmra.mxu0 %v358
        %v2611 = vpop.f32.mrf.mxu0
        %v2612 = vadd.f32 0.0, %v2611
        %2613 = vmatmul.f32.gmra.mxu0 %v359
        %v2614 = vpop.f32.mrf.mxu0
        %v2615 = vadd.f32 0.0, %v2614
        %2616 = vmatmul.f32.gmra.mxu0 %v360
        %v2617 = vpop.f32.mrf.mxu0
        %v2618 = vadd.f32 0.0, %v2617
        %2619 = vmatmul.f32.gmra.mxu0 %v361
        %v2620 = vpop.f32.mrf.mxu0
        %v2621 = vadd.f32 0.0, %v2620
        %2622 = vmatmul.f32.gmra.mxu0 %v362
        %v2623 = vpop.f32.mrf.mxu0
        %v2624 = vadd.f32 0.0, %v2623
        %2625 = vmatmul.f32.gmra.mxu0 %v363
        %v2626 = vpop.f32.mrf.mxu0
        %v2627 = vadd.f32 0.0, %v2626
        %2628 = vmatmul.f32.gmra.mxu0 %v364
        %v2629 = vpop.f32.mrf.mxu0
        %v2630 = vadd.f32 0.0, %v2629
        %2631 = vmatmul.f32.gmra.mxu0 %v365
        %v2632 = vpop.f32.mrf.mxu0
        %v2633 = vadd.f32 0.0, %v2632
        %2634 = vmatmul.f32.gmra.mxu0 %v366
        %v2635 = vpop.f32.mrf.mxu0
        %v2636 = vadd.f32 0.0, %v2635
        %2637 = vmatmul.f32.gmra.mxu0 %v367
        %v2638 = vpop.f32.mrf.mxu0
        %v2639 = vadd.f32 0.0, %v2638
        %2640 = vmatmul.f32.gmra.mxu0 %v368
        %v2641 = vpop.f32.mrf.mxu0
        %v2642 = vadd.f32 0.0, %v2641
        %2643 = vmatmul.f32.gmra.mxu0 %v369
        %v2644 = vpop.f32.mrf.mxu0
        %v2645 = vadd.f32 0.0, %v2644
        %2646 = vmatmul.f32.gmra.mxu0 %v370
        %v2647 = vpop.f32.mrf.mxu0
        %v2648 = vadd.f32 0.0, %v2647
        %2649 = vmatmul.f32.gmra.mxu0 %v371
        %v2650 = vpop.f32.mrf.mxu0
        %v2651 = vadd.f32 0.0, %v2650
        %2652 = vmatmul.f32.gmra.mxu0 %v372
        %v2653 = vpop.f32.mrf.mxu0
        %v2654 = vadd.f32 0.0, %v2653
        %2655 = vdwg.mxu0
        %v2656 = vrot.slane %v2534, 6
        %v2657 = vrot.slane %v2537, 6
        %v2658 = vrot.slane %v2540, 6
        %v2659 = vrot.slane %v2543, 6
        %v2660 = vrot.slane %v2546, 6
        %v2661 = vrot.slane %v2549, 6
        %v2662 = vrot.slane %v2552, 6
        %v2663 = vrot.slane %v2555, 6
        %v2664 = vrot.slane %v2558, 6
        %v2665 = vrot.slane %v2561, 6
        %v2666 = vrot.slane %v2564, 6
        %v2667 = vrot.slane %v2567, 6
        %v2668 = vrot.slane %v2570, 6
        %v2669 = vrot.slane %v2573, 6
        %v2670 = vrot.slane %v2576, 6
        %v2671 = vrot.slane %v2579, 6
        %v2672 = vrot.slane %v2582, 6
        %v2673 = vrot.slane %v2585, 6
        %v2674 = vrot.slane %v2588, 6
        %v2675 = vrot.slane %v2591, 6
        %v2676 = vrot.slane %v2594, 6
        %v2677 = vrot.slane %v2597, 6
        %v2678 = vrot.slane %v2600, 6
        %v2679 = vrot.slane %v2603, 6
        %v2680 = vrot.slane %v2606, 6
        %v2681 = vrot.slane %v2609, 6
        %v2682 = vrot.slane %v2612, 6
        %v2683 = vrot.slane %v2615, 6
        %v2684 = vrot.slane %v2618, 6
        %v2685 = vrot.slane %v2621, 6
        %v2686 = vrot.slane %v2624, 6
        %v2687 = vrot.slane %v2627, 6
        %v2688 = vrot.slane %v2630, 6
        %v2689 = vrot.slane %v2633, 6
        %v2690 = vrot.slane %v2636, 6
        %v2691 = vrot.slane %v2639, 6
        %v2692 = vrot.slane %v2642, 6
        %v2693 = vrot.slane %v2645, 6
        %v2694 = vrot.slane %v2648, 6
        %v2695 = vrot.slane %v2651, 6
        %v2696 = vrot.slane %v2654, 6
        %vm2697 = vcmp.lt.s32.totalorder %v632, 2
        %v2698 = vsel %vm2697, %v2695, %v2696
        %v2699 = vsel %vm2697, %v2694, %v2695
        %v2700 = vsel %vm2697, %v2693, %v2694
        %v2701 = vsel %vm2697, %v2692, %v2693
        %v2702 = vsel %vm2697, %v2691, %v2692
        %v2703 = vsel %vm2697, %v2690, %v2691
        %v2704 = vsel %vm2697, %v2689, %v2690
        %v2705 = vsel %vm2697, %v2688, %v2689
        %v2706 = vsel %vm2697, %v2687, %v2688
        %v2707 = vsel %vm2697, %v2686, %v2687
        %v2708 = vsel %vm2697, %v2685, %v2686
        %v2709 = vsel %vm2697, %v2684, %v2685
        %v2710 = vsel %vm2697, %v2683, %v2684
        %v2711 = vsel %vm2697, %v2682, %v2683
        %v2712 = vsel %vm2697, %v2681, %v2682
        %v2713 = vsel %vm2697, %v2680, %v2681
        %v2714 = vsel %vm2697, %v2679, %v2680
        %v2715 = vsel %vm2697, %v2678, %v2679
        %v2716 = vsel %vm2697, %v2677, %v2678
        %v2717 = vsel %vm2697, %v2676, %v2677
        %v2718 = vsel %vm2697, %v2675, %v2676
        %v2719 = vsel %vm2697, %v2674, %v2675
        %v2720 = vsel %vm2697, %v2673, %v2674
        %v2721 = vsel %vm2697, %v2672, %v2673
        %v2722 = vsel %vm2697, %v2671, %v2672
        %v2723 = vsel %vm2697, %v2670, %v2671
        %v2724 = vsel %vm2697, %v2669, %v2670
        %v2725 = vsel %vm2697, %v2668, %v2669
        %v2726 = vsel %vm2697, %v2667, %v2668
        %v2727 = vsel %vm2697, %v2666, %v2667
        %v2728 = vsel %vm2697, %v2665, %v2666
        %v2729 = vsel %vm2697, %v2664, %v2665
        %v2730 = vsel %vm2697, %v2663, %v2664
        %v2731 = vsel %vm2697, %v2662, %v2663
        %v2732 = vsel %vm2697, %v2661, %v2662
        %v2733 = vsel %vm2697, %v2660, %v2661
        %v2734 = vsel %vm2697, %v2659, %v2660
        %v2735 = vsel %vm2697, %v2658, %v2659
        %v2736 = vsel %vm2697, %v2657, %v2658
        %v2737 = vsel %vm2697, %v2656, %v2657
        %v2738 = vsel %vm2697, %v2696, %v2656
        %v2739 = vadd.f32 %v2458, %v2733
        %v2740 = vadd.f32 %v2459, %v2732
        %v2741 = vadd.f32 %v2460, %v2731
        %v2742 = vadd.f32 %v2461, %v2730
        %v2743 = vadd.f32 %v2462, %v2729
        %v2744 = vadd.f32 %v2463, %v2728
        %v2745 = vadd.f32 %v2464, %v2727
        %v2746 = vadd.f32 %v2465, %v2726
        %v2747 = vadd.f32 %v2466, %v2725
        %v2748 = vadd.f32 %v2467, %v2724
        %v2749 = vadd.f32 %v2468, %v2723
        %v2750 = vadd.f32 %v2469, %v2722
        %v2751 = vadd.f32 %v2470, %v2721
        %v2752 = vadd.f32 %v2471, %v2720
        %v2753 = vadd.f32 %v2472, %v2719
        %v2754 = vadd.f32 %v2473, %v2718
        %v2755 = vadd.f32 %v2474, %v2717
        %v2756 = vadd.f32 %v2475, %v2716
        %v2757 = vadd.f32 %v2476, %v2715
        %v2758 = vadd.f32 %v2477, %v2714
        %v2759 = vadd.f32 %v2478, %v2713
        %v2760 = vadd.f32 %v2479, %v2712
        %v2761 = vadd.f32 %v2480, %v2711
        %v2762 = vadd.f32 %v2481, %v2710
        %v2763 = vadd.f32 %v2482, %v2709
        %v2764 = vadd.f32 %v2483, %v2708
        %v2765 = vadd.f32 %v2484, %v2707
        %v2766 = vadd.f32 %v2485, %v2706
        %v2767 = vadd.f32 %v2486, %v2705
        %v2768 = vadd.f32 %v2487, %v2704
        %v2769 = vadd.f32 %v2488, %v2703
        %v2770 = vadd.f32 %v2489, %v2702
        %v2771 = vadd.f32 %v2490, %v2701
        %v2772 = vadd.f32 %v2491, %v2700
        %v2773 = vadd.f32 %v2492, %v2699
        %v2774 = vadd.f32 %v2493, %v2698
        %v2775 = vadd.f32 %v2494, %v2738
        %v2776 = vadd.f32 %v2495, %v2737
        %v2777 = vadd.f32 %v2496, %v2736
        %v2778 = vadd.f32 %v2497, %v2735
        %v2779 = vadd.f32 %v2498, %v2734
        %v2781 = vperm.slane %v373, 0
        %v2783 = vmul.f32 %v2739, %v2781
        %v2784 = vmul.f32 %v2740, %v2781
        %v2785 = vmul.f32 %v2741, %v2781
        %v2786 = vmul.f32 %v2742, %v2781
        %v2787 = vmul.f32 %v2743, %v2781
        %v2788 = vmul.f32 %v2744, %v2781
        %v2789 = vmul.f32 %v2745, %v2781
        %v2790 = vmul.f32 %v2746, %v2781
        %v2791 = vmul.f32 %v2747, %v2781
        %v2792 = vmul.f32 %v2748, %v2781
        %v2793 = vmul.f32 %v2749, %v2781
        %v2794 = vmul.f32 %v2750, %v2781
        %v2795 = vmul.f32 %v2751, %v2781
        %v2796 = vmul.f32 %v2752, %v2781
        %v2797 = vmul.f32 %v2753, %v2781
        %v2798 = vmul.f32 %v2754, %v2781
        %v2799 = vmul.f32 %v2755, %v2781
        %v2800 = vmul.f32 %v2756, %v2781
        %v2801 = vmul.f32 %v2757, %v2781
        %v2802 = vmul.f32 %v2758, %v2781
        %v2803 = vmul.f32 %v2759, %v2781
        %v2804 = vmul.f32 %v2760, %v2781
        %v2805 = vmul.f32 %v2761, %v2781
        %v2806 = vmul.f32 %v2762, %v2781
        %v2807 = vmul.f32 %v2763, %v2781
        %v2808 = vmul.f32 %v2764, %v2781
        %v2809 = vmul.f32 %v2765, %v2781
        %v2810 = vmul.f32 %v2766, %v2781
        %v2811 = vmul.f32 %v2767, %v2781
        %v2812 = vmul.f32 %v2768, %v2781
        %v2813 = vmul.f32 %v2769, %v2781
        %v2814 = vmul.f32 %v2770, %v2781
        %v2815 = vmul.f32 %v2771, %v2781
        %v2816 = vmul.f32 %v2772, %v2781
        %v2817 = vmul.f32 %v2773, %v2781
        %v2818 = vmul.f32 %v2774, %v2781
        %v2819 = vmul.f32 %v2775, %v2781
        %v2820 = vmul.f32 %v2776, %v2781
        %v2821 = vmul.f32 %v2777, %v2781
        %v2822 = vmul.f32 %v2778, %v2781
        %v2823 = vmul.f32 %v2779, %v2781
        %v2825 = vperm.slane %v374, 0
        %v2827 = vadd.f32 %v2783, %v2825
        %v2828 = vadd.f32 %v2784, %v2825
        %v2829 = vadd.f32 %v2785, %v2825
        %v2830 = vadd.f32 %v2786, %v2825
        %v2831 = vadd.f32 %v2787, %v2825
        %v2832 = vadd.f32 %v2788, %v2825
        %v2833 = vadd.f32 %v2789, %v2825
        %v2834 = vadd.f32 %v2790, %v2825
        %v2835 = vadd.f32 %v2791, %v2825
        %v2836 = vadd.f32 %v2792, %v2825
        %v2837 = vadd.f32 %v2793, %v2825
        %v2838 = vadd.f32 %v2794, %v2825
        %v2839 = vadd.f32 %v2795, %v2825
        %v2840 = vadd.f32 %v2796, %v2825
        %v2841 = vadd.f32 %v2797, %v2825
        %v2842 = vadd.f32 %v2798, %v2825
        %v2843 = vadd.f32 %v2799, %v2825
        %v2844 = vadd.f32 %v2800, %v2825
        %v2845 = vadd.f32 %v2801, %v2825
        %v2846 = vadd.f32 %v2802, %v2825
        %v2847 = vadd.f32 %v2803, %v2825
        %v2848 = vadd.f32 %v2804, %v2825
        %v2849 = vadd.f32 %v2805, %v2825
        %v2850 = vadd.f32 %v2806, %v2825
        %v2851 = vadd.f32 %v2807, %v2825
        %v2852 = vadd.f32 %v2808, %v2825
        %v2853 = vadd.f32 %v2809, %v2825
        %v2854 = vadd.f32 %v2810, %v2825
        %v2855 = vadd.f32 %v2811, %v2825
        %v2856 = vadd.f32 %v2812, %v2825
        %v2857 = vadd.f32 %v2813, %v2825
        %v2858 = vadd.f32 %v2814, %v2825
        %v2859 = vadd.f32 %v2815, %v2825
        %v2860 = vadd.f32 %v2816, %v2825
        %v2861 = vadd.f32 %v2817, %v2825
        %v2862 = vadd.f32 %v2818, %v2825
        %v2863 = vadd.f32 %v2819, %v2825
        %v2864 = vadd.f32 %v2820, %v2825
        %v2865 = vadd.f32 %v2821, %v2825
        %v2866 = vadd.f32 %v2822, %v2825
        %v2867 = vadd.f32 %v2823, %v2825
        %v2868 = vmax.f32 %v2827, 0.0
        %v2869 = vmax.f32 %v2828, 0.0
        %v2870 = vmax.f32 %v2829, 0.0
        %v2871 = vmax.f32 %v2830, 0.0
        %v2872 = vmax.f32 %v2831, 0.0
        %v2873 = vmax.f32 %v2832, 0.0
        %v2874 = vmax.f32 %v2833, 0.0
        %v2875 = vmax.f32 %v2834, 0.0
        %v2876 = vmax.f32 %v2835, 0.0
        %v2877 = vmax.f32 %v2836, 0.0
        %v2878 = vmax.f32 %v2837, 0.0
        %v2879 = vmax.f32 %v2838, 0.0
        %v2880 = vmax.f32 %v2839, 0.0
        %v2881 = vmax.f32 %v2840, 0.0
        %v2882 = vmax.f32 %v2841, 0.0
        %v2883 = vmax.f32 %v2842, 0.0
        %v2884 = vmax.f32 %v2843, 0.0
        %v2885 = vmax.f32 %v2844, 0.0
        %v2886 = vmax.f32 %v2845, 0.0
        %v2887 = vmax.f32 %v2846, 0.0
        %v2888 = vmax.f32 %v2847, 0.0
        %v2889 = vmax.f32 %v2848, 0.0
        %v2890 = vmax.f32 %v2849, 0.0
        %v2891 = vmax.f32 %v2850, 0.0
        %v2892 = vmax.f32 %v2851, 0.0
        %v2893 = vmax.f32 %v2852, 0.0
        %v2894 = vmax.f32 %v2853, 0.0
        %v2895 = vmax.f32 %v2854, 0.0
        %v2896 = vmax.f32 %v2855, 0.0
        %v2897 = vmax.f32 %v2856, 0.0
        %v2898 = vmax.f32 %v2857, 0.0
        %v2899 = vmax.f32 %v2858, 0.0
        %v2900 = vmax.f32 %v2859, 0.0
        %v2901 = vmax.f32 %v2860, 0.0
        %v2902 = vmax.f32 %v2861, 0.0
        %v2903 = vmax.f32 %v2862, 0.0
        %v2904 = vmax.f32 %v2863, 0.0
        %v2905 = vmax.f32 %v2864, 0.0
        %v2906 = vmax.f32 %v2865, 0.0
        %v2907 = vmax.f32 %v2866, 0.0
        %v2908 = vmax.f32 %v2867, 0.0
        %v2909 = vrot.slane %v2868, 5
        %v2910 = vrot.slane %v2869, 5
        %v2911 = vrot.slane %v2870, 5
        %v2912 = vrot.slane %v2871, 5
        %v2913 = vrot.slane %v2872, 5
        %v2914 = vrot.slane %v2873, 5
        %v2915 = vrot.slane %v2874, 5
        %v2916 = vrot.slane %v2875, 5
        %v2917 = vrot.slane %v2876, 5
        %v2918 = vrot.slane %v2877, 5
        %v2919 = vrot.slane %v2878, 5
        %v2920 = vrot.slane %v2879, 5
        %v2921 = vrot.slane %v2880, 5
        %v2922 = vrot.slane %v2881, 5
        %v2923 = vrot.slane %v2882, 5
        %v2924 = vrot.slane %v2883, 5
        %v2925 = vrot.slane %v2884, 5
        %v2926 = vrot.slane %v2885, 5
        %v2927 = vrot.slane %v2886, 5
        %v2928 = vrot.slane %v2887, 5
        %v2929 = vrot.slane %v2888, 5
        %v2930 = vrot.slane %v2889, 5
        %v2931 = vrot.slane %v2890, 5
        %v2932 = vrot.slane %v2891, 5
        %v2933 = vrot.slane %v2892, 5
        %v2934 = vrot.slane %v2893, 5
        %v2935 = vrot.slane %v2894, 5
        %v2936 = vrot.slane %v2895, 5
        %v2937 = vrot.slane %v2896, 5
        %v2938 = vrot.slane %v2897, 5
        %v2939 = vrot.slane %v2898, 5
        %v2940 = vrot.slane %v2899, 5
        %v2941 = vrot.slane %v2900, 5
        %v2942 = vrot.slane %v2901, 5
        %v2943 = vrot.slane %v2902, 5
        %v2944 = vrot.slane %v2903, 5
        %v2945 = vrot.slane %v2904, 5
        %v2946 = vrot.slane %v2905, 5
        %v2947 = vrot.slane %v2906, 5
        %v2948 = vrot.slane %v2907, 5
        %v2949 = vrot.slane %v2908, 5
        %v2950 = vsel %vm2416, %v2948, %v2949
        %v2951 = vsel %vm2416, %v2947, %v2948
        %v2952 = vsel %vm2416, %v2946, %v2947
        %v2953 = vsel %vm2416, %v2945, %v2946
        %v2954 = vsel %vm2416, %v2944, %v2945
        %v2955 = vsel %vm2416, %v2943, %v2944
        %v2956 = vsel %vm2416, %v2942, %v2943
        %v2957 = vsel %vm2416, %v2941, %v2942
        %v2958 = vsel %vm2416, %v2940, %v2941
        %v2959 = vsel %vm2416, %v2939, %v2940
        %v2960 = vsel %vm2416, %v2938, %v2939
        %v2961 = vsel %vm2416, %v2937, %v2938
        %v2962 = vsel %vm2416, %v2936, %v2937
        %v2963 = vsel %vm2416, %v2935, %v2936
        %v2964 = vsel %vm2416, %v2934, %v2935
        %v2965 = vsel %vm2416, %v2933, %v2934
        %v2966 = vsel %vm2416, %v2932, %v2933
        %v2967 = vsel %vm2416, %v2931, %v2932
        %v2968 = vsel %vm2416, %v2930, %v2931
        %v2969 = vsel %vm2416, %v2929, %v2930
        %v2970 = vsel %vm2416, %v2928, %v2929
        %v2971 = vsel %vm2416, %v2927, %v2928
        %v2972 = vsel %vm2416, %v2926, %v2927
        %v2973 = vsel %vm2416, %v2925, %v2926
        %v2974 = vsel %vm2416, %v2924, %v2925
        %v2975 = vsel %vm2416, %v2923, %v2924
        %v2976 = vsel %vm2416, %v2922, %v2923
        %v2977 = vsel %vm2416, %v2921, %v2922
        %v2978 = vsel %vm2416, %v2920, %v2921
        %v2979 = vsel %vm2416, %v2919, %v2920
        %v2980 = vsel %vm2416, %v2918, %v2919
        %v2981 = vsel %vm2416, %v2917, %v2918
        %v2982 = vsel %vm2416, %v2916, %v2917
        %v2983 = vsel %vm2416, %v2915, %v2916
        %v2984 = vsel %vm2416, %v2914, %v2915
        %v2985 = vsel %vm2416, %v2913, %v2914
        %v2986 = vsel %vm2416, %v2912, %v2913
        %v2987 = vsel %vm2416, %v2911, %v2912
        %v2988 = vsel %vm2416, %v2910, %v2911
        %v2989 = vsel %vm2416, %v2909, %v2910
        %v2990 = vsel %vm2416, %v2949, %v2909
        %2992 = vset.pattern.permute.xlu0 0
        %2993 = vperm.xlu0 %2992, %v376
        %v2994 = vpop.permute.xlu0 %2993
        %2997 = vset.pattern.permute.xlu0 0
        %2998 = vperm.xlu0 %2997, %v377
        %v2999 = vpop.permute.xlu0 %2998
        %3002 = vset.pattern.permute.xlu0 0
        %3003 = vperm.xlu0 %3002, %v378
        %v3004 = vpop.permute.xlu0 %3003
        %3007 = vset.pattern.permute.xlu0 0
        %3008 = vperm.xlu0 %3007, %v379
        %v3009 = vpop.permute.xlu0 %3008
        %3012 = vset.pattern.permute.xlu0 0
        %3013 = vperm.xlu0 %3012, %v380
        %v3014 = vpop.permute.xlu0 %3013
        %3017 = vset.pattern.permute.xlu0 0
        %3018 = vperm.xlu0 %3017, %v381
        %v3019 = vpop.permute.xlu0 %3018
        %3022 = vset.pattern.permute.xlu0 0
        %3023 = vperm.xlu0 %3022, %v382
        %v3024 = vpop.permute.xlu0 %3023
        %3027 = vset.pattern.permute.xlu0 0
        %3028 = vperm.xlu0 %3027, %v383
        %v3029 = vpop.permute.xlu0 %3028
        %3032 = vset.pattern.permute.xlu0 0
        %3033 = vperm.xlu0 %3032, %v384
        %v3034 = vpop.permute.xlu0 %3033
        %3037 = vset.pattern.permute.xlu0 0
        %3038 = vperm.xlu0 %3037, %v385
        %v3039 = vpop.permute.xlu0 %3038
        %3042 = vset.pattern.permute.xlu0 0
        %3043 = vperm.xlu0 %3042, %v386
        %v3044 = vpop.permute.xlu0 %3043
        %3047 = vset.pattern.permute.xlu0 0
        %3048 = vperm.xlu0 %3047, %v387
        %v3049 = vpop.permute.xlu0 %3048
        %3052 = vset.pattern.permute.xlu0 0
        %3053 = vperm.xlu0 %3052, %v388
        %v3054 = vpop.permute.xlu0 %3053
        %3057 = vset.pattern.permute.xlu0 0
        %3058 = vperm.xlu0 %3057, %v389
        %v3059 = vpop.permute.xlu0 %3058
        %3062 = vset.pattern.permute.xlu0 0
        %3063 = vperm.xlu0 %3062, %v390
        %v3064 = vpop.permute.xlu0 %3063
        %3067 = vset.pattern.permute.xlu0 0
        %3068 = vperm.xlu0 %3067, %v391
        %v3069 = vpop.permute.xlu0 %3068
        %3072 = vset.pattern.permute.xlu0 0
        %3073 = vperm.xlu0 %3072, %v392
        %v3074 = vpop.permute.xlu0 %3073
        %3077 = vset.pattern.permute.xlu0 0
        %3078 = vperm.xlu0 %3077, %v393
        %v3079 = vpop.permute.xlu0 %3078
        %3082 = vset.pattern.permute.xlu0 0
        %3083 = vperm.xlu0 %3082, %v394
        %v3084 = vpop.permute.xlu0 %3083
        %3087 = vset.pattern.permute.xlu0 0
        %3088 = vperm.xlu0 %3087, %v395
        %v3089 = vpop.permute.xlu0 %3088
        %3092 = vset.pattern.permute.xlu0 0
        %3093 = vperm.xlu0 %3092, %v396
        %v3094 = vpop.permute.xlu0 %3093
        %3097 = vset.pattern.permute.xlu0 0
        %3098 = vperm.xlu0 %3097, %v397
        %v3099 = vpop.permute.xlu0 %3098
        %3102 = vset.pattern.permute.xlu0 0
        %3103 = vperm.xlu0 %3102, %v398
        %v3104 = vpop.permute.xlu0 %3103
        %3107 = vset.pattern.permute.xlu0 0
        %3108 = vperm.xlu0 %3107, %v399
        %v3109 = vpop.permute.xlu0 %3108
        %3112 = vset.pattern.permute.xlu0 0
        %3113 = vperm.xlu0 %3112, %v400
        %v3114 = vpop.permute.xlu0 %3113
        %3117 = vset.pattern.permute.xlu0 0
        %3118 = vperm.xlu0 %3117, %v401
        %v3119 = vpop.permute.xlu0 %3118
        %3122 = vset.pattern.permute.xlu0 0
        %3123 = vperm.xlu0 %3122, %v402
        %v3124 = vpop.permute.xlu0 %3123
        %3127 = vset.pattern.permute.xlu0 0
        %3128 = vperm.xlu0 %3127, %v403
        %v3129 = vpop.permute.xlu0 %3128
        %3132 = vset.pattern.permute.xlu0 0
        %3133 = vperm.xlu0 %3132, %v404
        %v3134 = vpop.permute.xlu0 %3133
        %3137 = vset.pattern.permute.xlu0 0
        %3138 = vperm.xlu0 %3137, %v405
        %v3139 = vpop.permute.xlu0 %3138
        %3142 = vset.pattern.permute.xlu0 0
        %3143 = vperm.xlu0 %3142, %v406
        %v3144 = vpop.permute.xlu0 %3143
        %3147 = vset.pattern.permute.xlu0 0
        %3148 = vperm.xlu0 %3147, %v407
        %v3149 = vpop.permute.xlu0 %3148
        %3152 = vset.pattern.permute.xlu0 0
        %3153 = vperm.xlu0 %3152, %v408
        %v3154 = vpop.permute.xlu0 %3153
        %3157 = vset.pattern.permute.xlu0 0
        %3158 = vperm.xlu0 %3157, %v409
        %v3159 = vpop.permute.xlu0 %3158
        %3162 = vset.pattern.permute.xlu0 0
        %3163 = vperm.xlu0 %3162, %v410
        %v3164 = vpop.permute.xlu0 %3163
        %3167 = vset.pattern.permute.xlu0 0
        %3168 = vperm.xlu0 %3167, %v411
        %v3169 = vpop.permute.xlu0 %3168
        %3172 = vset.pattern.permute.xlu0 0
        %3173 = vperm.xlu0 %3172, %v412
        %v3174 = vpop.permute.xlu0 %3173
        %3177 = vset.pattern.permute.xlu0 0
        %3178 = vperm.xlu0 %3177, %v413
        %v3179 = vpop.permute.xlu0 %3178
        %3182 = vset.pattern.permute.xlu0 0
        %3183 = vperm.xlu0 %3182, %v414
        %v3184 = vpop.permute.xlu0 %3183
        %3187 = vset.pattern.permute.xlu0 0
        %3188 = vperm.xlu0 %3187, %v415
        %v3189 = vpop.permute.xlu0 %3188
        %3192 = vset.pattern.permute.xlu0 0
        %3193 = vperm.xlu0 %3192, %v416
        %v3194 = vpop.permute.xlu0 %3193
        %v3196 = vmul.f32 %v2951, %v2994
        %v3197 = vmul.f32 %v2950, %v2999
        %v3198 = vmul.f32 %v2990, %v3004
        %v3199 = vmul.f32 %v2989, %v3009
        %v3200 = vmul.f32 %v2988, %v3014
        %v3201 = vmul.f32 %v2987, %v3019
        %v3202 = vmul.f32 %v2986, %v3024
        %v3203 = vmul.f32 %v2985, %v3029
        %v3204 = vmul.f32 %v2984, %v3034
        %v3205 = vmul.f32 %v2983, %v3039
        %v3206 = vmul.f32 %v2982, %v3044
        %v3207 = vmul.f32 %v2981, %v3049
        %v3208 = vmul.f32 %v2980, %v3054
        %v3209 = vmul.f32 %v2979, %v3059
        %v3210 = vmul.f32 %v2978, %v3064
        %v3211 = vmul.f32 %v2977, %v3069
        %v3212 = vmul.f32 %v2976, %v3074
        %v3213 = vmul.f32 %v2975, %v3079
        %v3214 = vmul.f32 %v2974, %v3084
        %v3215 = vmul.f32 %v2973, %v3089
        %v3216 = vmul.f32 %v2972, %v3094
        %v3217 = vmul.f32 %v2971, %v3099
        %v3218 = vmul.f32 %v2970, %v3104
        %v3219 = vmul.f32 %v2969, %v3109
        %v3220 = vmul.f32 %v2968, %v3114
        %v3221 = vmul.f32 %v2967, %v3119
        %v3222 = vmul.f32 %v2966, %v3124
        %v3223 = vmul.f32 %v2965, %v3129
        %v3224 = vmul.f32 %v2964, %v3134
        %v3225 = vmul.f32 %v2963, %v3139
        %v3226 = vmul.f32 %v2962, %v3144
        %v3227 = vmul.f32 %v2961, %v3149
        %v3228 = vmul.f32 %v2960, %v3154
        %v3229 = vmul.f32 %v2959, %v3159
        %v3230 = vmul.f32 %v2958, %v3164
        %v3231 = vmul.f32 %v2957, %v3169
        %v3232 = vmul.f32 %v2956, %v3174
        %v3233 = vmul.f32 %v2955, %v3179
        %v3234 = vmul.f32 %v2954, %v3184
        %v3235 = vmul.f32 %v2953, %v3189
        %v3236 = vmul.f32 %v2952, %v3194
        %v3237 = vld [vmem:[#allocation7] sm:$0xff]
        %v3238 = vld [vmem:[#allocation7 + $0x8] sm:$0xff]
        %v3239 = vld [vmem:[#allocation7 + $0x10] sm:$0xff]
        %v3240 = vld [vmem:[#allocation7 + $0x18] sm:$0xff]
        %v3241 = vld [vmem:[#allocation7 + $0x20] sm:$0xff]
        %v3242 = vld [vmem:[#allocation7 + $0x28] sm:$0xff]
        %v3243 = vld [vmem:[#allocation7 + $0x30] sm:$0xff]
        %v3244 = vld [vmem:[#allocation7 + $0x38] sm:$0xff]
        %v3245 = vld [vmem:[#allocation7 + $0x40] sm:$0xff]
        %v3246 = vld [vmem:[#allocation7 + $0x48] sm:$0xff]
        %v3247 = vld [vmem:[#allocation7 + $0x50] sm:$0xff]
        %v3248 = vld [vmem:[#allocation7 + $0x58] sm:$0xff]
        %v3249 = vld [vmem:[#allocation7 + $0x60] sm:$0xff]
        %v3250 = vld [vmem:[#allocation7 + $0x68] sm:$0xff]
        %v3251 = vld [vmem:[#allocation7 + $0x70] sm:$0xff]
        %v3252 = vld [vmem:[#allocation7 + $0x78] sm:$0xff]
        %s3253 = scalar_lea.vmem [#allocation7], 128
        %v3254 = vld [vmem:[%s3253] sm:$0xff]
        %v3255 = vld [vmem:[%s3253 + $0x8] sm:$0xff]
        %v3256 = vld [vmem:[%s3253 + $0x10] sm:$0xff]
        %v3257 = vld [vmem:[%s3253 + $0x18] sm:$0xff]
        %v3258 = vld [vmem:[%s3253 + $0x20] sm:$0xff]
        %v3259 = vld [vmem:[%s3253 + $0x28] sm:$0xff]
        %v3260 = vld [vmem:[%s3253 + $0x30] sm:$0xff]
        %v3261 = vld [vmem:[%s3253 + $0x38] sm:$0xff]
        %v3262 = vld [vmem:[%s3253 + $0x40] sm:$0xff]
        %v3263 = vld [vmem:[%s3253 + $0x48] sm:$0xff]
        %v3264 = vld [vmem:[%s3253 + $0x50] sm:$0xff]
        %v3265 = vld [vmem:[%s3253 + $0x58] sm:$0xff]
        %v3266 = vld [vmem:[%s3253 + $0x60] sm:$0xff]
        %v3267 = vld [vmem:[%s3253 + $0x68] sm:$0xff]
        %v3268 = vld [vmem:[%s3253 + $0x70] sm:$0xff]
        %v3269 = vld [vmem:[%s3253 + $0x78] sm:$0xff]
        %3270 = vmatpush.msra.mxu0 %v3269
        %3271 = vmatpush.msra.mxu0 %v3268
        %3272 = vmatpush.msra.mxu0 %v3267
        %3273 = vmatpush.msra.mxu0 %v3266
        %3274 = vmatpush.msra.mxu0 %v3265
        %3275 = vmatpush.msra.mxu0 %v3264
        %3276 = vmatpush.msra.mxu0 %v3263
        %3277 = vmatpush.msra.mxu0 %v3262
        %3278 = vmatpush.msra.mxu0 %v3261
        %3279 = vmatpush.msra.mxu0 %v3260
        %3280 = vmatpush.msra.mxu0 %v3259
        %3281 = vmatpush.msra.mxu0 %v3258
        %3282 = vmatpush.msra.mxu0 %v3257
        %3283 = vmatpush.msra.mxu0 %v3256
        %3284 = vmatpush.msra.mxu0 %v3255
        %3285 = vmatpush.msra.mxu0 %v3254
        %3286 = vmatmul.f32.gmra.mxu0 %v3196
        %v3287 = vpop.f32.mrf.mxu0
        %v3288 = vadd.f32 0.0, %v3287
        %3289 = vmatmul.f32.gmra.mxu0 %v3197
        %v3290 = vpop.f32.mrf.mxu0
        %v3291 = vadd.f32 0.0, %v3290
        %3292 = vmatmul.f32.gmra.mxu0 %v3198
        %v3293 = vpop.f32.mrf.mxu0
        %v3294 = vadd.f32 0.0, %v3293
        %3295 = vmatmul.f32.gmra.mxu0 %v3199
        %v3296 = vpop.f32.mrf.mxu0
        %v3297 = vadd.f32 0.0, %v3296
        %3298 = vmatmul.f32.gmra.mxu0 %v3200
        %v3299 = vpop.f32.mrf.mxu0
        %v3300 = vadd.f32 0.0, %v3299
        %3301 = vmatmul.f32.gmra.mxu0 %v3201
        %v3302 = vpop.f32.mrf.mxu0
        %v3303 = vadd.f32 0.0, %v3302
        %3304 = vmatmul.f32.gmra.mxu0 %v3202
        %v3305 = vpop.f32.mrf.mxu0
        %v3306 = vadd.f32 0.0, %v3305
        %3307 = vmatmul.f32.gmra.mxu0 %v3203
        %v3308 = vpop.f32.mrf.mxu0
        %v3309 = vadd.f32 0.0, %v3308
        %3310 = vmatmul.f32.gmra.mxu0 %v3204
        %v3311 = vpop.f32.mrf.mxu0
        %v3312 = vadd.f32 0.0, %v3311
        %3313 = vmatmul.f32.gmra.mxu0 %v3205
        %v3314 = vpop.f32.mrf.mxu0
        %v3315 = vadd.f32 0.0, %v3314
        %3316 = vmatmul.f32.gmra.mxu0 %v3206
        %v3317 = vpop.f32.mrf.mxu0
        %v3318 = vadd.f32 0.0, %v3317
        %3319 = vmatmul.f32.gmra.mxu0 %v3207
        %v3320 = vpop.f32.mrf.mxu0
        %v3321 = vadd.f32 0.0, %v3320
        %3322 = vmatmul.f32.gmra.mxu0 %v3208
        %v3323 = vpop.f32.mrf.mxu0
        %v3324 = vadd.f32 0.0, %v3323
        %3325 = vmatmul.f32.gmra.mxu0 %v3209
        %v3326 = vpop.f32.mrf.mxu0
        %v3327 = vadd.f32 0.0, %v3326
        %3328 = vmatmul.f32.gmra.mxu0 %v3210
        %v3329 = vpop.f32.mrf.mxu0
        %v3330 = vadd.f32 0.0, %v3329
        %3331 = vmatmul.f32.gmra.mxu0 %v3211
        %v3332 = vpop.f32.mrf.mxu0
        %v3333 = vadd.f32 0.0, %v3332
        %3334 = vmatmul.f32.gmra.mxu0 %v3212
        %v3335 = vpop.f32.mrf.mxu0
        %v3336 = vadd.f32 0.0, %v3335
        %3337 = vmatmul.f32.gmra.mxu0 %v3213
        %v3338 = vpop.f32.mrf.mxu0
        %v3339 = vadd.f32 0.0, %v3338
        %3340 = vmatmul.f32.gmra.mxu0 %v3214
        %v3341 = vpop.f32.mrf.mxu0
        %v3342 = vadd.f32 0.0, %v3341
        %3343 = vmatmul.f32.gmra.mxu0 %v3215
        %v3344 = vpop.f32.mrf.mxu0
        %v3345 = vadd.f32 0.0, %v3344
        %3346 = vmatmul.f32.gmra.mxu0 %v3216
        %v3347 = vpop.f32.mrf.mxu0
        %v3348 = vadd.f32 0.0, %v3347
        %3349 = vmatmul.f32.gmra.mxu0 %v3217
        %v3350 = vpop.f32.mrf.mxu0
        %v3351 = vadd.f32 0.0, %v3350
        %3352 = vmatmul.f32.gmra.mxu0 %v3218
        %v3353 = vpop.f32.mrf.mxu0
        %v3354 = vadd.f32 0.0, %v3353
        %3355 = vmatmul.f32.gmra.mxu0 %v3219
        %v3356 = vpop.f32.mrf.mxu0
        %v3357 = vadd.f32 0.0, %v3356
        %3358 = vmatmul.f32.gmra.mxu0 %v3220
        %v3359 = vpop.f32.mrf.mxu0
        %v3360 = vadd.f32 0.0, %v3359
        %3361 = vmatmul.f32.gmra.mxu0 %v3221
        %v3362 = vpop.f32.mrf.mxu0
        %v3363 = vadd.f32 0.0, %v3362
        %3364 = vmatmul.f32.gmra.mxu0 %v3222
        %v3365 = vpop.f32.mrf.mxu0
        %v3366 = vadd.f32 0.0, %v3365
        %3367 = vmatmul.f32.gmra.mxu0 %v3223
        %v3368 = vpop.f32.mrf.mxu0
        %v3369 = vadd.f32 0.0, %v3368
        %3370 = vmatmul.f32.gmra.mxu0 %v3224
        %v3371 = vpop.f32.mrf.mxu0
        %v3372 = vadd.f32 0.0, %v3371
        %3373 = vmatmul.f32.gmra.mxu0 %v3225
        %v3374 = vpop.f32.mrf.mxu0
        %v3375 = vadd.f32 0.0, %v3374
        %3376 = vmatmul.f32.gmra.mxu0 %v3226
        %v3377 = vpop.f32.mrf.mxu0
        %v3378 = vadd.f32 0.0, %v3377
        %3379 = vmatmul.f32.gmra.mxu0 %v3227
        %v3380 = vpop.f32.mrf.mxu0
        %v3381 = vadd.f32 0.0, %v3380
        %3382 = vmatmul.f32.gmra.mxu0 %v3228
        %v3383 = vpop.f32.mrf.mxu0
        %v3384 = vadd.f32 0.0, %v3383
        %3385 = vmatmul.f32.gmra.mxu0 %v3229
        %v3386 = vpop.f32.mrf.mxu0
        %v3387 = vadd.f32 0.0, %v3386
        %3388 = vmatmul.f32.gmra.mxu0 %v3230
        %v3389 = vpop.f32.mrf.mxu0
        %v3390 = vadd.f32 0.0, %v3389
        %3391 = vmatmul.f32.gmra.mxu0 %v3231
        %v3392 = vpop.f32.mrf.mxu0
        %v3393 = vadd.f32 0.0, %v3392
        %3394 = vmatmul.f32.gmra.mxu0 %v3232
        %v3395 = vpop.f32.mrf.mxu0
        %v3396 = vadd.f32 0.0, %v3395
        %3397 = vmatmul.f32.gmra.mxu0 %v3233
        %v3398 = vpop.f32.mrf.mxu0
        %v3399 = vadd.f32 0.0, %v3398
        %3400 = vmatmul.f32.gmra.mxu0 %v3234
        %v3401 = vpop.f32.mrf.mxu0
        %v3402 = vadd.f32 0.0, %v3401
        %3403 = vmatmul.f32.gmra.mxu0 %v3235
        %v3404 = vpop.f32.mrf.mxu0
        %v3405 = vadd.f32 0.0, %v3404
        %3406 = vmatmul.f32.gmra.mxu0 %v3236
        %v3407 = vpop.f32.mrf.mxu0
        %v3408 = vadd.f32 0.0, %v3407
        %3409 = vdwg.mxu0
        %v3410 = vrot.slane %v3288, 1
        %v3411 = vrot.slane %v3291, 1
        %v3412 = vrot.slane %v3294, 1
        %v3413 = vrot.slane %v3297, 1
        %v3414 = vrot.slane %v3300, 1
        %v3415 = vrot.slane %v3303, 1
        %v3416 = vrot.slane %v3306, 1
        %v3417 = vrot.slane %v3309, 1
        %v3418 = vrot.slane %v3312, 1
        %v3419 = vrot.slane %v3315, 1
        %v3420 = vrot.slane %v3318, 1
        %v3421 = vrot.slane %v3321, 1
        %v3422 = vrot.slane %v3324, 1
        %v3423 = vrot.slane %v3327, 1
        %v3424 = vrot.slane %v3330, 1
        %v3425 = vrot.slane %v3333, 1
        %v3426 = vrot.slane %v3336, 1
        %v3427 = vrot.slane %v3339, 1
        %v3428 = vrot.slane %v3342, 1
        %v3429 = vrot.slane %v3345, 1
        %v3430 = vrot.slane %v3348, 1
        %v3431 = vrot.slane %v3351, 1
        %v3432 = vrot.slane %v3354, 1
        %v3433 = vrot.slane %v3357, 1
        %v3434 = vrot.slane %v3360, 1
        %v3435 = vrot.slane %v3363, 1
        %v3436 = vrot.slane %v3366, 1
        %v3437 = vrot.slane %v3369, 1
        %v3438 = vrot.slane %v3372, 1
        %v3439 = vrot.slane %v3375, 1
        %v3440 = vrot.slane %v3378, 1
        %v3441 = vrot.slane %v3381, 1
        %v3442 = vrot.slane %v3384, 1
        %v3443 = vrot.slane %v3387, 1
        %v3444 = vrot.slane %v3390, 1
        %v3445 = vrot.slane %v3393, 1
        %v3446 = vrot.slane %v3396, 1
        %v3447 = vrot.slane %v3399, 1
        %v3448 = vrot.slane %v3402, 1
        %v3449 = vrot.slane %v3405, 1
        %v3450 = vrot.slane %v3408, 1
        %v3451 = vsel %vm633, %v3449, %v3450
        %v3452 = vsel %vm633, %v3448, %v3449
        %v3453 = vsel %vm633, %v3447, %v3448
        %v3454 = vsel %vm633, %v3446, %v3447
        %v3455 = vsel %vm633, %v3445, %v3446
        %v3456 = vsel %vm633, %v3444, %v3445
        %v3457 = vsel %vm633, %v3443, %v3444
        %v3458 = vsel %vm633, %v3442, %v3443
        %v3459 = vsel %vm633, %v3441, %v3442
        %v3460 = vsel %vm633, %v3440, %v3441
        %v3461 = vsel %vm633, %v3439, %v3440
        %v3462 = vsel %vm633, %v3438, %v3439
        %v3463 = vsel %vm633, %v3437, %v3438
        %v3464 = vsel %vm633, %v3436, %v3437
        %v3465 = vsel %vm633, %v3435, %v3436
        %v3466 = vsel %vm633, %v3434, %v3435
        %v3467 = vsel %vm633, %v3433, %v3434
        %v3468 = vsel %vm633, %v3432, %v3433
        %v3469 = vsel %vm633, %v3431, %v3432
        %v3470 = vsel %vm633, %v3430, %v3431
        %v3471 = vsel %vm633, %v3429, %v3430
        %v3472 = vsel %vm633, %v3428, %v3429
        %v3473 = vsel %vm633, %v3427, %v3428
        %v3474 = vsel %vm633, %v3426, %v3427
        %v3475 = vsel %vm633, %v3425, %v3426
        %v3476 = vsel %vm633, %v3424, %v3425
        %v3477 = vsel %vm633, %v3423, %v3424
        %v3478 = vsel %vm633, %v3422, %v3423
        %v3479 = vsel %vm633, %v3421, %v3422
        %v3480 = vsel %vm633, %v3420, %v3421
        %v3481 = vsel %vm633, %v3419, %v3420
        %v3482 = vsel %vm633, %v3418, %v3419
        %v3483 = vsel %vm633, %v3417, %v3418
        %v3484 = vsel %vm633, %v3416, %v3417
        %v3485 = vsel %vm633, %v3415, %v3416
        %v3486 = vsel %vm633, %v3414, %v3415
        %v3487 = vsel %vm633, %v3413, %v3414
        %v3488 = vsel %vm633, %v3412, %v3413
        %v3489 = vsel %vm633, %v3411, %v3412
        %v3490 = vsel %vm633, %v3410, %v3411
        %v3491 = vsel %vm633, %v3450, %v3410
        %3492 = vmatpush.msra.mxu0 %v3252
        %3493 = vmatpush.msra.mxu0 %v3251
        %3494 = vmatpush.msra.mxu0 %v3250
        %3495 = vmatpush.msra.mxu0 %v3249
        %3496 = vmatpush.msra.mxu0 %v3248
        %3497 = vmatpush.msra.mxu0 %v3247
        %3498 = vmatpush.msra.mxu0 %v3246
        %3499 = vmatpush.msra.mxu0 %v3245
        %3500 = vmatpush.msra.mxu0 %v3244
        %3501 = vmatpush.msra.mxu0 %v3243
        %3502 = vmatpush.msra.mxu0 %v3242
        %3503 = vmatpush.msra.mxu0 %v3241
        %3504 = vmatpush.msra.mxu0 %v3240
        %3505 = vmatpush.msra.mxu0 %v3239
        %3506 = vmatpush.msra.mxu0 %v3238
        %3507 = vmatpush.msra.mxu0 %v3237
        %3508 = vmatmul.f32.gmra.mxu0 %v3196
        %v3509 = vpop.f32.mrf.mxu0
        %v3510 = vadd.f32 %v3490, %v3509
        %3511 = vmatmul.f32.gmra.mxu0 %v3197
        %v3512 = vpop.f32.mrf.mxu0
        %v3513 = vadd.f32 %v3489, %v3512
        %3514 = vmatmul.f32.gmra.mxu0 %v3198
        %v3515 = vpop.f32.mrf.mxu0
        %v3516 = vadd.f32 %v3488, %v3515
        %3517 = vmatmul.f32.gmra.mxu0 %v3199
        %v3518 = vpop.f32.mrf.mxu0
        %v3519 = vadd.f32 %v3487, %v3518
        %3520 = vmatmul.f32.gmra.mxu0 %v3200
        %v3521 = vpop.f32.mrf.mxu0
        %v3522 = vadd.f32 %v3486, %v3521
        %3523 = vmatmul.f32.gmra.mxu0 %v3201
        %v3524 = vpop.f32.mrf.mxu0
        %v3525 = vadd.f32 %v3485, %v3524
        %3526 = vmatmul.f32.gmra.mxu0 %v3202
        %v3527 = vpop.f32.mrf.mxu0
        %v3528 = vadd.f32 %v3484, %v3527
        %3529 = vmatmul.f32.gmra.mxu0 %v3203
        %v3530 = vpop.f32.mrf.mxu0
        %v3531 = vadd.f32 %v3483, %v3530
        %3532 = vmatmul.f32.gmra.mxu0 %v3204
        %v3533 = vpop.f32.mrf.mxu0
        %v3534 = vadd.f32 %v3482, %v3533
        %3535 = vmatmul.f32.gmra.mxu0 %v3205
        %v3536 = vpop.f32.mrf.mxu0
        %v3537 = vadd.f32 %v3481, %v3536
        %3538 = vmatmul.f32.gmra.mxu0 %v3206
        %v3539 = vpop.f32.mrf.mxu0
        %v3540 = vadd.f32 %v3480, %v3539
        %3541 = vmatmul.f32.gmra.mxu0 %v3207
        %v3542 = vpop.f32.mrf.mxu0
        %v3543 = vadd.f32 %v3479, %v3542
        %3544 = vmatmul.f32.gmra.mxu0 %v3208
        %v3545 = vpop.f32.mrf.mxu0
        %v3546 = vadd.f32 %v3478, %v3545
        %3547 = vmatmul.f32.gmra.mxu0 %v3209
        %v3548 = vpop.f32.mrf.mxu0
        %v3549 = vadd.f32 %v3477, %v3548
        %3550 = vmatmul.f32.gmra.mxu0 %v3210
        %v3551 = vpop.f32.mrf.mxu0
        %v3552 = vadd.f32 %v3476, %v3551
        %3553 = vmatmul.f32.gmra.mxu0 %v3211
        %v3554 = vpop.f32.mrf.mxu0
        %v3555 = vadd.f32 %v3475, %v3554
        %3556 = vmatmul.f32.gmra.mxu0 %v3212
        %v3557 = vpop.f32.mrf.mxu0
        %v3558 = vadd.f32 %v3474, %v3557
        %3559 = vmatmul.f32.gmra.mxu0 %v3213
        %v3560 = vpop.f32.mrf.mxu0
        %v3561 = vadd.f32 %v3473, %v3560
        %3562 = vmatmul.f32.gmra.mxu0 %v3214
        %v3563 = vpop.f32.mrf.mxu0
        %v3564 = vadd.f32 %v3472, %v3563
        %3565 = vmatmul.f32.gmra.mxu0 %v3215
        %v3566 = vpop.f32.mrf.mxu0
        %v3567 = vadd.f32 %v3471, %v3566
        %3568 = vmatmul.f32.gmra.mxu0 %v3216
        %v3569 = vpop.f32.mrf.mxu0
        %v3570 = vadd.f32 %v3470, %v3569
        %3571 = vmatmul.f32.gmra.mxu0 %v3217
        %v3572 = vpop.f32.mrf.mxu0
        %v3573 = vadd.f32 %v3469, %v3572
        %3574 = vmatmul.f32.gmra.mxu0 %v3218
        %v3575 = vpop.f32.mrf.mxu0
        %v3576 = vadd.f32 %v3468, %v3575
        %3577 = vmatmul.f32.gmra.mxu0 %v3219
        %v3578 = vpop.f32.mrf.mxu0
        %v3579 = vadd.f32 %v3467, %v3578
        %3580 = vmatmul.f32.gmra.mxu0 %v3220
        %v3581 = vpop.f32.mrf.mxu0
        %v3582 = vadd.f32 %v3466, %v3581
        %3583 = vmatmul.f32.gmra.mxu0 %v3221
        %v3584 = vpop.f32.mrf.mxu0
        %v3585 = vadd.f32 %v3465, %v3584
        %3586 = vmatmul.f32.gmra.mxu0 %v3222
        %v3587 = vpop.f32.mrf.mxu0
        %v3588 = vadd.f32 %v3464, %v3587
        %3589 = vmatmul.f32.gmra.mxu0 %v3223
        %v3590 = vpop.f32.mrf.mxu0
        %v3591 = vadd.f32 %v3463, %v3590
        %3592 = vmatmul.f32.gmra.mxu0 %v3224
        %v3593 = vpop.f32.mrf.mxu0
        %v3594 = vadd.f32 %v3462, %v3593
        %3595 = vmatmul.f32.gmra.mxu0 %v3225
        %v3596 = vpop.f32.mrf.mxu0
        %v3597 = vadd.f32 %v3461, %v3596
        %3598 = vmatmul.f32.gmra.mxu0 %v3226
        %v3599 = vpop.f32.mrf.mxu0
        %v3600 = vadd.f32 %v3460, %v3599
        %3601 = vmatmul.f32.gmra.mxu0 %v3227
        %v3602 = vpop.f32.mrf.mxu0
        %v3603 = vadd.f32 %v3459, %v3602
        %3604 = vmatmul.f32.gmra.mxu0 %v3228
        %v3605 = vpop.f32.mrf.mxu0
        %v3606 = vadd.f32 %v3458, %v3605
        %3607 = vmatmul.f32.gmra.mxu0 %v3229
        %v3608 = vpop.f32.mrf.mxu0
        %v3609 = vadd.f32 %v3457, %v3608
        %3610 = vmatmul.f32.gmra.mxu0 %v3230
        %v3611 = vpop.f32.mrf.mxu0
        %v3612 = vadd.f32 %v3456, %v3611
        %3613 = vmatmul.f32.gmra.mxu0 %v3231
        %v3614 = vpop.f32.mrf.mxu0
        %v3615 = vadd.f32 %v3455, %v3614
        %3616 = vmatmul.f32.gmra.mxu0 %v3232
        %v3617 = vpop.f32.mrf.mxu0
        %v3618 = vadd.f32 %v3454, %v3617
        %3619 = vmatmul.f32.gmra.mxu0 %v3233
        %v3620 = vpop.f32.mrf.mxu0
        %v3621 = vadd.f32 %v3453, %v3620
        %3622 = vmatmul.f32.gmra.mxu0 %v3234
        %v3623 = vpop.f32.mrf.mxu0
        %v3624 = vadd.f32 %v3452, %v3623
        %3625 = vmatmul.f32.gmra.mxu0 %v3235
        %v3626 = vpop.f32.mrf.mxu0
        %v3627 = vadd.f32 %v3451, %v3626
        %3628 = vmatmul.f32.gmra.mxu0 %v3236
        %v3629 = vpop.f32.mrf.mxu0
        %v3630 = vadd.f32 %v3491, %v3629
        %3631 = vdwg.mxu0
        %s3632 = scalar_lea.vmem [#allocation7], 256
        %v3633 = vld [vmem:[%s3632] sm:$0xff]
        %v3634 = vld [vmem:[%s3632 + $0x8] sm:$0xff]
        %v3635 = vld [vmem:[%s3632 + $0x10] sm:$0xff]
        %v3636 = vld [vmem:[%s3632 + $0x18] sm:$0xff]
        %v3637 = vld [vmem:[%s3632 + $0x20] sm:$0xff]
        %v3638 = vld [vmem:[%s3632 + $0x28] sm:$0xff]
        %v3639 = vld [vmem:[%s3632 + $0x30] sm:$0xff]
        %v3640 = vld [vmem:[%s3632 + $0x38] sm:$0xff]
        %v3641 = vld [vmem:[%s3632 + $0x40] sm:$0xff]
        %v3642 = vld [vmem:[%s3632 + $0x48] sm:$0xff]
        %v3643 = vld [vmem:[%s3632 + $0x50] sm:$0xff]
        %v3644 = vld [vmem:[%s3632 + $0x58] sm:$0xff]
        %v3645 = vld [vmem:[%s3632 + $0x60] sm:$0xff]
        %v3646 = vld [vmem:[%s3632 + $0x68] sm:$0xff]
        %v3647 = vld [vmem:[%s3632 + $0x70] sm:$0xff]
        %v3648 = vld [vmem:[%s3632 + $0x78] sm:$0xff]
        %3649 = vmatpush.msra.mxu0 %v3648
        %3650 = vmatpush.msra.mxu0 %v3647
        %3651 = vmatpush.msra.mxu0 %v3646
        %3652 = vmatpush.msra.mxu0 %v3645
        %3653 = vmatpush.msra.mxu0 %v3644
        %3654 = vmatpush.msra.mxu0 %v3643
        %3655 = vmatpush.msra.mxu0 %v3642
        %3656 = vmatpush.msra.mxu0 %v3641
        %3657 = vmatpush.msra.mxu0 %v3640
        %3658 = vmatpush.msra.mxu0 %v3639
        %3659 = vmatpush.msra.mxu0 %v3638
        %3660 = vmatpush.msra.mxu0 %v3637
        %3661 = vmatpush.msra.mxu0 %v3636
        %3662 = vmatpush.msra.mxu0 %v3635
        %3663 = vmatpush.msra.mxu0 %v3634
        %3664 = vmatpush.msra.mxu0 %v3633
        %3665 = vmatmul.f32.gmra.mxu0 %v3196
        %v3666 = vpop.f32.mrf.mxu0
        %v3667 = vadd.f32 0.0, %v3666
        %3668 = vmatmul.f32.gmra.mxu0 %v3197
        %v3669 = vpop.f32.mrf.mxu0
        %v3670 = vadd.f32 0.0, %v3669
        %3671 = vmatmul.f32.gmra.mxu0 %v3198
        %v3672 = vpop.f32.mrf.mxu0
        %v3673 = vadd.f32 0.0, %v3672
        %3674 = vmatmul.f32.gmra.mxu0 %v3199
        %v3675 = vpop.f32.mrf.mxu0
        %v3676 = vadd.f32 0.0, %v3675
        %3677 = vmatmul.f32.gmra.mxu0 %v3200
        %v3678 = vpop.f32.mrf.mxu0
        %v3679 = vadd.f32 0.0, %v3678
        %3680 = vmatmul.f32.gmra.mxu0 %v3201
        %v3681 = vpop.f32.mrf.mxu0
        %v3682 = vadd.f32 0.0, %v3681
        %3683 = vmatmul.f32.gmra.mxu0 %v3202
        %v3684 = vpop.f32.mrf.mxu0
        %v3685 = vadd.f32 0.0, %v3684
        %3686 = vmatmul.f32.gmra.mxu0 %v3203
        %v3687 = vpop.f32.mrf.mxu0
        %v3688 = vadd.f32 0.0, %v3687
        %3689 = vmatmul.f32.gmra.mxu0 %v3204
        %v3690 = vpop.f32.mrf.mxu0
        %v3691 = vadd.f32 0.0, %v3690
        %3692 = vmatmul.f32.gmra.mxu0 %v3205
        %v3693 = vpop.f32.mrf.mxu0
        %v3694 = vadd.f32 0.0, %v3693
        %3695 = vmatmul.f32.gmra.mxu0 %v3206
        %v3696 = vpop.f32.mrf.mxu0
        %v3697 = vadd.f32 0.0, %v3696
        %3698 = vmatmul.f32.gmra.mxu0 %v3207
        %v3699 = vpop.f32.mrf.mxu0
        %v3700 = vadd.f32 0.0, %v3699
        %3701 = vmatmul.f32.gmra.mxu0 %v3208
        %v3702 = vpop.f32.mrf.mxu0
        %v3703 = vadd.f32 0.0, %v3702
        %3704 = vmatmul.f32.gmra.mxu0 %v3209
        %v3705 = vpop.f32.mrf.mxu0
        %v3706 = vadd.f32 0.0, %v3705
        %3707 = vmatmul.f32.gmra.mxu0 %v3210
        %v3708 = vpop.f32.mrf.mxu0
        %v3709 = vadd.f32 0.0, %v3708
        %3710 = vmatmul.f32.gmra.mxu0 %v3211
        %v3711 = vpop.f32.mrf.mxu0
        %v3712 = vadd.f32 0.0, %v3711
        %3713 = vmatmul.f32.gmra.mxu0 %v3212
        %v3714 = vpop.f32.mrf.mxu0
        %v3715 = vadd.f32 0.0, %v3714
        %3716 = vmatmul.f32.gmra.mxu0 %v3213
        %v3717 = vpop.f32.mrf.mxu0
        %v3718 = vadd.f32 0.0, %v3717
        %3719 = vmatmul.f32.gmra.mxu0 %v3214
        %v3720 = vpop.f32.mrf.mxu0
        %v3721 = vadd.f32 0.0, %v3720
        %3722 = vmatmul.f32.gmra.mxu0 %v3215
        %v3723 = vpop.f32.mrf.mxu0
        %v3724 = vadd.f32 0.0, %v3723
        %3725 = vmatmul.f32.gmra.mxu0 %v3216
        %v3726 = vpop.f32.mrf.mxu0
        %v3727 = vadd.f32 0.0, %v3726
        %3728 = vmatmul.f32.gmra.mxu0 %v3217
        %v3729 = vpop.f32.mrf.mxu0
        %v3730 = vadd.f32 0.0, %v3729
        %3731 = vmatmul.f32.gmra.mxu0 %v3218
        %v3732 = vpop.f32.mrf.mxu0
        %v3733 = vadd.f32 0.0, %v3732
        %3734 = vmatmul.f32.gmra.mxu0 %v3219
        %v3735 = vpop.f32.mrf.mxu0
        %v3736 = vadd.f32 0.0, %v3735
        %3737 = vmatmul.f32.gmra.mxu0 %v3220
        %v3738 = vpop.f32.mrf.mxu0
        %v3739 = vadd.f32 0.0, %v3738
        %3740 = vmatmul.f32.gmra.mxu0 %v3221
        %v3741 = vpop.f32.mrf.mxu0
        %v3742 = vadd.f32 0.0, %v3741
        %3743 = vmatmul.f32.gmra.mxu0 %v3222
        %v3744 = vpop.f32.mrf.mxu0
        %v3745 = vadd.f32 0.0, %v3744
        %3746 = vmatmul.f32.gmra.mxu0 %v3223
        %v3747 = vpop.f32.mrf.mxu0
        %v3748 = vadd.f32 0.0, %v3747
        %3749 = vmatmul.f32.gmra.mxu0 %v3224
        %v3750 = vpop.f32.mrf.mxu0
        %v3751 = vadd.f32 0.0, %v3750
        %3752 = vmatmul.f32.gmra.mxu0 %v3225
        %v3753 = vpop.f32.mrf.mxu0
        %v3754 = vadd.f32 0.0, %v3753
        %3755 = vmatmul.f32.gmra.mxu0 %v3226
        %v3756 = vpop.f32.mrf.mxu0
        %v3757 = vadd.f32 0.0, %v3756
        %3758 = vmatmul.f32.gmra.mxu0 %v3227
        %v3759 = vpop.f32.mrf.mxu0
        %v3760 = vadd.f32 0.0, %v3759
        %3761 = vmatmul.f32.gmra.mxu0 %v3228
        %v3762 = vpop.f32.mrf.mxu0
        %v3763 = vadd.f32 0.0, %v3762
        %3764 = vmatmul.f32.gmra.mxu0 %v3229
        %v3765 = vpop.f32.mrf.mxu0
        %v3766 = vadd.f32 0.0, %v3765
        %3767 = vmatmul.f32.gmra.mxu0 %v3230
        %v3768 = vpop.f32.mrf.mxu0
        %v3769 = vadd.f32 0.0, %v3768
        %3770 = vmatmul.f32.gmra.mxu0 %v3231
        %v3771 = vpop.f32.mrf.mxu0
        %v3772 = vadd.f32 0.0, %v3771
        %3773 = vmatmul.f32.gmra.mxu0 %v3232
        %v3774 = vpop.f32.mrf.mxu0
        %v3775 = vadd.f32 0.0, %v3774
        %3776 = vmatmul.f32.gmra.mxu0 %v3233
        %v3777 = vpop.f32.mrf.mxu0
        %v3778 = vadd.f32 0.0, %v3777
        %3779 = vmatmul.f32.gmra.mxu0 %v3234
        %v3780 = vpop.f32.mrf.mxu0
        %v3781 = vadd.f32 0.0, %v3780
        %3782 = vmatmul.f32.gmra.mxu0 %v3235
        %v3783 = vpop.f32.mrf.mxu0
        %v3784 = vadd.f32 0.0, %v3783
        %3785 = vmatmul.f32.gmra.mxu0 %v3236
        %v3786 = vpop.f32.mrf.mxu0
        %v3787 = vadd.f32 0.0, %v3786
        %3788 = vdwg.mxu0
        %v3789 = vrot.slane %v3667, 2
        %v3790 = vrot.slane %v3670, 2
        %v3791 = vrot.slane %v3673, 2
        %v3792 = vrot.slane %v3676, 2
        %v3793 = vrot.slane %v3679, 2
        %v3794 = vrot.slane %v3682, 2
        %v3795 = vrot.slane %v3685, 2
        %v3796 = vrot.slane %v3688, 2
        %v3797 = vrot.slane %v3691, 2
        %v3798 = vrot.slane %v3694, 2
        %v3799 = vrot.slane %v3697, 2
        %v3800 = vrot.slane %v3700, 2
        %v3801 = vrot.slane %v3703, 2
        %v3802 = vrot.slane %v3706, 2
        %v3803 = vrot.slane %v3709, 2
        %v3804 = vrot.slane %v3712, 2
        %v3805 = vrot.slane %v3715, 2
        %v3806 = vrot.slane %v3718, 2
        %v3807 = vrot.slane %v3721, 2
        %v3808 = vrot.slane %v3724, 2
        %v3809 = vrot.slane %v3727, 2
        %v3810 = vrot.slane %v3730, 2
        %v3811 = vrot.slane %v3733, 2
        %v3812 = vrot.slane %v3736, 2
        %v3813 = vrot.slane %v3739, 2
        %v3814 = vrot.slane %v3742, 2
        %v3815 = vrot.slane %v3745, 2
        %v3816 = vrot.slane %v3748, 2
        %v3817 = vrot.slane %v3751, 2
        %v3818 = vrot.slane %v3754, 2
        %v3819 = vrot.slane %v3757, 2
        %v3820 = vrot.slane %v3760, 2
        %v3821 = vrot.slane %v3763, 2
        %v3822 = vrot.slane %v3766, 2
        %v3823 = vrot.slane %v3769, 2
        %v3824 = vrot.slane %v3772, 2
        %v3825 = vrot.slane %v3775, 2
        %v3826 = vrot.slane %v3778, 2
        %v3827 = vrot.slane %v3781, 2
        %v3828 = vrot.slane %v3784, 2
        %v3829 = vrot.slane %v3787, 2
        %v3830 = vsel %vm1013, %v3828, %v3829
        %v3831 = vsel %vm1013, %v3827, %v3828
        %v3832 = vsel %vm1013, %v3826, %v3827
        %v3833 = vsel %vm1013, %v3825, %v3826
        %v3834 = vsel %vm1013, %v3824, %v3825
        %v3835 = vsel %vm1013, %v3823, %v3824
        %v3836 = vsel %vm1013, %v3822, %v3823
        %v3837 = vsel %vm1013, %v3821, %v3822
        %v3838 = vsel %vm1013, %v3820, %v3821
        %v3839 = vsel %vm1013, %v3819, %v3820
        %v3840 = vsel %vm1013, %v3818, %v3819
        %v3841 = vsel %vm1013, %v3817, %v3818
        %v3842 = vsel %vm1013, %v3816, %v3817
        %v3843 = vsel %vm1013, %v3815, %v3816
        %v3844 = vsel %vm1013, %v3814, %v3815
        %v3845 = vsel %vm1013, %v3813, %v3814
        %v3846 = vsel %vm1013, %v3812, %v3813
        %v3847 = vsel %vm1013, %v3811, %v3812
        %v3848 = vsel %vm1013, %v3810, %v3811
        %v3849 = vsel %vm1013, %v3809, %v3810
        %v3850 = vsel %vm1013, %v3808, %v3809
        %v3851 = vsel %vm1013, %v3807, %v3808
        %v3852 = vsel %vm1013, %v3806, %v3807
        %v3853 = vsel %vm1013, %v3805, %v3806
        %v3854 = vsel %vm1013, %v3804, %v3805
        %v3855 = vsel %vm1013, %v3803, %v3804
        %v3856 = vsel %vm1013, %v3802, %v3803
        %v3857 = vsel %vm1013, %v3801, %v3802
        %v3858 = vsel %vm1013, %v3800, %v3801
        %v3859 = vsel %vm1013, %v3799, %v3800
        %v3860 = vsel %vm1013, %v3798, %v3799
        %v3861 = vsel %vm1013, %v3797, %v3798
        %v3862 = vsel %vm1013, %v3796, %v3797
        %v3863 = vsel %vm1013, %v3795, %v3796
        %v3864 = vsel %vm1013, %v3794, %v3795
        %v3865 = vsel %vm1013, %v3793, %v3794
        %v3866 = vsel %vm1013, %v3792, %v3793
        %v3867 = vsel %vm1013, %v3791, %v3792
        %v3868 = vsel %vm1013, %v3790, %v3791
        %v3869 = vsel %vm1013, %v3789, %v3790
        %v3870 = vsel %vm1013, %v3829, %v3789
        %v3871 = vadd.f32 %v3510, %v3869
        %v3872 = vadd.f32 %v3513, %v3868
        %v3873 = vadd.f32 %v3516, %v3867
        %v3874 = vadd.f32 %v3519, %v3866
        %v3875 = vadd.f32 %v3522, %v3865
        %v3876 = vadd.f32 %v3525, %v3864
        %v3877 = vadd.f32 %v3528, %v3863
        %v3878 = vadd.f32 %v3531, %v3862
        %v3879 = vadd.f32 %v3534, %v3861
        %v3880 = vadd.f32 %v3537, %v3860
        %v3881 = vadd.f32 %v3540, %v3859
        %v3882 = vadd.f32 %v3543, %v3858
        %v3883 = vadd.f32 %v3546, %v3857
        %v3884 = vadd.f32 %v3549, %v3856
        %v3885 = vadd.f32 %v3552, %v3855
        %v3886 = vadd.f32 %v3555, %v3854
        %v3887 = vadd.f32 %v3558, %v3853
        %v3888 = vadd.f32 %v3561, %v3852
        %v3889 = vadd.f32 %v3564, %v3851
        %v3890 = vadd.f32 %v3567, %v3850
        %v3891 = vadd.f32 %v3570, %v3849
        %v3892 = vadd.f32 %v3573, %v3848
        %v3893 = vadd.f32 %v3576, %v3847
        %v3894 = vadd.f32 %v3579, %v3846
        %v3895 = vadd.f32 %v3582, %v3845
        %v3896 = vadd.f32 %v3585, %v3844
        %v3897 = vadd.f32 %v3588, %v3843
        %v3898 = vadd.f32 %v3591, %v3842
        %v3899 = vadd.f32 %v3594, %v3841
        %v3900 = vadd.f32 %v3597, %v3840
        %v3901 = vadd.f32 %v3600, %v3839
        %v3902 = vadd.f32 %v3603, %v3838
        %v3903 = vadd.f32 %v3606, %v3837
        %v3904 = vadd.f32 %v3609, %v3836
        %v3905 = vadd.f32 %v3612, %v3835
        %v3906 = vadd.f32 %v3615, %v3834
        %v3907 = vadd.f32 %v3618, %v3833
        %v3908 = vadd.f32 %v3621, %v3832
        %v3909 = vadd.f32 %v3624, %v3831
        %v3910 = vadd.f32 %v3627, %v3830
        %v3911 = vadd.f32 %v3630, %v3870
        %s3912 = scalar_lea.vmem [#allocation7], 384
        %v3913 = vld [vmem:[%s3912] sm:$0xff]
        %v3914 = vld [vmem:[%s3912 + $0x8] sm:$0xff]
        %v3915 = vld [vmem:[%s3912 + $0x10] sm:$0xff]
        %v3916 = vld [vmem:[%s3912 + $0x18] sm:$0xff]
        %v3917 = vld [vmem:[%s3912 + $0x20] sm:$0xff]
        %v3918 = vld [vmem:[%s3912 + $0x28] sm:$0xff]
        %v3919 = vld [vmem:[%s3912 + $0x30] sm:$0xff]
        %v3920 = vld [vmem:[%s3912 + $0x38] sm:$0xff]
        %v3921 = vld [vmem:[%s3912 + $0x40] sm:$0xff]
        %v3922 = vld [vmem:[%s3912 + $0x48] sm:$0xff]
        %v3923 = vld [vmem:[%s3912 + $0x50] sm:$0xff]
        %v3924 = vld [vmem:[%s3912 + $0x58] sm:$0xff]
        %v3925 = vld [vmem:[%s3912 + $0x60] sm:$0xff]
        %v3926 = vld [vmem:[%s3912 + $0x68] sm:$0xff]
        %v3927 = vld [vmem:[%s3912 + $0x70] sm:$0xff]
        %v3928 = vld [vmem:[%s3912 + $0x78] sm:$0xff]
        %3929 = vmatpush.msra.mxu0 %v3928
        %3930 = vmatpush.msra.mxu0 %v3927
        %3931 = vmatpush.msra.mxu0 %v3926
        %3932 = vmatpush.msra.mxu0 %v3925
        %3933 = vmatpush.msra.mxu0 %v3924
        %3934 = vmatpush.msra.mxu0 %v3923
        %3935 = vmatpush.msra.mxu0 %v3922
        %3936 = vmatpush.msra.mxu0 %v3921
        %3937 = vmatpush.msra.mxu0 %v3920
        %3938 = vmatpush.msra.mxu0 %v3919
        %3939 = vmatpush.msra.mxu0 %v3918
        %3940 = vmatpush.msra.mxu0 %v3917
        %3941 = vmatpush.msra.mxu0 %v3916
        %3942 = vmatpush.msra.mxu0 %v3915
        %3943 = vmatpush.msra.mxu0 %v3914
        %3944 = vmatpush.msra.mxu0 %v3913
        %3945 = vmatmul.f32.gmra.mxu0 %v3196
        %v3946 = vpop.f32.mrf.mxu0
        %v3947 = vadd.f32 0.0, %v3946
        %3948 = vmatmul.f32.gmra.mxu0 %v3197
        %v3949 = vpop.f32.mrf.mxu0
        %v3950 = vadd.f32 0.0, %v3949
        %3951 = vmatmul.f32.gmra.mxu0 %v3198
        %v3952 = vpop.f32.mrf.mxu0
        %v3953 = vadd.f32 0.0, %v3952
        %3954 = vmatmul.f32.gmra.mxu0 %v3199
        %v3955 = vpop.f32.mrf.mxu0
        %v3956 = vadd.f32 0.0, %v3955
        %3957 = vmatmul.f32.gmra.mxu0 %v3200
        %v3958 = vpop.f32.mrf.mxu0
        %v3959 = vadd.f32 0.0, %v3958
        %3960 = vmatmul.f32.gmra.mxu0 %v3201
        %v3961 = vpop.f32.mrf.mxu0
        %v3962 = vadd.f32 0.0, %v3961
        %3963 = vmatmul.f32.gmra.mxu0 %v3202
        %v3964 = vpop.f32.mrf.mxu0
        %v3965 = vadd.f32 0.0, %v3964
        %3966 = vmatmul.f32.gmra.mxu0 %v3203
        %v3967 = vpop.f32.mrf.mxu0
        %v3968 = vadd.f32 0.0, %v3967
        %3969 = vmatmul.f32.gmra.mxu0 %v3204
        %v3970 = vpop.f32.mrf.mxu0
        %v3971 = vadd.f32 0.0, %v3970
        %3972 = vmatmul.f32.gmra.mxu0 %v3205
        %v3973 = vpop.f32.mrf.mxu0
        %v3974 = vadd.f32 0.0, %v3973
        %3975 = vmatmul.f32.gmra.mxu0 %v3206
        %v3976 = vpop.f32.mrf.mxu0
        %v3977 = vadd.f32 0.0, %v3976
        %3978 = vmatmul.f32.gmra.mxu0 %v3207
        %v3979 = vpop.f32.mrf.mxu0
        %v3980 = vadd.f32 0.0, %v3979
        %3981 = vmatmul.f32.gmra.mxu0 %v3208
        %v3982 = vpop.f32.mrf.mxu0
        %v3983 = vadd.f32 0.0, %v3982
        %3984 = vmatmul.f32.gmra.mxu0 %v3209
        %v3985 = vpop.f32.mrf.mxu0
        %v3986 = vadd.f32 0.0, %v3985
        %3987 = vmatmul.f32.gmra.mxu0 %v3210
        %v3988 = vpop.f32.mrf.mxu0
        %v3989 = vadd.f32 0.0, %v3988
        %3990 = vmatmul.f32.gmra.mxu0 %v3211
        %v3991 = vpop.f32.mrf.mxu0
        %v3992 = vadd.f32 0.0, %v3991
        %3993 = vmatmul.f32.gmra.mxu0 %v3212
        %v3994 = vpop.f32.mrf.mxu0
        %v3995 = vadd.f32 0.0, %v3994
        %3996 = vmatmul.f32.gmra.mxu0 %v3213
        %v3997 = vpop.f32.mrf.mxu0
        %v3998 = vadd.f32 0.0, %v3997
        %3999 = vmatmul.f32.gmra.mxu0 %v3214
        %v4000 = vpop.f32.mrf.mxu0
        %v4001 = vadd.f32 0.0, %v4000
        %4002 = vmatmul.f32.gmra.mxu0 %v3215
        %v4003 = vpop.f32.mrf.mxu0
        %v4004 = vadd.f32 0.0, %v4003
        %4005 = vmatmul.f32.gmra.mxu0 %v3216
        %v4006 = vpop.f32.mrf.mxu0
        %v4007 = vadd.f32 0.0, %v4006
        %4008 = vmatmul.f32.gmra.mxu0 %v3217
        %v4009 = vpop.f32.mrf.mxu0
        %v4010 = vadd.f32 0.0, %v4009
        %4011 = vmatmul.f32.gmra.mxu0 %v3218
        %v4012 = vpop.f32.mrf.mxu0
        %v4013 = vadd.f32 0.0, %v4012
        %4014 = vmatmul.f32.gmra.mxu0 %v3219
        %v4015 = vpop.f32.mrf.mxu0
        %v4016 = vadd.f32 0.0, %v4015
        %4017 = vmatmul.f32.gmra.mxu0 %v3220
        %v4018 = vpop.f32.mrf.mxu0
        %v4019 = vadd.f32 0.0, %v4018
        %4020 = vmatmul.f32.gmra.mxu0 %v3221
        %v4021 = vpop.f32.mrf.mxu0
        %v4022 = vadd.f32 0.0, %v4021
        %4023 = vmatmul.f32.gmra.mxu0 %v3222
        %v4024 = vpop.f32.mrf.mxu0
        %v4025 = vadd.f32 0.0, %v4024
        %4026 = vmatmul.f32.gmra.mxu0 %v3223
        %v4027 = vpop.f32.mrf.mxu0
        %v4028 = vadd.f32 0.0, %v4027
        %4029 = vmatmul.f32.gmra.mxu0 %v3224
        %v4030 = vpop.f32.mrf.mxu0
        %v4031 = vadd.f32 0.0, %v4030
        %4032 = vmatmul.f32.gmra.mxu0 %v3225
        %v4033 = vpop.f32.mrf.mxu0
        %v4034 = vadd.f32 0.0, %v4033
        %4035 = vmatmul.f32.gmra.mxu0 %v3226
        %v4036 = vpop.f32.mrf.mxu0
        %v4037 = vadd.f32 0.0, %v4036
        %4038 = vmatmul.f32.gmra.mxu0 %v3227
        %v4039 = vpop.f32.mrf.mxu0
        %v4040 = vadd.f32 0.0, %v4039
        %4041 = vmatmul.f32.gmra.mxu0 %v3228
        %v4042 = vpop.f32.mrf.mxu0
        %v4043 = vadd.f32 0.0, %v4042
        %4044 = vmatmul.f32.gmra.mxu0 %v3229
        %v4045 = vpop.f32.mrf.mxu0
        %v4046 = vadd.f32 0.0, %v4045
        %4047 = vmatmul.f32.gmra.mxu0 %v3230
        %v4048 = vpop.f32.mrf.mxu0
        %v4049 = vadd.f32 0.0, %v4048
        %4050 = vmatmul.f32.gmra.mxu0 %v3231
        %v4051 = vpop.f32.mrf.mxu0
        %v4052 = vadd.f32 0.0, %v4051
        %4053 = vmatmul.f32.gmra.mxu0 %v3232
        %v4054 = vpop.f32.mrf.mxu0
        %v4055 = vadd.f32 0.0, %v4054
        %4056 = vmatmul.f32.gmra.mxu0 %v3233
        %v4057 = vpop.f32.mrf.mxu0
        %v4058 = vadd.f32 0.0, %v4057
        %4059 = vmatmul.f32.gmra.mxu0 %v3234
        %v4060 = vpop.f32.mrf.mxu0
        %v4061 = vadd.f32 0.0, %v4060
        %4062 = vmatmul.f32.gmra.mxu0 %v3235
        %v4063 = vpop.f32.mrf.mxu0
        %v4064 = vadd.f32 0.0, %v4063
        %4065 = vmatmul.f32.gmra.mxu0 %v3236
        %v4066 = vpop.f32.mrf.mxu0
        %v4067 = vadd.f32 0.0, %v4066
        %4068 = vdwg.mxu0
        %v4069 = vrot.slane %v3947, 2
        %v4070 = vrot.slane %v3950, 2
        %v4071 = vrot.slane %v3953, 2
        %v4072 = vrot.slane %v3956, 2
        %v4073 = vrot.slane %v3959, 2
        %v4074 = vrot.slane %v3962, 2
        %v4075 = vrot.slane %v3965, 2
        %v4076 = vrot.slane %v3968, 2
        %v4077 = vrot.slane %v3971, 2
        %v4078 = vrot.slane %v3974, 2
        %v4079 = vrot.slane %v3977, 2
        %v4080 = vrot.slane %v3980, 2
        %v4081 = vrot.slane %v3983, 2
        %v4082 = vrot.slane %v3986, 2
        %v4083 = vrot.slane %v3989, 2
        %v4084 = vrot.slane %v3992, 2
        %v4085 = vrot.slane %v3995, 2
        %v4086 = vrot.slane %v3998, 2
        %v4087 = vrot.slane %v4001, 2
        %v4088 = vrot.slane %v4004, 2
        %v4089 = vrot.slane %v4007, 2
        %v4090 = vrot.slane %v4010, 2
        %v4091 = vrot.slane %v4013, 2
        %v4092 = vrot.slane %v4016, 2
        %v4093 = vrot.slane %v4019, 2
        %v4094 = vrot.slane %v4022, 2
        %v4095 = vrot.slane %v4025, 2
        %v4096 = vrot.slane %v4028, 2
        %v4097 = vrot.slane %v4031, 2
        %v4098 = vrot.slane %v4034, 2
        %v4099 = vrot.slane %v4037, 2
        %v4100 = vrot.slane %v4040, 2
        %v4101 = vrot.slane %v4043, 2
        %v4102 = vrot.slane %v4046, 2
        %v4103 = vrot.slane %v4049, 2
        %v4104 = vrot.slane %v4052, 2
        %v4105 = vrot.slane %v4055, 2
        %v4106 = vrot.slane %v4058, 2
        %v4107 = vrot.slane %v4061, 2
        %v4108 = vrot.slane %v4064, 2
        %v4109 = vrot.slane %v4067, 2
        %v4110 = vsel %vm1013, %v4108, %v4109
        %v4111 = vsel %vm1013, %v4107, %v4108
        %v4112 = vsel %vm1013, %v4106, %v4107
        %v4113 = vsel %vm1013, %v4105, %v4106
        %v4114 = vsel %vm1013, %v4104, %v4105
        %v4115 = vsel %vm1013, %v4103, %v4104
        %v4116 = vsel %vm1013, %v4102, %v4103
        %v4117 = vsel %vm1013, %v4101, %v4102
        %v4118 = vsel %vm1013, %v4100, %v4101
        %v4119 = vsel %vm1013, %v4099, %v4100
        %v4120 = vsel %vm1013, %v4098, %v4099
        %v4121 = vsel %vm1013, %v4097, %v4098
        %v4122 = vsel %vm1013, %v4096, %v4097
        %v4123 = vsel %vm1013, %v4095, %v4096
        %v4124 = vsel %vm1013, %v4094, %v4095
        %v4125 = vsel %vm1013, %v4093, %v4094
        %v4126 = vsel %vm1013, %v4092, %v4093
        %v4127 = vsel %vm1013, %v4091, %v4092
        %v4128 = vsel %vm1013, %v4090, %v4091
        %v4129 = vsel %vm1013, %v4089, %v4090
        %v4130 = vsel %vm1013, %v4088, %v4089
        %v4131 = vsel %vm1013, %v4087, %v4088
        %v4132 = vsel %vm1013, %v4086, %v4087
        %v4133 = vsel %vm1013, %v4085, %v4086
        %v4134 = vsel %vm1013, %v4084, %v4085
        %v4135 = vsel %vm1013, %v4083, %v4084
        %v4136 = vsel %vm1013, %v4082, %v4083
        %v4137 = vsel %vm1013, %v4081, %v4082
        %v4138 = vsel %vm1013, %v4080, %v4081
        %v4139 = vsel %vm1013, %v4079, %v4080
        %v4140 = vsel %vm1013, %v4078, %v4079
        %v4141 = vsel %vm1013, %v4077, %v4078
        %v4142 = vsel %vm1013, %v4076, %v4077
        %v4143 = vsel %vm1013, %v4075, %v4076
        %v4144 = vsel %vm1013, %v4074, %v4075
        %v4145 = vsel %vm1013, %v4073, %v4074
        %v4146 = vsel %vm1013, %v4072, %v4073
        %v4147 = vsel %vm1013, %v4071, %v4072
        %v4148 = vsel %vm1013, %v4070, %v4071
        %v4149 = vsel %vm1013, %v4069, %v4070
        %v4150 = vsel %vm1013, %v4109, %v4069
        %v4151 = vadd.f32 %v3871, %v4147
        %v4152 = vadd.f32 %v3872, %v4146
        %v4153 = vadd.f32 %v3873, %v4145
        %v4154 = vadd.f32 %v3874, %v4144
        %v4155 = vadd.f32 %v3875, %v4143
        %v4156 = vadd.f32 %v3876, %v4142
        %v4157 = vadd.f32 %v3877, %v4141
        %v4158 = vadd.f32 %v3878, %v4140
        %v4159 = vadd.f32 %v3879, %v4139
        %v4160 = vadd.f32 %v3880, %v4138
        %v4161 = vadd.f32 %v3881, %v4137
        %v4162 = vadd.f32 %v3882, %v4136
        %v4163 = vadd.f32 %v3883, %v4135
        %v4164 = vadd.f32 %v3884, %v4134
        %v4165 = vadd.f32 %v3885, %v4133
        %v4166 = vadd.f32 %v3886, %v4132
        %v4167 = vadd.f32 %v3887, %v4131
        %v4168 = vadd.f32 %v3888, %v4130
        %v4169 = vadd.f32 %v3889, %v4129
        %v4170 = vadd.f32 %v3890, %v4128
        %v4171 = vadd.f32 %v3891, %v4127
        %v4172 = vadd.f32 %v3892, %v4126
        %v4173 = vadd.f32 %v3893, %v4125
        %v4174 = vadd.f32 %v3894, %v4124
        %v4175 = vadd.f32 %v3895, %v4123
        %v4176 = vadd.f32 %v3896, %v4122
        %v4177 = vadd.f32 %v3897, %v4121
        %v4178 = vadd.f32 %v3898, %v4120
        %v4179 = vadd.f32 %v3899, %v4119
        %v4180 = vadd.f32 %v3900, %v4118
        %v4181 = vadd.f32 %v3901, %v4117
        %v4182 = vadd.f32 %v3902, %v4116
        %v4183 = vadd.f32 %v3903, %v4115
        %v4184 = vadd.f32 %v3904, %v4114
        %v4185 = vadd.f32 %v3905, %v4113
        %v4186 = vadd.f32 %v3906, %v4112
        %v4187 = vadd.f32 %v3907, %v4111
        %v4188 = vadd.f32 %v3908, %v4110
        %v4189 = vadd.f32 %v3909, %v4150
        %v4190 = vadd.f32 %v3910, %v4149
        %v4191 = vadd.f32 %v3911, %v4148
        %s4192 = scalar_lea.vmem [#allocation7], 512
        %v4193 = vld [vmem:[%s4192] sm:$0xff]
        %v4194 = vld [vmem:[%s4192 + $0x8] sm:$0xff]
        %v4195 = vld [vmem:[%s4192 + $0x10] sm:$0xff]
        %v4196 = vld [vmem:[%s4192 + $0x18] sm:$0xff]
        %v4197 = vld [vmem:[%s4192 + $0x20] sm:$0xff]
        %v4198 = vld [vmem:[%s4192 + $0x28] sm:$0xff]
        %v4199 = vld [vmem:[%s4192 + $0x30] sm:$0xff]
        %v4200 = vld [vmem:[%s4192 + $0x38] sm:$0xff]
        %v4201 = vld [vmem:[%s4192 + $0x40] sm:$0xff]
        %v4202 = vld [vmem:[%s4192 + $0x48] sm:$0xff]
        %v4203 = vld [vmem:[%s4192 + $0x50] sm:$0xff]
        %v4204 = vld [vmem:[%s4192 + $0x58] sm:$0xff]
        %v4205 = vld [vmem:[%s4192 + $0x60] sm:$0xff]
        %v4206 = vld [vmem:[%s4192 + $0x68] sm:$0xff]
        %v4207 = vld [vmem:[%s4192 + $0x70] sm:$0xff]
        %v4208 = vld [vmem:[%s4192 + $0x78] sm:$0xff]
        %4209 = vmatpush.msra.mxu0 %v4208
        %4210 = vmatpush.msra.mxu0 %v4207
        %4211 = vmatpush.msra.mxu0 %v4206
        %4212 = vmatpush.msra.mxu0 %v4205
        %4213 = vmatpush.msra.mxu0 %v4204
        %4214 = vmatpush.msra.mxu0 %v4203
        %4215 = vmatpush.msra.mxu0 %v4202
        %4216 = vmatpush.msra.mxu0 %v4201
        %4217 = vmatpush.msra.mxu0 %v4200
        %4218 = vmatpush.msra.mxu0 %v4199
        %4219 = vmatpush.msra.mxu0 %v4198
        %4220 = vmatpush.msra.mxu0 %v4197
        %4221 = vmatpush.msra.mxu0 %v4196
        %4222 = vmatpush.msra.mxu0 %v4195
        %4223 = vmatpush.msra.mxu0 %v4194
        %4224 = vmatpush.msra.mxu0 %v4193
        %4225 = vmatmul.f32.gmra.mxu0 %v3196
        %v4226 = vpop.f32.mrf.mxu0
        %v4227 = vadd.f32 0.0, %v4226
        %4228 = vmatmul.f32.gmra.mxu0 %v3197
        %v4229 = vpop.f32.mrf.mxu0
        %v4230 = vadd.f32 0.0, %v4229
        %4231 = vmatmul.f32.gmra.mxu0 %v3198
        %v4232 = vpop.f32.mrf.mxu0
        %v4233 = vadd.f32 0.0, %v4232
        %4234 = vmatmul.f32.gmra.mxu0 %v3199
        %v4235 = vpop.f32.mrf.mxu0
        %v4236 = vadd.f32 0.0, %v4235
        %4237 = vmatmul.f32.gmra.mxu0 %v3200
        %v4238 = vpop.f32.mrf.mxu0
        %v4239 = vadd.f32 0.0, %v4238
        %4240 = vmatmul.f32.gmra.mxu0 %v3201
        %v4241 = vpop.f32.mrf.mxu0
        %v4242 = vadd.f32 0.0, %v4241
        %4243 = vmatmul.f32.gmra.mxu0 %v3202
        %v4244 = vpop.f32.mrf.mxu0
        %v4245 = vadd.f32 0.0, %v4244
        %4246 = vmatmul.f32.gmra.mxu0 %v3203
        %v4247 = vpop.f32.mrf.mxu0
        %v4248 = vadd.f32 0.0, %v4247
        %4249 = vmatmul.f32.gmra.mxu0 %v3204
        %v4250 = vpop.f32.mrf.mxu0
        %v4251 = vadd.f32 0.0, %v4250
        %4252 = vmatmul.f32.gmra.mxu0 %v3205
        %v4253 = vpop.f32.mrf.mxu0
        %v4254 = vadd.f32 0.0, %v4253
        %4255 = vmatmul.f32.gmra.mxu0 %v3206
        %v4256 = vpop.f32.mrf.mxu0
        %v4257 = vadd.f32 0.0, %v4256
        %4258 = vmatmul.f32.gmra.mxu0 %v3207
        %v4259 = vpop.f32.mrf.mxu0
        %v4260 = vadd.f32 0.0, %v4259
        %4261 = vmatmul.f32.gmra.mxu0 %v3208
        %v4262 = vpop.f32.mrf.mxu0
        %v4263 = vadd.f32 0.0, %v4262
        %4264 = vmatmul.f32.gmra.mxu0 %v3209
        %v4265 = vpop.f32.mrf.mxu0
        %v4266 = vadd.f32 0.0, %v4265
        %4267 = vmatmul.f32.gmra.mxu0 %v3210
        %v4268 = vpop.f32.mrf.mxu0
        %v4269 = vadd.f32 0.0, %v4268
        %4270 = vmatmul.f32.gmra.mxu0 %v3211
        %v4271 = vpop.f32.mrf.mxu0
        %v4272 = vadd.f32 0.0, %v4271
        %4273 = vmatmul.f32.gmra.mxu0 %v3212
        %v4274 = vpop.f32.mrf.mxu0
        %v4275 = vadd.f32 0.0, %v4274
        %4276 = vmatmul.f32.gmra.mxu0 %v3213
        %v4277 = vpop.f32.mrf.mxu0
        %v4278 = vadd.f32 0.0, %v4277
        %4279 = vmatmul.f32.gmra.mxu0 %v3214
        %v4280 = vpop.f32.mrf.mxu0
        %v4281 = vadd.f32 0.0, %v4280
        %4282 = vmatmul.f32.gmra.mxu0 %v3215
        %v4283 = vpop.f32.mrf.mxu0
        %v4284 = vadd.f32 0.0, %v4283
        %4285 = vmatmul.f32.gmra.mxu0 %v3216
        %v4286 = vpop.f32.mrf.mxu0
        %v4287 = vadd.f32 0.0, %v4286
        %4288 = vmatmul.f32.gmra.mxu0 %v3217
        %v4289 = vpop.f32.mrf.mxu0
        %v4290 = vadd.f32 0.0, %v4289
        %4291 = vmatmul.f32.gmra.mxu0 %v3218
        %v4292 = vpop.f32.mrf.mxu0
        %v4293 = vadd.f32 0.0, %v4292
        %4294 = vmatmul.f32.gmra.mxu0 %v3219
        %v4295 = vpop.f32.mrf.mxu0
        %v4296 = vadd.f32 0.0, %v4295
        %4297 = vmatmul.f32.gmra.mxu0 %v3220
        %v4298 = vpop.f32.mrf.mxu0
        %v4299 = vadd.f32 0.0, %v4298
        %4300 = vmatmul.f32.gmra.mxu0 %v3221
        %v4301 = vpop.f32.mrf.mxu0
        %v4302 = vadd.f32 0.0, %v4301
        %4303 = vmatmul.f32.gmra.mxu0 %v3222
        %v4304 = vpop.f32.mrf.mxu0
        %v4305 = vadd.f32 0.0, %v4304
        %4306 = vmatmul.f32.gmra.mxu0 %v3223
        %v4307 = vpop.f32.mrf.mxu0
        %v4308 = vadd.f32 0.0, %v4307
        %4309 = vmatmul.f32.gmra.mxu0 %v3224
        %v4310 = vpop.f32.mrf.mxu0
        %v4311 = vadd.f32 0.0, %v4310
        %4312 = vmatmul.f32.gmra.mxu0 %v3225
        %v4313 = vpop.f32.mrf.mxu0
        %v4314 = vadd.f32 0.0, %v4313
        %4315 = vmatmul.f32.gmra.mxu0 %v3226
        %v4316 = vpop.f32.mrf.mxu0
        %v4317 = vadd.f32 0.0, %v4316
        %4318 = vmatmul.f32.gmra.mxu0 %v3227
        %v4319 = vpop.f32.mrf.mxu0
        %v4320 = vadd.f32 0.0, %v4319
        %4321 = vmatmul.f32.gmra.mxu0 %v3228
        %v4322 = vpop.f32.mrf.mxu0
        %v4323 = vadd.f32 0.0, %v4322
        %4324 = vmatmul.f32.gmra.mxu0 %v3229
        %v4325 = vpop.f32.mrf.mxu0
        %v4326 = vadd.f32 0.0, %v4325
        %4327 = vmatmul.f32.gmra.mxu0 %v3230
        %v4328 = vpop.f32.mrf.mxu0
        %v4329 = vadd.f32 0.0, %v4328
        %4330 = vmatmul.f32.gmra.mxu0 %v3231
        %v4331 = vpop.f32.mrf.mxu0
        %v4332 = vadd.f32 0.0, %v4331
        %4333 = vmatmul.f32.gmra.mxu0 %v3232
        %v4334 = vpop.f32.mrf.mxu0
        %v4335 = vadd.f32 0.0, %v4334
        %4336 = vmatmul.f32.gmra.mxu0 %v3233
        %v4337 = vpop.f32.mrf.mxu0
        %v4338 = vadd.f32 0.0, %v4337
        %4339 = vmatmul.f32.gmra.mxu0 %v3234
        %v4340 = vpop.f32.mrf.mxu0
        %v4341 = vadd.f32 0.0, %v4340
        %4342 = vmatmul.f32.gmra.mxu0 %v3235
        %v4343 = vpop.f32.mrf.mxu0
        %v4344 = vadd.f32 0.0, %v4343
        %4345 = vmatmul.f32.gmra.mxu0 %v3236
        %v4346 = vpop.f32.mrf.mxu0
        %v4347 = vadd.f32 0.0, %v4346
        %4348 = vdwg.mxu0
        %v4349 = vrot.slane %v4227, 3
        %v4350 = vrot.slane %v4230, 3
        %v4351 = vrot.slane %v4233, 3
        %v4352 = vrot.slane %v4236, 3
        %v4353 = vrot.slane %v4239, 3
        %v4354 = vrot.slane %v4242, 3
        %v4355 = vrot.slane %v4245, 3
        %v4356 = vrot.slane %v4248, 3
        %v4357 = vrot.slane %v4251, 3
        %v4358 = vrot.slane %v4254, 3
        %v4359 = vrot.slane %v4257, 3
        %v4360 = vrot.slane %v4260, 3
        %v4361 = vrot.slane %v4263, 3
        %v4362 = vrot.slane %v4266, 3
        %v4363 = vrot.slane %v4269, 3
        %v4364 = vrot.slane %v4272, 3
        %v4365 = vrot.slane %v4275, 3
        %v4366 = vrot.slane %v4278, 3
        %v4367 = vrot.slane %v4281, 3
        %v4368 = vrot.slane %v4284, 3
        %v4369 = vrot.slane %v4287, 3
        %v4370 = vrot.slane %v4290, 3
        %v4371 = vrot.slane %v4293, 3
        %v4372 = vrot.slane %v4296, 3
        %v4373 = vrot.slane %v4299, 3
        %v4374 = vrot.slane %v4302, 3
        %v4375 = vrot.slane %v4305, 3
        %v4376 = vrot.slane %v4308, 3
        %v4377 = vrot.slane %v4311, 3
        %v4378 = vrot.slane %v4314, 3
        %v4379 = vrot.slane %v4317, 3
        %v4380 = vrot.slane %v4320, 3
        %v4381 = vrot.slane %v4323, 3
        %v4382 = vrot.slane %v4326, 3
        %v4383 = vrot.slane %v4329, 3
        %v4384 = vrot.slane %v4332, 3
        %v4385 = vrot.slane %v4335, 3
        %v4386 = vrot.slane %v4338, 3
        %v4387 = vrot.slane %v4341, 3
        %v4388 = vrot.slane %v4344, 3
        %v4389 = vrot.slane %v4347, 3
        %v4390 = vsel %vm1574, %v4388, %v4389
        %v4391 = vsel %vm1574, %v4387, %v4388
        %v4392 = vsel %vm1574, %v4386, %v4387
        %v4393 = vsel %vm1574, %v4385, %v4386
        %v4394 = vsel %vm1574, %v4384, %v4385
        %v4395 = vsel %vm1574, %v4383, %v4384
        %v4396 = vsel %vm1574, %v4382, %v4383
        %v4397 = vsel %vm1574, %v4381, %v4382
        %v4398 = vsel %vm1574, %v4380, %v4381
        %v4399 = vsel %vm1574, %v4379, %v4380
        %v4400 = vsel %vm1574, %v4378, %v4379
        %v4401 = vsel %vm1574, %v4377, %v4378
        %v4402 = vsel %vm1574, %v4376, %v4377
        %v4403 = vsel %vm1574, %v4375, %v4376
        %v4404 = vsel %vm1574, %v4374, %v4375
        %v4405 = vsel %vm1574, %v4373, %v4374
        %v4406 = vsel %vm1574, %v4372, %v4373
        %v4407 = vsel %vm1574, %v4371, %v4372
        %v4408 = vsel %vm1574, %v4370, %v4371
        %v4409 = vsel %vm1574, %v4369, %v4370
        %v4410 = vsel %vm1574, %v4368, %v4369
        %v4411 = vsel %vm1574, %v4367, %v4368
        %v4412 = vsel %vm1574, %v4366, %v4367
        %v4413 = vsel %vm1574, %v4365, %v4366
        %v4414 = vsel %vm1574, %v4364, %v4365
        %v4415 = vsel %vm1574, %v4363, %v4364
        %v4416 = vsel %vm1574, %v4362, %v4363
        %v4417 = vsel %vm1574, %v4361, %v4362
        %v4418 = vsel %vm1574, %v4360, %v4361
        %v4419 = vsel %vm1574, %v4359, %v4360
        %v4420 = vsel %vm1574, %v4358, %v4359
        %v4421 = vsel %vm1574, %v4357, %v4358
        %v4422 = vsel %vm1574, %v4356, %v4357
        %v4423 = vsel %vm1574, %v4355, %v4356
        %v4424 = vsel %vm1574, %v4354, %v4355
        %v4425 = vsel %vm1574, %v4353, %v4354
        %v4426 = vsel %vm1574, %v4352, %v4353
        %v4427 = vsel %vm1574, %v4351, %v4352
        %v4428 = vsel %vm1574, %v4350, %v4351
        %v4429 = vsel %vm1574, %v4349, %v4350
        %v4430 = vsel %vm1574, %v4389, %v4349
        %v4431 = vadd.f32 %v4151, %v4427
        %v4432 = vadd.f32 %v4152, %v4426
        %v4433 = vadd.f32 %v4153, %v4425
        %v4434 = vadd.f32 %v4154, %v4424
        %v4435 = vadd.f32 %v4155, %v4423
        %v4436 = vadd.f32 %v4156, %v4422
        %v4437 = vadd.f32 %v4157, %v4421
        %v4438 = vadd.f32 %v4158, %v4420
        %v4439 = vadd.f32 %v4159, %v4419
        %v4440 = vadd.f32 %v4160, %v4418
        %v4441 = vadd.f32 %v4161, %v4417
        %v4442 = vadd.f32 %v4162, %v4416
        %v4443 = vadd.f32 %v4163, %v4415
        %v4444 = vadd.f32 %v4164, %v4414
        %v4445 = vadd.f32 %v4165, %v4413
        %v4446 = vadd.f32 %v4166, %v4412
        %v4447 = vadd.f32 %v4167, %v4411
        %v4448 = vadd.f32 %v4168, %v4410
        %v4449 = vadd.f32 %v4169, %v4409
        %v4450 = vadd.f32 %v4170, %v4408
        %v4451 = vadd.f32 %v4171, %v4407
        %v4452 = vadd.f32 %v4172, %v4406
        %v4453 = vadd.f32 %v4173, %v4405
        %v4454 = vadd.f32 %v4174, %v4404
        %v4455 = vadd.f32 %v4175, %v4403
        %v4456 = vadd.f32 %v4176, %v4402
        %v4457 = vadd.f32 %v4177, %v4401
        %v4458 = vadd.f32 %v4178, %v4400
        %v4459 = vadd.f32 %v4179, %v4399
        %v4460 = vadd.f32 %v4180, %v4398
        %v4461 = vadd.f32 %v4181, %v4397
        %v4462 = vadd.f32 %v4182, %v4396
        %v4463 = vadd.f32 %v4183, %v4395
        %v4464 = vadd.f32 %v4184, %v4394
        %v4465 = vadd.f32 %v4185, %v4393
        %v4466 = vadd.f32 %v4186, %v4392
        %v4467 = vadd.f32 %v4187, %v4391
        %v4468 = vadd.f32 %v4188, %v4390
        %v4469 = vadd.f32 %v4189, %v4430
        %v4470 = vadd.f32 %v4190, %v4429
        %v4471 = vadd.f32 %v4191, %v4428
        %s4472 = scalar_lea.vmem [#allocation7], 640
        %v4473 = vld [vmem:[%s4472] sm:$0xff]
        %v4474 = vld [vmem:[%s4472 + $0x8] sm:$0xff]
        %v4475 = vld [vmem:[%s4472 + $0x10] sm:$0xff]
        %v4476 = vld [vmem:[%s4472 + $0x18] sm:$0xff]
        %v4477 = vld [vmem:[%s4472 + $0x20] sm:$0xff]
        %v4478 = vld [vmem:[%s4472 + $0x28] sm:$0xff]
        %v4479 = vld [vmem:[%s4472 + $0x30] sm:$0xff]
        %v4480 = vld [vmem:[%s4472 + $0x38] sm:$0xff]
        %v4481 = vld [vmem:[%s4472 + $0x40] sm:$0xff]
        %v4482 = vld [vmem:[%s4472 + $0x48] sm:$0xff]
        %v4483 = vld [vmem:[%s4472 + $0x50] sm:$0xff]
        %v4484 = vld [vmem:[%s4472 + $0x58] sm:$0xff]
        %v4485 = vld [vmem:[%s4472 + $0x60] sm:$0xff]
        %v4486 = vld [vmem:[%s4472 + $0x68] sm:$0xff]
        %v4487 = vld [vmem:[%s4472 + $0x70] sm:$0xff]
        %v4488 = vld [vmem:[%s4472 + $0x78] sm:$0xff]
        %4489 = vmatpush.msra.mxu0 %v4488
        %4490 = vmatpush.msra.mxu0 %v4487
        %4491 = vmatpush.msra.mxu0 %v4486
        %4492 = vmatpush.msra.mxu0 %v4485
        %4493 = vmatpush.msra.mxu0 %v4484
        %4494 = vmatpush.msra.mxu0 %v4483
        %4495 = vmatpush.msra.mxu0 %v4482
        %4496 = vmatpush.msra.mxu0 %v4481
        %4497 = vmatpush.msra.mxu0 %v4480
        %4498 = vmatpush.msra.mxu0 %v4479
        %4499 = vmatpush.msra.mxu0 %v4478
        %4500 = vmatpush.msra.mxu0 %v4477
        %4501 = vmatpush.msra.mxu0 %v4476
        %4502 = vmatpush.msra.mxu0 %v4475
        %4503 = vmatpush.msra.mxu0 %v4474
        %4504 = vmatpush.msra.mxu0 %v4473
        %4505 = vmatmul.f32.gmra.mxu0 %v3196
        %v4506 = vpop.f32.mrf.mxu0
        %v4507 = vadd.f32 0.0, %v4506
        %4508 = vmatmul.f32.gmra.mxu0 %v3197
        %v4509 = vpop.f32.mrf.mxu0
        %v4510 = vadd.f32 0.0, %v4509
        %4511 = vmatmul.f32.gmra.mxu0 %v3198
        %v4512 = vpop.f32.mrf.mxu0
        %v4513 = vadd.f32 0.0, %v4512
        %4514 = vmatmul.f32.gmra.mxu0 %v3199
        %v4515 = vpop.f32.mrf.mxu0
        %v4516 = vadd.f32 0.0, %v4515
        %4517 = vmatmul.f32.gmra.mxu0 %v3200
        %v4518 = vpop.f32.mrf.mxu0
        %v4519 = vadd.f32 0.0, %v4518
        %4520 = vmatmul.f32.gmra.mxu0 %v3201
        %v4521 = vpop.f32.mrf.mxu0
        %v4522 = vadd.f32 0.0, %v4521
        %4523 = vmatmul.f32.gmra.mxu0 %v3202
        %v4524 = vpop.f32.mrf.mxu0
        %v4525 = vadd.f32 0.0, %v4524
        %4526 = vmatmul.f32.gmra.mxu0 %v3203
        %v4527 = vpop.f32.mrf.mxu0
        %v4528 = vadd.f32 0.0, %v4527
        %4529 = vmatmul.f32.gmra.mxu0 %v3204
        %v4530 = vpop.f32.mrf.mxu0
        %v4531 = vadd.f32 0.0, %v4530
        %4532 = vmatmul.f32.gmra.mxu0 %v3205
        %v4533 = vpop.f32.mrf.mxu0
        %v4534 = vadd.f32 0.0, %v4533
        %4535 = vmatmul.f32.gmra.mxu0 %v3206
        %v4536 = vpop.f32.mrf.mxu0
        %v4537 = vadd.f32 0.0, %v4536
        %4538 = vmatmul.f32.gmra.mxu0 %v3207
        %v4539 = vpop.f32.mrf.mxu0
        %v4540 = vadd.f32 0.0, %v4539
        %4541 = vmatmul.f32.gmra.mxu0 %v3208
        %v4542 = vpop.f32.mrf.mxu0
        %v4543 = vadd.f32 0.0, %v4542
        %4544 = vmatmul.f32.gmra.mxu0 %v3209
        %v4545 = vpop.f32.mrf.mxu0
        %v4546 = vadd.f32 0.0, %v4545
        %4547 = vmatmul.f32.gmra.mxu0 %v3210
        %v4548 = vpop.f32.mrf.mxu0
        %v4549 = vadd.f32 0.0, %v4548
        %4550 = vmatmul.f32.gmra.mxu0 %v3211
        %v4551 = vpop.f32.mrf.mxu0
        %v4552 = vadd.f32 0.0, %v4551
        %4553 = vmatmul.f32.gmra.mxu0 %v3212
        %v4554 = vpop.f32.mrf.mxu0
        %v4555 = vadd.f32 0.0, %v4554
        %4556 = vmatmul.f32.gmra.mxu0 %v3213
        %v4557 = vpop.f32.mrf.mxu0
        %v4558 = vadd.f32 0.0, %v4557
        %4559 = vmatmul.f32.gmra.mxu0 %v3214
        %v4560 = vpop.f32.mrf.mxu0
        %v4561 = vadd.f32 0.0, %v4560
        %4562 = vmatmul.f32.gmra.mxu0 %v3215
        %v4563 = vpop.f32.mrf.mxu0
        %v4564 = vadd.f32 0.0, %v4563
        %4565 = vmatmul.f32.gmra.mxu0 %v3216
        %v4566 = vpop.f32.mrf.mxu0
        %v4567 = vadd.f32 0.0, %v4566
        %4568 = vmatmul.f32.gmra.mxu0 %v3217
        %v4569 = vpop.f32.mrf.mxu0
        %v4570 = vadd.f32 0.0, %v4569
        %4571 = vmatmul.f32.gmra.mxu0 %v3218
        %v4572 = vpop.f32.mrf.mxu0
        %v4573 = vadd.f32 0.0, %v4572
        %4574 = vmatmul.f32.gmra.mxu0 %v3219
        %v4575 = vpop.f32.mrf.mxu0
        %v4576 = vadd.f32 0.0, %v4575
        %4577 = vmatmul.f32.gmra.mxu0 %v3220
        %v4578 = vpop.f32.mrf.mxu0
        %v4579 = vadd.f32 0.0, %v4578
        %4580 = vmatmul.f32.gmra.mxu0 %v3221
        %v4581 = vpop.f32.mrf.mxu0
        %v4582 = vadd.f32 0.0, %v4581
        %4583 = vmatmul.f32.gmra.mxu0 %v3222
        %v4584 = vpop.f32.mrf.mxu0
        %v4585 = vadd.f32 0.0, %v4584
        %4586 = vmatmul.f32.gmra.mxu0 %v3223
        %v4587 = vpop.f32.mrf.mxu0
        %v4588 = vadd.f32 0.0, %v4587
        %4589 = vmatmul.f32.gmra.mxu0 %v3224
        %v4590 = vpop.f32.mrf.mxu0
        %v4591 = vadd.f32 0.0, %v4590
        %4592 = vmatmul.f32.gmra.mxu0 %v3225
        %v4593 = vpop.f32.mrf.mxu0
        %v4594 = vadd.f32 0.0, %v4593
        %4595 = vmatmul.f32.gmra.mxu0 %v3226
        %v4596 = vpop.f32.mrf.mxu0
        %v4597 = vadd.f32 0.0, %v4596
        %4598 = vmatmul.f32.gmra.mxu0 %v3227
        %v4599 = vpop.f32.mrf.mxu0
        %v4600 = vadd.f32 0.0, %v4599
        %4601 = vmatmul.f32.gmra.mxu0 %v3228
        %v4602 = vpop.f32.mrf.mxu0
        %v4603 = vadd.f32 0.0, %v4602
        %4604 = vmatmul.f32.gmra.mxu0 %v3229
        %v4605 = vpop.f32.mrf.mxu0
        %v4606 = vadd.f32 0.0, %v4605
        %4607 = vmatmul.f32.gmra.mxu0 %v3230
        %v4608 = vpop.f32.mrf.mxu0
        %v4609 = vadd.f32 0.0, %v4608
        %4610 = vmatmul.f32.gmra.mxu0 %v3231
        %v4611 = vpop.f32.mrf.mxu0
        %v4612 = vadd.f32 0.0, %v4611
        %4613 = vmatmul.f32.gmra.mxu0 %v3232
        %v4614 = vpop.f32.mrf.mxu0
        %v4615 = vadd.f32 0.0, %v4614
        %4616 = vmatmul.f32.gmra.mxu0 %v3233
        %v4617 = vpop.f32.mrf.mxu0
        %v4618 = vadd.f32 0.0, %v4617
        %4619 = vmatmul.f32.gmra.mxu0 %v3234
        %v4620 = vpop.f32.mrf.mxu0
        %v4621 = vadd.f32 0.0, %v4620
        %4622 = vmatmul.f32.gmra.mxu0 %v3235
        %v4623 = vpop.f32.mrf.mxu0
        %v4624 = vadd.f32 0.0, %v4623
        %4625 = vmatmul.f32.gmra.mxu0 %v3236
        %v4626 = vpop.f32.mrf.mxu0
        %v4627 = vadd.f32 0.0, %v4626
        %4628 = vdwg.mxu0
        %v4629 = vrot.slane %v4507, 4
        %v4630 = vrot.slane %v4510, 4
        %v4631 = vrot.slane %v4513, 4
        %v4632 = vrot.slane %v4516, 4
        %v4633 = vrot.slane %v4519, 4
        %v4634 = vrot.slane %v4522, 4
        %v4635 = vrot.slane %v4525, 4
        %v4636 = vrot.slane %v4528, 4
        %v4637 = vrot.slane %v4531, 4
        %v4638 = vrot.slane %v4534, 4
        %v4639 = vrot.slane %v4537, 4
        %v4640 = vrot.slane %v4540, 4
        %v4641 = vrot.slane %v4543, 4
        %v4642 = vrot.slane %v4546, 4
        %v4643 = vrot.slane %v4549, 4
        %v4644 = vrot.slane %v4552, 4
        %v4645 = vrot.slane %v4555, 4
        %v4646 = vrot.slane %v4558, 4
        %v4647 = vrot.slane %v4561, 4
        %v4648 = vrot.slane %v4564, 4
        %v4649 = vrot.slane %v4567, 4
        %v4650 = vrot.slane %v4570, 4
        %v4651 = vrot.slane %v4573, 4
        %v4652 = vrot.slane %v4576, 4
        %v4653 = vrot.slane %v4579, 4
        %v4654 = vrot.slane %v4582, 4
        %v4655 = vrot.slane %v4585, 4
        %v4656 = vrot.slane %v4588, 4
        %v4657 = vrot.slane %v4591, 4
        %v4658 = vrot.slane %v4594, 4
        %v4659 = vrot.slane %v4597, 4
        %v4660 = vrot.slane %v4600, 4
        %v4661 = vrot.slane %v4603, 4
        %v4662 = vrot.slane %v4606, 4
        %v4663 = vrot.slane %v4609, 4
        %v4664 = vrot.slane %v4612, 4
        %v4665 = vrot.slane %v4615, 4
        %v4666 = vrot.slane %v4618, 4
        %v4667 = vrot.slane %v4621, 4
        %v4668 = vrot.slane %v4624, 4
        %v4669 = vrot.slane %v4627, 4
        %v4670 = vsel %vm1855, %v4668, %v4669
        %v4671 = vsel %vm1855, %v4667, %v4668
        %v4672 = vsel %vm1855, %v4666, %v4667
        %v4673 = vsel %vm1855, %v4665, %v4666
        %v4674 = vsel %vm1855, %v4664, %v4665
        %v4675 = vsel %vm1855, %v4663, %v4664
        %v4676 = vsel %vm1855, %v4662, %v4663
        %v4677 = vsel %vm1855, %v4661, %v4662
        %v4678 = vsel %vm1855, %v4660, %v4661
        %v4679 = vsel %vm1855, %v4659, %v4660
        %v4680 = vsel %vm1855, %v4658, %v4659
        %v4681 = vsel %vm1855, %v4657, %v4658
        %v4682 = vsel %vm1855, %v4656, %v4657
        %v4683 = vsel %vm1855, %v4655, %v4656
        %v4684 = vsel %vm1855, %v4654, %v4655
        %v4685 = vsel %vm1855, %v4653, %v4654
        %v4686 = vsel %vm1855, %v4652, %v4653
        %v4687 = vsel %vm1855, %v4651, %v4652
        %v4688 = vsel %vm1855, %v4650, %v4651
        %v4689 = vsel %vm1855, %v4649, %v4650
        %v4690 = vsel %vm1855, %v4648, %v4649
        %v4691 = vsel %vm1855, %v4647, %v4648
        %v4692 = vsel %vm1855, %v4646, %v4647
        %v4693 = vsel %vm1855, %v4645, %v4646
        %v4694 = vsel %vm1855, %v4644, %v4645
        %v4695 = vsel %vm1855, %v4643, %v4644
        %v4696 = vsel %vm1855, %v4642, %v4643
        %v4697 = vsel %vm1855, %v4641, %v4642
        %v4698 = vsel %vm1855, %v4640, %v4641
        %v4699 = vsel %vm1855, %v4639, %v4640
        %v4700 = vsel %vm1855, %v4638, %v4639
        %v4701 = vsel %vm1855, %v4637, %v4638
        %v4702 = vsel %vm1855, %v4636, %v4637
        %v4703 = vsel %vm1855, %v4635, %v4636
        %v4704 = vsel %vm1855, %v4634, %v4635
        %v4705 = vsel %vm1855, %v4633, %v4634
        %v4706 = vsel %vm1855, %v4632, %v4633
        %v4707 = vsel %vm1855, %v4631, %v4632
        %v4708 = vsel %vm1855, %v4630, %v4631
        %v4709 = vsel %vm1855, %v4629, %v4630
        %v4710 = vsel %vm1855, %v4669, %v4629
        %v4711 = vadd.f32 %v4431, %v4707
        %v4712 = vadd.f32 %v4432, %v4706
        %v4713 = vadd.f32 %v4433, %v4705
        %v4714 = vadd.f32 %v4434, %v4704
        %v4715 = vadd.f32 %v4435, %v4703
        %v4716 = vadd.f32 %v4436, %v4702
        %v4717 = vadd.f32 %v4437, %v4701
        %v4718 = vadd.f32 %v4438, %v4700
        %v4719 = vadd.f32 %v4439, %v4699
        %v4720 = vadd.f32 %v4440, %v4698
        %v4721 = vadd.f32 %v4441, %v4697
        %v4722 = vadd.f32 %v4442, %v4696
        %v4723 = vadd.f32 %v4443, %v4695
        %v4724 = vadd.f32 %v4444, %v4694
        %v4725 = vadd.f32 %v4445, %v4693
        %v4726 = vadd.f32 %v4446, %v4692
        %v4727 = vadd.f32 %v4447, %v4691
        %v4728 = vadd.f32 %v4448, %v4690
        %v4729 = vadd.f32 %v4449, %v4689
        %v4730 = vadd.f32 %v4450, %v4688
        %v4731 = vadd.f32 %v4451, %v4687
        %v4732 = vadd.f32 %v4452, %v4686
        %v4733 = vadd.f32 %v4453, %v4685
        %v4734 = vadd.f32 %v4454, %v4684
        %v4735 = vadd.f32 %v4455, %v4683
        %v4736 = vadd.f32 %v4456, %v4682
        %v4737 = vadd.f32 %v4457, %v4681
        %v4738 = vadd.f32 %v4458, %v4680
        %v4739 = vadd.f32 %v4459, %v4679
        %v4740 = vadd.f32 %v4460, %v4678
        %v4741 = vadd.f32 %v4461, %v4677
        %v4742 = vadd.f32 %v4462, %v4676
        %v4743 = vadd.f32 %v4463, %v4675
        %v4744 = vadd.f32 %v4464, %v4674
        %v4745 = vadd.f32 %v4465, %v4673
        %v4746 = vadd.f32 %v4466, %v4672
        %v4747 = vadd.f32 %v4467, %v4671
        %v4748 = vadd.f32 %v4468, %v4670
        %v4749 = vadd.f32 %v4469, %v4710
        %v4750 = vadd.f32 %v4470, %v4709
        %v4751 = vadd.f32 %v4471, %v4708
        %s4752 = scalar_lea.vmem [#allocation7], 768
        %v4753 = vld [vmem:[%s4752] sm:$0xff]
        %v4754 = vld [vmem:[%s4752 + $0x8] sm:$0xff]
        %v4755 = vld [vmem:[%s4752 + $0x10] sm:$0xff]
        %v4756 = vld [vmem:[%s4752 + $0x18] sm:$0xff]
        %v4757 = vld [vmem:[%s4752 + $0x20] sm:$0xff]
        %v4758 = vld [vmem:[%s4752 + $0x28] sm:$0xff]
        %v4759 = vld [vmem:[%s4752 + $0x30] sm:$0xff]
        %v4760 = vld [vmem:[%s4752 + $0x38] sm:$0xff]
        %v4761 = vld [vmem:[%s4752 + $0x40] sm:$0xff]
        %v4762 = vld [vmem:[%s4752 + $0x48] sm:$0xff]
        %v4763 = vld [vmem:[%s4752 + $0x50] sm:$0xff]
        %v4764 = vld [vmem:[%s4752 + $0x58] sm:$0xff]
        %v4765 = vld [vmem:[%s4752 + $0x60] sm:$0xff]
        %v4766 = vld [vmem:[%s4752 + $0x68] sm:$0xff]
        %v4767 = vld [vmem:[%s4752 + $0x70] sm:$0xff]
        %v4768 = vld [vmem:[%s4752 + $0x78] sm:$0xff]
        %4769 = vmatpush.msra.mxu0 %v4768
        %4770 = vmatpush.msra.mxu0 %v4767
        %4771 = vmatpush.msra.mxu0 %v4766
        %4772 = vmatpush.msra.mxu0 %v4765
        %4773 = vmatpush.msra.mxu0 %v4764
        %4774 = vmatpush.msra.mxu0 %v4763
        %4775 = vmatpush.msra.mxu0 %v4762
        %4776 = vmatpush.msra.mxu0 %v4761
        %4777 = vmatpush.msra.mxu0 %v4760
        %4778 = vmatpush.msra.mxu0 %v4759
        %4779 = vmatpush.msra.mxu0 %v4758
        %4780 = vmatpush.msra.mxu0 %v4757
        %4781 = vmatpush.msra.mxu0 %v4756
        %4782 = vmatpush.msra.mxu0 %v4755
        %4783 = vmatpush.msra.mxu0 %v4754
        %4784 = vmatpush.msra.mxu0 %v4753
        %4785 = vmatmul.f32.gmra.mxu0 %v3196
        %v4786 = vpop.f32.mrf.mxu0
        %v4787 = vadd.f32 0.0, %v4786
        %4788 = vmatmul.f32.gmra.mxu0 %v3197
        %v4789 = vpop.f32.mrf.mxu0
        %v4790 = vadd.f32 0.0, %v4789
        %4791 = vmatmul.f32.gmra.mxu0 %v3198
        %v4792 = vpop.f32.mrf.mxu0
        %v4793 = vadd.f32 0.0, %v4792
        %4794 = vmatmul.f32.gmra.mxu0 %v3199
        %v4795 = vpop.f32.mrf.mxu0
        %v4796 = vadd.f32 0.0, %v4795
        %4797 = vmatmul.f32.gmra.mxu0 %v3200
        %v4798 = vpop.f32.mrf.mxu0
        %v4799 = vadd.f32 0.0, %v4798
        %4800 = vmatmul.f32.gmra.mxu0 %v3201
        %v4801 = vpop.f32.mrf.mxu0
        %v4802 = vadd.f32 0.0, %v4801
        %4803 = vmatmul.f32.gmra.mxu0 %v3202
        %v4804 = vpop.f32.mrf.mxu0
        %v4805 = vadd.f32 0.0, %v4804
        %4806 = vmatmul.f32.gmra.mxu0 %v3203
        %v4807 = vpop.f32.mrf.mxu0
        %v4808 = vadd.f32 0.0, %v4807
        %4809 = vmatmul.f32.gmra.mxu0 %v3204
        %v4810 = vpop.f32.mrf.mxu0
        %v4811 = vadd.f32 0.0, %v4810
        %4812 = vmatmul.f32.gmra.mxu0 %v3205
        %v4813 = vpop.f32.mrf.mxu0
        %v4814 = vadd.f32 0.0, %v4813
        %4815 = vmatmul.f32.gmra.mxu0 %v3206
        %v4816 = vpop.f32.mrf.mxu0
        %v4817 = vadd.f32 0.0, %v4816
        %4818 = vmatmul.f32.gmra.mxu0 %v3207
        %v4819 = vpop.f32.mrf.mxu0
        %v4820 = vadd.f32 0.0, %v4819
        %4821 = vmatmul.f32.gmra.mxu0 %v3208
        %v4822 = vpop.f32.mrf.mxu0
        %v4823 = vadd.f32 0.0, %v4822
        %4824 = vmatmul.f32.gmra.mxu0 %v3209
        %v4825 = vpop.f32.mrf.mxu0
        %v4826 = vadd.f32 0.0, %v4825
        %4827 = vmatmul.f32.gmra.mxu0 %v3210
        %v4828 = vpop.f32.mrf.mxu0
        %v4829 = vadd.f32 0.0, %v4828
        %4830 = vmatmul.f32.gmra.mxu0 %v3211
        %v4831 = vpop.f32.mrf.mxu0
        %v4832 = vadd.f32 0.0, %v4831
        %4833 = vmatmul.f32.gmra.mxu0 %v3212
        %v4834 = vpop.f32.mrf.mxu0
        %v4835 = vadd.f32 0.0, %v4834
        %4836 = vmatmul.f32.gmra.mxu0 %v3213
        %v4837 = vpop.f32.mrf.mxu0
        %v4838 = vadd.f32 0.0, %v4837
        %4839 = vmatmul.f32.gmra.mxu0 %v3214
        %v4840 = vpop.f32.mrf.mxu0
        %v4841 = vadd.f32 0.0, %v4840
        %4842 = vmatmul.f32.gmra.mxu0 %v3215
        %v4843 = vpop.f32.mrf.mxu0
        %v4844 = vadd.f32 0.0, %v4843
        %4845 = vmatmul.f32.gmra.mxu0 %v3216
        %v4846 = vpop.f32.mrf.mxu0
        %v4847 = vadd.f32 0.0, %v4846
        %4848 = vmatmul.f32.gmra.mxu0 %v3217
        %v4849 = vpop.f32.mrf.mxu0
        %v4850 = vadd.f32 0.0, %v4849
        %4851 = vmatmul.f32.gmra.mxu0 %v3218
        %v4852 = vpop.f32.mrf.mxu0
        %v4853 = vadd.f32 0.0, %v4852
        %4854 = vmatmul.f32.gmra.mxu0 %v3219
        %v4855 = vpop.f32.mrf.mxu0
        %v4856 = vadd.f32 0.0, %v4855
        %4857 = vmatmul.f32.gmra.mxu0 %v3220
        %v4858 = vpop.f32.mrf.mxu0
        %v4859 = vadd.f32 0.0, %v4858
        %4860 = vmatmul.f32.gmra.mxu0 %v3221
        %v4861 = vpop.f32.mrf.mxu0
        %v4862 = vadd.f32 0.0, %v4861
        %4863 = vmatmul.f32.gmra.mxu0 %v3222
        %v4864 = vpop.f32.mrf.mxu0
        %v4865 = vadd.f32 0.0, %v4864
        %4866 = vmatmul.f32.gmra.mxu0 %v3223
        %v4867 = vpop.f32.mrf.mxu0
        %v4868 = vadd.f32 0.0, %v4867
        %4869 = vmatmul.f32.gmra.mxu0 %v3224
        %v4870 = vpop.f32.mrf.mxu0
        %v4871 = vadd.f32 0.0, %v4870
        %4872 = vmatmul.f32.gmra.mxu0 %v3225
        %v4873 = vpop.f32.mrf.mxu0
        %v4874 = vadd.f32 0.0, %v4873
        %4875 = vmatmul.f32.gmra.mxu0 %v3226
        %v4876 = vpop.f32.mrf.mxu0
        %v4877 = vadd.f32 0.0, %v4876
        %4878 = vmatmul.f32.gmra.mxu0 %v3227
        %v4879 = vpop.f32.mrf.mxu0
        %v4880 = vadd.f32 0.0, %v4879
        %4881 = vmatmul.f32.gmra.mxu0 %v3228
        %v4882 = vpop.f32.mrf.mxu0
        %v4883 = vadd.f32 0.0, %v4882
        %4884 = vmatmul.f32.gmra.mxu0 %v3229
        %v4885 = vpop.f32.mrf.mxu0
        %v4886 = vadd.f32 0.0, %v4885
        %4887 = vmatmul.f32.gmra.mxu0 %v3230
        %v4888 = vpop.f32.mrf.mxu0
        %v4889 = vadd.f32 0.0, %v4888
        %4890 = vmatmul.f32.gmra.mxu0 %v3231
        %v4891 = vpop.f32.mrf.mxu0
        %v4892 = vadd.f32 0.0, %v4891
        %4893 = vmatmul.f32.gmra.mxu0 %v3232
        %v4894 = vpop.f32.mrf.mxu0
        %v4895 = vadd.f32 0.0, %v4894
        %4896 = vmatmul.f32.gmra.mxu0 %v3233
        %v4897 = vpop.f32.mrf.mxu0
        %v4898 = vadd.f32 0.0, %v4897
        %4899 = vmatmul.f32.gmra.mxu0 %v3234
        %v4900 = vpop.f32.mrf.mxu0
        %v4901 = vadd.f32 0.0, %v4900
        %4902 = vmatmul.f32.gmra.mxu0 %v3235
        %v4903 = vpop.f32.mrf.mxu0
        %v4904 = vadd.f32 0.0, %v4903
        %4905 = vmatmul.f32.gmra.mxu0 %v3236
        %v4906 = vpop.f32.mrf.mxu0
        %v4907 = vadd.f32 0.0, %v4906
        %4908 = vdwg.mxu0
        %v4909 = vrot.slane %v4787, 4
        %v4910 = vrot.slane %v4790, 4
        %v4911 = vrot.slane %v4793, 4
        %v4912 = vrot.slane %v4796, 4
        %v4913 = vrot.slane %v4799, 4
        %v4914 = vrot.slane %v4802, 4
        %v4915 = vrot.slane %v4805, 4
        %v4916 = vrot.slane %v4808, 4
        %v4917 = vrot.slane %v4811, 4
        %v4918 = vrot.slane %v4814, 4
        %v4919 = vrot.slane %v4817, 4
        %v4920 = vrot.slane %v4820, 4
        %v4921 = vrot.slane %v4823, 4
        %v4922 = vrot.slane %v4826, 4
        %v4923 = vrot.slane %v4829, 4
        %v4924 = vrot.slane %v4832, 4
        %v4925 = vrot.slane %v4835, 4
        %v4926 = vrot.slane %v4838, 4
        %v4927 = vrot.slane %v4841, 4
        %v4928 = vrot.slane %v4844, 4
        %v4929 = vrot.slane %v4847, 4
        %v4930 = vrot.slane %v4850, 4
        %v4931 = vrot.slane %v4853, 4
        %v4932 = vrot.slane %v4856, 4
        %v4933 = vrot.slane %v4859, 4
        %v4934 = vrot.slane %v4862, 4
        %v4935 = vrot.slane %v4865, 4
        %v4936 = vrot.slane %v4868, 4
        %v4937 = vrot.slane %v4871, 4
        %v4938 = vrot.slane %v4874, 4
        %v4939 = vrot.slane %v4877, 4
        %v4940 = vrot.slane %v4880, 4
        %v4941 = vrot.slane %v4883, 4
        %v4942 = vrot.slane %v4886, 4
        %v4943 = vrot.slane %v4889, 4
        %v4944 = vrot.slane %v4892, 4
        %v4945 = vrot.slane %v4895, 4
        %v4946 = vrot.slane %v4898, 4
        %v4947 = vrot.slane %v4901, 4
        %v4948 = vrot.slane %v4904, 4
        %v4949 = vrot.slane %v4907, 4
        %v4950 = vsel %vm1855, %v4948, %v4949
        %v4951 = vsel %vm1855, %v4947, %v4948
        %v4952 = vsel %vm1855, %v4946, %v4947
        %v4953 = vsel %vm1855, %v4945, %v4946
        %v4954 = vsel %vm1855, %v4944, %v4945
        %v4955 = vsel %vm1855, %v4943, %v4944
        %v4956 = vsel %vm1855, %v4942, %v4943
        %v4957 = vsel %vm1855, %v4941, %v4942
        %v4958 = vsel %vm1855, %v4940, %v4941
        %v4959 = vsel %vm1855, %v4939, %v4940
        %v4960 = vsel %vm1855, %v4938, %v4939
        %v4961 = vsel %vm1855, %v4937, %v4938
        %v4962 = vsel %vm1855, %v4936, %v4937
        %v4963 = vsel %vm1855, %v4935, %v4936
        %v4964 = vsel %vm1855, %v4934, %v4935
        %v4965 = vsel %vm1855, %v4933, %v4934
        %v4966 = vsel %vm1855, %v4932, %v4933
        %v4967 = vsel %vm1855, %v4931, %v4932
        %v4968 = vsel %vm1855, %v4930, %v4931
        %v4969 = vsel %vm1855, %v4929, %v4930
        %v4970 = vsel %vm1855, %v4928, %v4929
        %v4971 = vsel %vm1855, %v4927, %v4928
        %v4972 = vsel %vm1855, %v4926, %v4927
        %v4973 = vsel %vm1855, %v4925, %v4926
        %v4974 = vsel %vm1855, %v4924, %v4925
        %v4975 = vsel %vm1855, %v4923, %v4924
        %v4976 = vsel %vm1855, %v4922, %v4923
        %v4977 = vsel %vm1855, %v4921, %v4922
        %v4978 = vsel %vm1855, %v4920, %v4921
        %v4979 = vsel %vm1855, %v4919, %v4920
        %v4980 = vsel %vm1855, %v4918, %v4919
        %v4981 = vsel %vm1855, %v4917, %v4918
        %v4982 = vsel %vm1855, %v4916, %v4917
        %v4983 = vsel %vm1855, %v4915, %v4916
        %v4984 = vsel %vm1855, %v4914, %v4915
        %v4985 = vsel %vm1855, %v4913, %v4914
        %v4986 = vsel %vm1855, %v4912, %v4913
        %v4987 = vsel %vm1855, %v4911, %v4912
        %v4988 = vsel %vm1855, %v4910, %v4911
        %v4989 = vsel %vm1855, %v4909, %v4910
        %v4990 = vsel %vm1855, %v4949, %v4909
        %v4991 = vadd.f32 %v4711, %v4985
        %v4992 = vadd.f32 %v4712, %v4984
        %v4993 = vadd.f32 %v4713, %v4983
        %v4994 = vadd.f32 %v4714, %v4982
        %v4995 = vadd.f32 %v4715, %v4981
        %v4996 = vadd.f32 %v4716, %v4980
        %v4997 = vadd.f32 %v4717, %v4979
        %v4998 = vadd.f32 %v4718, %v4978
        %v4999 = vadd.f32 %v4719, %v4977
        %v5000 = vadd.f32 %v4720, %v4976
        %v5001 = vadd.f32 %v4721, %v4975
        %v5002 = vadd.f32 %v4722, %v4974
        %v5003 = vadd.f32 %v4723, %v4973
        %v5004 = vadd.f32 %v4724, %v4972
        %v5005 = vadd.f32 %v4725, %v4971
        %v5006 = vadd.f32 %v4726, %v4970
        %v5007 = vadd.f32 %v4727, %v4969
        %v5008 = vadd.f32 %v4728, %v4968
        %v5009 = vadd.f32 %v4729, %v4967
        %v5010 = vadd.f32 %v4730, %v4966
        %v5011 = vadd.f32 %v4731, %v4965
        %v5012 = vadd.f32 %v4732, %v4964
        %v5013 = vadd.f32 %v4733, %v4963
        %v5014 = vadd.f32 %v4734, %v4962
        %v5015 = vadd.f32 %v4735, %v4961
        %v5016 = vadd.f32 %v4736, %v4960
        %v5017 = vadd.f32 %v4737, %v4959
        %v5018 = vadd.f32 %v4738, %v4958
        %v5019 = vadd.f32 %v4739, %v4957
        %v5020 = vadd.f32 %v4740, %v4956
        %v5021 = vadd.f32 %v4741, %v4955
        %v5022 = vadd.f32 %v4742, %v4954
        %v5023 = vadd.f32 %v4743, %v4953
        %v5024 = vadd.f32 %v4744, %v4952
        %v5025 = vadd.f32 %v4745, %v4951
        %v5026 = vadd.f32 %v4746, %v4950
        %v5027 = vadd.f32 %v4747, %v4990
        %v5028 = vadd.f32 %v4748, %v4989
        %v5029 = vadd.f32 %v4749, %v4988
        %v5030 = vadd.f32 %v4750, %v4987
        %v5031 = vadd.f32 %v4751, %v4986
        %s5032 = scalar_lea.vmem [#allocation7], 896
        %v5033 = vld [vmem:[%s5032] sm:$0xff]
        %v5034 = vld [vmem:[%s5032 + $0x8] sm:$0xff]
        %v5035 = vld [vmem:[%s5032 + $0x10] sm:$0xff]
        %v5036 = vld [vmem:[%s5032 + $0x18] sm:$0xff]
        %v5037 = vld [vmem:[%s5032 + $0x20] sm:$0xff]
        %v5038 = vld [vmem:[%s5032 + $0x28] sm:$0xff]
        %v5039 = vld [vmem:[%s5032 + $0x30] sm:$0xff]
        %v5040 = vld [vmem:[%s5032 + $0x38] sm:$0xff]
        %v5041 = vld [vmem:[%s5032 + $0x40] sm:$0xff]
        %v5042 = vld [vmem:[%s5032 + $0x48] sm:$0xff]
        %v5043 = vld [vmem:[%s5032 + $0x50] sm:$0xff]
        %v5044 = vld [vmem:[%s5032 + $0x58] sm:$0xff]
        %v5045 = vld [vmem:[%s5032 + $0x60] sm:$0xff]
        %v5046 = vld [vmem:[%s5032 + $0x68] sm:$0xff]
        %v5047 = vld [vmem:[%s5032 + $0x70] sm:$0xff]
        %v5048 = vld [vmem:[%s5032 + $0x78] sm:$0xff]
        %5049 = vmatpush.msra.mxu0 %v5048
        %5050 = vmatpush.msra.mxu0 %v5047
        %5051 = vmatpush.msra.mxu0 %v5046
        %5052 = vmatpush.msra.mxu0 %v5045
        %5053 = vmatpush.msra.mxu0 %v5044
        %5054 = vmatpush.msra.mxu0 %v5043
        %5055 = vmatpush.msra.mxu0 %v5042
        %5056 = vmatpush.msra.mxu0 %v5041
        %5057 = vmatpush.msra.mxu0 %v5040
        %5058 = vmatpush.msra.mxu0 %v5039
        %5059 = vmatpush.msra.mxu0 %v5038
        %5060 = vmatpush.msra.mxu0 %v5037
        %5061 = vmatpush.msra.mxu0 %v5036
        %5062 = vmatpush.msra.mxu0 %v5035
        %5063 = vmatpush.msra.mxu0 %v5034
        %5064 = vmatpush.msra.mxu0 %v5033
        %5065 = vmatmul.f32.gmra.mxu0 %v3196
        %v5066 = vpop.f32.mrf.mxu0
        %v5067 = vadd.f32 0.0, %v5066
        %5068 = vmatmul.f32.gmra.mxu0 %v3197
        %v5069 = vpop.f32.mrf.mxu0
        %v5070 = vadd.f32 0.0, %v5069
        %5071 = vmatmul.f32.gmra.mxu0 %v3198
        %v5072 = vpop.f32.mrf.mxu0
        %v5073 = vadd.f32 0.0, %v5072
        %5074 = vmatmul.f32.gmra.mxu0 %v3199
        %v5075 = vpop.f32.mrf.mxu0
        %v5076 = vadd.f32 0.0, %v5075
        %5077 = vmatmul.f32.gmra.mxu0 %v3200
        %v5078 = vpop.f32.mrf.mxu0
        %v5079 = vadd.f32 0.0, %v5078
        %5080 = vmatmul.f32.gmra.mxu0 %v3201
        %v5081 = vpop.f32.mrf.mxu0
        %v5082 = vadd.f32 0.0, %v5081
        %5083 = vmatmul.f32.gmra.mxu0 %v3202
        %v5084 = vpop.f32.mrf.mxu0
        %v5085 = vadd.f32 0.0, %v5084
        %5086 = vmatmul.f32.gmra.mxu0 %v3203
        %v5087 = vpop.f32.mrf.mxu0
        %v5088 = vadd.f32 0.0, %v5087
        %5089 = vmatmul.f32.gmra.mxu0 %v3204
        %v5090 = vpop.f32.mrf.mxu0
        %v5091 = vadd.f32 0.0, %v5090
        %5092 = vmatmul.f32.gmra.mxu0 %v3205
        %v5093 = vpop.f32.mrf.mxu0
        %v5094 = vadd.f32 0.0, %v5093
        %5095 = vmatmul.f32.gmra.mxu0 %v3206
        %v5096 = vpop.f32.mrf.mxu0
        %v5097 = vadd.f32 0.0, %v5096
        %5098 = vmatmul.f32.gmra.mxu0 %v3207
        %v5099 = vpop.f32.mrf.mxu0
        %v5100 = vadd.f32 0.0, %v5099
        %5101 = vmatmul.f32.gmra.mxu0 %v3208
        %v5102 = vpop.f32.mrf.mxu0
        %v5103 = vadd.f32 0.0, %v5102
        %5104 = vmatmul.f32.gmra.mxu0 %v3209
        %v5105 = vpop.f32.mrf.mxu0
        %v5106 = vadd.f32 0.0, %v5105
        %5107 = vmatmul.f32.gmra.mxu0 %v3210
        %v5108 = vpop.f32.mrf.mxu0
        %v5109 = vadd.f32 0.0, %v5108
        %5110 = vmatmul.f32.gmra.mxu0 %v3211
        %v5111 = vpop.f32.mrf.mxu0
        %v5112 = vadd.f32 0.0, %v5111
        %5113 = vmatmul.f32.gmra.mxu0 %v3212
        %v5114 = vpop.f32.mrf.mxu0
        %v5115 = vadd.f32 0.0, %v5114
        %5116 = vmatmul.f32.gmra.mxu0 %v3213
        %v5117 = vpop.f32.mrf.mxu0
        %v5118 = vadd.f32 0.0, %v5117
        %5119 = vmatmul.f32.gmra.mxu0 %v3214
        %v5120 = vpop.f32.mrf.mxu0
        %v5121 = vadd.f32 0.0, %v5120
        %5122 = vmatmul.f32.gmra.mxu0 %v3215
        %v5123 = vpop.f32.mrf.mxu0
        %v5124 = vadd.f32 0.0, %v5123
        %5125 = vmatmul.f32.gmra.mxu0 %v3216
        %v5126 = vpop.f32.mrf.mxu0
        %v5127 = vadd.f32 0.0, %v5126
        %5128 = vmatmul.f32.gmra.mxu0 %v3217
        %v5129 = vpop.f32.mrf.mxu0
        %v5130 = vadd.f32 0.0, %v5129
        %5131 = vmatmul.f32.gmra.mxu0 %v3218
        %v5132 = vpop.f32.mrf.mxu0
        %v5133 = vadd.f32 0.0, %v5132
        %5134 = vmatmul.f32.gmra.mxu0 %v3219
        %v5135 = vpop.f32.mrf.mxu0
        %v5136 = vadd.f32 0.0, %v5135
        %5137 = vmatmul.f32.gmra.mxu0 %v3220
        %v5138 = vpop.f32.mrf.mxu0
        %v5139 = vadd.f32 0.0, %v5138
        %5140 = vmatmul.f32.gmra.mxu0 %v3221
        %v5141 = vpop.f32.mrf.mxu0
        %v5142 = vadd.f32 0.0, %v5141
        %5143 = vmatmul.f32.gmra.mxu0 %v3222
        %v5144 = vpop.f32.mrf.mxu0
        %v5145 = vadd.f32 0.0, %v5144
        %5146 = vmatmul.f32.gmra.mxu0 %v3223
        %v5147 = vpop.f32.mrf.mxu0
        %v5148 = vadd.f32 0.0, %v5147
        %5149 = vmatmul.f32.gmra.mxu0 %v3224
        %v5150 = vpop.f32.mrf.mxu0
        %v5151 = vadd.f32 0.0, %v5150
        %5152 = vmatmul.f32.gmra.mxu0 %v3225
        %v5153 = vpop.f32.mrf.mxu0
        %v5154 = vadd.f32 0.0, %v5153
        %5155 = vmatmul.f32.gmra.mxu0 %v3226
        %v5156 = vpop.f32.mrf.mxu0
        %v5157 = vadd.f32 0.0, %v5156
        %5158 = vmatmul.f32.gmra.mxu0 %v3227
        %v5159 = vpop.f32.mrf.mxu0
        %v5160 = vadd.f32 0.0, %v5159
        %5161 = vmatmul.f32.gmra.mxu0 %v3228
        %v5162 = vpop.f32.mrf.mxu0
        %v5163 = vadd.f32 0.0, %v5162
        %5164 = vmatmul.f32.gmra.mxu0 %v3229
        %v5165 = vpop.f32.mrf.mxu0
        %v5166 = vadd.f32 0.0, %v5165
        %5167 = vmatmul.f32.gmra.mxu0 %v3230
        %v5168 = vpop.f32.mrf.mxu0
        %v5169 = vadd.f32 0.0, %v5168
        %5170 = vmatmul.f32.gmra.mxu0 %v3231
        %v5171 = vpop.f32.mrf.mxu0
        %v5172 = vadd.f32 0.0, %v5171
        %5173 = vmatmul.f32.gmra.mxu0 %v3232
        %v5174 = vpop.f32.mrf.mxu0
        %v5175 = vadd.f32 0.0, %v5174
        %5176 = vmatmul.f32.gmra.mxu0 %v3233
        %v5177 = vpop.f32.mrf.mxu0
        %v5178 = vadd.f32 0.0, %v5177
        %5179 = vmatmul.f32.gmra.mxu0 %v3234
        %v5180 = vpop.f32.mrf.mxu0
        %v5181 = vadd.f32 0.0, %v5180
        %5182 = vmatmul.f32.gmra.mxu0 %v3235
        %v5183 = vpop.f32.mrf.mxu0
        %v5184 = vadd.f32 0.0, %v5183
        %5185 = vmatmul.f32.gmra.mxu0 %v3236
        %v5186 = vpop.f32.mrf.mxu0
        %v5187 = vadd.f32 0.0, %v5186
        %5188 = vdwg.mxu0
        %v5189 = vrot.slane %v5067, 5
        %v5190 = vrot.slane %v5070, 5
        %v5191 = vrot.slane %v5073, 5
        %v5192 = vrot.slane %v5076, 5
        %v5193 = vrot.slane %v5079, 5
        %v5194 = vrot.slane %v5082, 5
        %v5195 = vrot.slane %v5085, 5
        %v5196 = vrot.slane %v5088, 5
        %v5197 = vrot.slane %v5091, 5
        %v5198 = vrot.slane %v5094, 5
        %v5199 = vrot.slane %v5097, 5
        %v5200 = vrot.slane %v5100, 5
        %v5201 = vrot.slane %v5103, 5
        %v5202 = vrot.slane %v5106, 5
        %v5203 = vrot.slane %v5109, 5
        %v5204 = vrot.slane %v5112, 5
        %v5205 = vrot.slane %v5115, 5
        %v5206 = vrot.slane %v5118, 5
        %v5207 = vrot.slane %v5121, 5
        %v5208 = vrot.slane %v5124, 5
        %v5209 = vrot.slane %v5127, 5
        %v5210 = vrot.slane %v5130, 5
        %v5211 = vrot.slane %v5133, 5
        %v5212 = vrot.slane %v5136, 5
        %v5213 = vrot.slane %v5139, 5
        %v5214 = vrot.slane %v5142, 5
        %v5215 = vrot.slane %v5145, 5
        %v5216 = vrot.slane %v5148, 5
        %v5217 = vrot.slane %v5151, 5
        %v5218 = vrot.slane %v5154, 5
        %v5219 = vrot.slane %v5157, 5
        %v5220 = vrot.slane %v5160, 5
        %v5221 = vrot.slane %v5163, 5
        %v5222 = vrot.slane %v5166, 5
        %v5223 = vrot.slane %v5169, 5
        %v5224 = vrot.slane %v5172, 5
        %v5225 = vrot.slane %v5175, 5
        %v5226 = vrot.slane %v5178, 5
        %v5227 = vrot.slane %v5181, 5
        %v5228 = vrot.slane %v5184, 5
        %v5229 = vrot.slane %v5187, 5
        %v5230 = vsel %vm2416, %v5228, %v5229
        %v5231 = vsel %vm2416, %v5227, %v5228
        %v5232 = vsel %vm2416, %v5226, %v5227
        %v5233 = vsel %vm2416, %v5225, %v5226
        %v5234 = vsel %vm2416, %v5224, %v5225
        %v5235 = vsel %vm2416, %v5223, %v5224
        %v5236 = vsel %vm2416, %v5222, %v5223
        %v5237 = vsel %vm2416, %v5221, %v5222
        %v5238 = vsel %vm2416, %v5220, %v5221
        %v5239 = vsel %vm2416, %v5219, %v5220
        %v5240 = vsel %vm2416, %v5218, %v5219
        %v5241 = vsel %vm2416, %v5217, %v5218
        %v5242 = vsel %vm2416, %v5216, %v5217
        %v5243 = vsel %vm2416, %v5215, %v5216
        %v5244 = vsel %vm2416, %v5214, %v5215
        %v5245 = vsel %vm2416, %v5213, %v5214
        %v5246 = vsel %vm2416, %v5212, %v5213
        %v5247 = vsel %vm2416, %v5211, %v5212
        %v5248 = vsel %vm2416, %v5210, %v5211
        %v5249 = vsel %vm2416, %v5209, %v5210
        %v5250 = vsel %vm2416, %v5208, %v5209
        %v5251 = vsel %vm2416, %v5207, %v5208
        %v5252 = vsel %vm2416, %v5206, %v5207
        %v5253 = vsel %vm2416, %v5205, %v5206
        %v5254 = vsel %vm2416, %v5204, %v5205
        %v5255 = vsel %vm2416, %v5203, %v5204
        %v5256 = vsel %vm2416, %v5202, %v5203
        %v5257 = vsel %vm2416, %v5201, %v5202
        %v5258 = vsel %vm2416, %v5200, %v5201
        %v5259 = vsel %vm2416, %v5199, %v5200
        %v5260 = vsel %vm2416, %v5198, %v5199
        %v5261 = vsel %vm2416, %v5197, %v5198
        %v5262 = vsel %vm2416, %v5196, %v5197
        %v5263 = vsel %vm2416, %v5195, %v5196
        %v5264 = vsel %vm2416, %v5194, %v5195
        %v5265 = vsel %vm2416, %v5193, %v5194
        %v5266 = vsel %vm2416, %v5192, %v5193
        %v5267 = vsel %vm2416, %v5191, %v5192
        %v5268 = vsel %vm2416, %v5190, %v5191
        %v5269 = vsel %vm2416, %v5189, %v5190
        %v5270 = vsel %vm2416, %v5229, %v5189
        %v5271 = vadd.f32 %v4991, %v5265
        %v5272 = vadd.f32 %v4992, %v5264
        %v5273 = vadd.f32 %v4993, %v5263
        %v5274 = vadd.f32 %v4994, %v5262
        %v5275 = vadd.f32 %v4995, %v5261
        %v5276 = vadd.f32 %v4996, %v5260
        %v5277 = vadd.f32 %v4997, %v5259
        %v5278 = vadd.f32 %v4998, %v5258
        %v5279 = vadd.f32 %v4999, %v5257
        %v5280 = vadd.f32 %v5000, %v5256
        %v5281 = vadd.f32 %v5001, %v5255
        %v5282 = vadd.f32 %v5002, %v5254
        %v5283 = vadd.f32 %v5003, %v5253
        %v5284 = vadd.f32 %v5004, %v5252
        %v5285 = vadd.f32 %v5005, %v5251
        %v5286 = vadd.f32 %v5006, %v5250
        %v5287 = vadd.f32 %v5007, %v5249
        %v5288 = vadd.f32 %v5008, %v5248
        %v5289 = vadd.f32 %v5009, %v5247
        %v5290 = vadd.f32 %v5010, %v5246
        %v5291 = vadd.f32 %v5011, %v5245
        %v5292 = vadd.f32 %v5012, %v5244
        %v5293 = vadd.f32 %v5013, %v5243
        %v5294 = vadd.f32 %v5014, %v5242
        %v5295 = vadd.f32 %v5015, %v5241
        %v5296 = vadd.f32 %v5016, %v5240
        %v5297 = vadd.f32 %v5017, %v5239
        %v5298 = vadd.f32 %v5018, %v5238
        %v5299 = vadd.f32 %v5019, %v5237
        %v5300 = vadd.f32 %v5020, %v5236
        %v5301 = vadd.f32 %v5021, %v5235
        %v5302 = vadd.f32 %v5022, %v5234
        %v5303 = vadd.f32 %v5023, %v5233
        %v5304 = vadd.f32 %v5024, %v5232
        %v5305 = vadd.f32 %v5025, %v5231
        %v5306 = vadd.f32 %v5026, %v5230
        %v5307 = vadd.f32 %v5027, %v5270
        %v5308 = vadd.f32 %v5028, %v5269
        %v5309 = vadd.f32 %v5029, %v5268
        %v5310 = vadd.f32 %v5030, %v5267
        %v5311 = vadd.f32 %v5031, %v5266
        %s5312 = scalar_lea.vmem [#allocation7], 1024
        %v5313 = vld [vmem:[%s5312] sm:$0xff]
        %v5314 = vld [vmem:[%s5312 + $0x8] sm:$0xff]
        %v5315 = vld [vmem:[%s5312 + $0x10] sm:$0xff]
        %v5316 = vld [vmem:[%s5312 + $0x18] sm:$0xff]
        %v5317 = vld [vmem:[%s5312 + $0x20] sm:$0xff]
        %v5318 = vld [vmem:[%s5312 + $0x28] sm:$0xff]
        %v5319 = vld [vmem:[%s5312 + $0x30] sm:$0xff]
        %v5320 = vld [vmem:[%s5312 + $0x38] sm:$0xff]
        %v5321 = vld [vmem:[%s5312 + $0x40] sm:$0xff]
        %v5322 = vld [vmem:[%s5312 + $0x48] sm:$0xff]
        %v5323 = vld [vmem:[%s5312 + $0x50] sm:$0xff]
        %v5324 = vld [vmem:[%s5312 + $0x58] sm:$0xff]
        %v5325 = vld [vmem:[%s5312 + $0x60] sm:$0xff]
        %v5326 = vld [vmem:[%s5312 + $0x68] sm:$0xff]
        %v5327 = vld [vmem:[%s5312 + $0x70] sm:$0xff]
        %v5328 = vld [vmem:[%s5312 + $0x78] sm:$0xff]
        %5329 = vmatpush.msra.mxu0 %v5328
        %5330 = vmatpush.msra.mxu0 %v5327
        %5331 = vmatpush.msra.mxu0 %v5326
        %5332 = vmatpush.msra.mxu0 %v5325
        %5333 = vmatpush.msra.mxu0 %v5324
        %5334 = vmatpush.msra.mxu0 %v5323
        %5335 = vmatpush.msra.mxu0 %v5322
        %5336 = vmatpush.msra.mxu0 %v5321
        %5337 = vmatpush.msra.mxu0 %v5320
        %5338 = vmatpush.msra.mxu0 %v5319
        %5339 = vmatpush.msra.mxu0 %v5318
        %5340 = vmatpush.msra.mxu0 %v5317
        %5341 = vmatpush.msra.mxu0 %v5316
        %5342 = vmatpush.msra.mxu0 %v5315
        %5343 = vmatpush.msra.mxu0 %v5314
        %5344 = vmatpush.msra.mxu0 %v5313
        %5345 = vmatmul.f32.gmra.mxu0 %v3196
        %v5346 = vpop.f32.mrf.mxu0
        %v5347 = vadd.f32 0.0, %v5346
        %5348 = vmatmul.f32.gmra.mxu0 %v3197
        %v5349 = vpop.f32.mrf.mxu0
        %v5350 = vadd.f32 0.0, %v5349
        %5351 = vmatmul.f32.gmra.mxu0 %v3198
        %v5352 = vpop.f32.mrf.mxu0
        %v5353 = vadd.f32 0.0, %v5352
        %5354 = vmatmul.f32.gmra.mxu0 %v3199
        %v5355 = vpop.f32.mrf.mxu0
        %v5356 = vadd.f32 0.0, %v5355
        %5357 = vmatmul.f32.gmra.mxu0 %v3200
        %v5358 = vpop.f32.mrf.mxu0
        %v5359 = vadd.f32 0.0, %v5358
        %5360 = vmatmul.f32.gmra.mxu0 %v3201
        %v5361 = vpop.f32.mrf.mxu0
        %v5362 = vadd.f32 0.0, %v5361
        %5363 = vmatmul.f32.gmra.mxu0 %v3202
        %v5364 = vpop.f32.mrf.mxu0
        %v5365 = vadd.f32 0.0, %v5364
        %5366 = vmatmul.f32.gmra.mxu0 %v3203
        %v5367 = vpop.f32.mrf.mxu0
        %v5368 = vadd.f32 0.0, %v5367
        %5369 = vmatmul.f32.gmra.mxu0 %v3204
        %v5370 = vpop.f32.mrf.mxu0
        %v5371 = vadd.f32 0.0, %v5370
        %5372 = vmatmul.f32.gmra.mxu0 %v3205
        %v5373 = vpop.f32.mrf.mxu0
        %v5374 = vadd.f32 0.0, %v5373
        %5375 = vmatmul.f32.gmra.mxu0 %v3206
        %v5376 = vpop.f32.mrf.mxu0
        %v5377 = vadd.f32 0.0, %v5376
        %5378 = vmatmul.f32.gmra.mxu0 %v3207
        %v5379 = vpop.f32.mrf.mxu0
        %v5380 = vadd.f32 0.0, %v5379
        %5381 = vmatmul.f32.gmra.mxu0 %v3208
        %v5382 = vpop.f32.mrf.mxu0
        %v5383 = vadd.f32 0.0, %v5382
        %5384 = vmatmul.f32.gmra.mxu0 %v3209
        %v5385 = vpop.f32.mrf.mxu0
        %v5386 = vadd.f32 0.0, %v5385
        %5387 = vmatmul.f32.gmra.mxu0 %v3210
        %v5388 = vpop.f32.mrf.mxu0
        %v5389 = vadd.f32 0.0, %v5388
        %5390 = vmatmul.f32.gmra.mxu0 %v3211
        %v5391 = vpop.f32.mrf.mxu0
        %v5392 = vadd.f32 0.0, %v5391
        %5393 = vmatmul.f32.gmra.mxu0 %v3212
        %v5394 = vpop.f32.mrf.mxu0
        %v5395 = vadd.f32 0.0, %v5394
        %5396 = vmatmul.f32.gmra.mxu0 %v3213
        %v5397 = vpop.f32.mrf.mxu0
        %v5398 = vadd.f32 0.0, %v5397
        %5399 = vmatmul.f32.gmra.mxu0 %v3214
        %v5400 = vpop.f32.mrf.mxu0
        %v5401 = vadd.f32 0.0, %v5400
        %5402 = vmatmul.f32.gmra.mxu0 %v3215
        %v5403 = vpop.f32.mrf.mxu0
        %v5404 = vadd.f32 0.0, %v5403
        %5405 = vmatmul.f32.gmra.mxu0 %v3216
        %v5406 = vpop.f32.mrf.mxu0
        %v5407 = vadd.f32 0.0, %v5406
        %5408 = vmatmul.f32.gmra.mxu0 %v3217
        %v5409 = vpop.f32.mrf.mxu0
        %v5410 = vadd.f32 0.0, %v5409
        %5411 = vmatmul.f32.gmra.mxu0 %v3218
        %v5412 = vpop.f32.mrf.mxu0
        %v5413 = vadd.f32 0.0, %v5412
        %5414 = vmatmul.f32.gmra.mxu0 %v3219
        %v5415 = vpop.f32.mrf.mxu0
        %v5416 = vadd.f32 0.0, %v5415
        %5417 = vmatmul.f32.gmra.mxu0 %v3220
        %v5418 = vpop.f32.mrf.mxu0
        %v5419 = vadd.f32 0.0, %v5418
        %5420 = vmatmul.f32.gmra.mxu0 %v3221
        %v5421 = vpop.f32.mrf.mxu0
        %v5422 = vadd.f32 0.0, %v5421
        %5423 = vmatmul.f32.gmra.mxu0 %v3222
        %v5424 = vpop.f32.mrf.mxu0
        %v5425 = vadd.f32 0.0, %v5424
        %5426 = vmatmul.f32.gmra.mxu0 %v3223
        %v5427 = vpop.f32.mrf.mxu0
        %v5428 = vadd.f32 0.0, %v5427
        %5429 = vmatmul.f32.gmra.mxu0 %v3224
        %v5430 = vpop.f32.mrf.mxu0
        %v5431 = vadd.f32 0.0, %v5430
        %5432 = vmatmul.f32.gmra.mxu0 %v3225
        %v5433 = vpop.f32.mrf.mxu0
        %v5434 = vadd.f32 0.0, %v5433
        %5435 = vmatmul.f32.gmra.mxu0 %v3226
        %v5436 = vpop.f32.mrf.mxu0
        %v5437 = vadd.f32 0.0, %v5436
        %5438 = vmatmul.f32.gmra.mxu0 %v3227
        %v5439 = vpop.f32.mrf.mxu0
        %v5440 = vadd.f32 0.0, %v5439
        %5441 = vmatmul.f32.gmra.mxu0 %v3228
        %v5442 = vpop.f32.mrf.mxu0
        %v5443 = vadd.f32 0.0, %v5442
        %5444 = vmatmul.f32.gmra.mxu0 %v3229
        %v5445 = vpop.f32.mrf.mxu0
        %v5446 = vadd.f32 0.0, %v5445
        %5447 = vmatmul.f32.gmra.mxu0 %v3230
        %v5448 = vpop.f32.mrf.mxu0
        %v5449 = vadd.f32 0.0, %v5448
        %5450 = vmatmul.f32.gmra.mxu0 %v3231
        %v5451 = vpop.f32.mrf.mxu0
        %v5452 = vadd.f32 0.0, %v5451
        %5453 = vmatmul.f32.gmra.mxu0 %v3232
        %v5454 = vpop.f32.mrf.mxu0
        %v5455 = vadd.f32 0.0, %v5454
        %5456 = vmatmul.f32.gmra.mxu0 %v3233
        %v5457 = vpop.f32.mrf.mxu0
        %v5458 = vadd.f32 0.0, %v5457
        %5459 = vmatmul.f32.gmra.mxu0 %v3234
        %v5460 = vpop.f32.mrf.mxu0
        %v5461 = vadd.f32 0.0, %v5460
        %5462 = vmatmul.f32.gmra.mxu0 %v3235
        %v5463 = vpop.f32.mrf.mxu0
        %v5464 = vadd.f32 0.0, %v5463
        %5465 = vmatmul.f32.gmra.mxu0 %v3236
        %v5466 = vpop.f32.mrf.mxu0
        %v5467 = vadd.f32 0.0, %v5466
        %5468 = vdwg.mxu0
        %v5469 = vrot.slane %v5347, 6
        %v5470 = vrot.slane %v5350, 6
        %v5471 = vrot.slane %v5353, 6
        %v5472 = vrot.slane %v5356, 6
        %v5473 = vrot.slane %v5359, 6
        %v5474 = vrot.slane %v5362, 6
        %v5475 = vrot.slane %v5365, 6
        %v5476 = vrot.slane %v5368, 6
        %v5477 = vrot.slane %v5371, 6
        %v5478 = vrot.slane %v5374, 6
        %v5479 = vrot.slane %v5377, 6
        %v5480 = vrot.slane %v5380, 6
        %v5481 = vrot.slane %v5383, 6
        %v5482 = vrot.slane %v5386, 6
        %v5483 = vrot.slane %v5389, 6
        %v5484 = vrot.slane %v5392, 6
        %v5485 = vrot.slane %v5395, 6
        %v5486 = vrot.slane %v5398, 6
        %v5487 = vrot.slane %v5401, 6
        %v5488 = vrot.slane %v5404, 6
        %v5489 = vrot.slane %v5407, 6
        %v5490 = vrot.slane %v5410, 6
        %v5491 = vrot.slane %v5413, 6
        %v5492 = vrot.slane %v5416, 6
        %v5493 = vrot.slane %v5419, 6
        %v5494 = vrot.slane %v5422, 6
        %v5495 = vrot.slane %v5425, 6
        %v5496 = vrot.slane %v5428, 6
        %v5497 = vrot.slane %v5431, 6
        %v5498 = vrot.slane %v5434, 6
        %v5499 = vrot.slane %v5437, 6
        %v5500 = vrot.slane %v5440, 6
        %v5501 = vrot.slane %v5443, 6
        %v5502 = vrot.slane %v5446, 6
        %v5503 = vrot.slane %v5449, 6
        %v5504 = vrot.slane %v5452, 6
        %v5505 = vrot.slane %v5455, 6
        %v5506 = vrot.slane %v5458, 6
        %v5507 = vrot.slane %v5461, 6
        %v5508 = vrot.slane %v5464, 6
        %v5509 = vrot.slane %v5467, 6
        %v5510 = vsel %vm2697, %v5508, %v5509
        %v5511 = vsel %vm2697, %v5507, %v5508
        %v5512 = vsel %vm2697, %v5506, %v5507
        %v5513 = vsel %vm2697, %v5505, %v5506
        %v5514 = vsel %vm2697, %v5504, %v5505
        %v5515 = vsel %vm2697, %v5503, %v5504
        %v5516 = vsel %vm2697, %v5502, %v5503
        %v5517 = vsel %vm2697, %v5501, %v5502
        %v5518 = vsel %vm2697, %v5500, %v5501
        %v5519 = vsel %vm2697, %v5499, %v5500
        %v5520 = vsel %vm2697, %v5498, %v5499
        %v5521 = vsel %vm2697, %v5497, %v5498
        %v5522 = vsel %vm2697, %v5496, %v5497
        %v5523 = vsel %vm2697, %v5495, %v5496
        %v5524 = vsel %vm2697, %v5494, %v5495
        %v5525 = vsel %vm2697, %v5493, %v5494
        %v5526 = vsel %vm2697, %v5492, %v5493
        %v5527 = vsel %vm2697, %v5491, %v5492
        %v5528 = vsel %vm2697, %v5490, %v5491
        %v5529 = vsel %vm2697, %v5489, %v5490
        %v5530 = vsel %vm2697, %v5488, %v5489
        %v5531 = vsel %vm2697, %v5487, %v5488
        %v5532 = vsel %vm2697, %v5486, %v5487
        %v5533 = vsel %vm2697, %v5485, %v5486
        %v5534 = vsel %vm2697, %v5484, %v5485
        %v5535 = vsel %vm2697, %v5483, %v5484
        %v5536 = vsel %vm2697, %v5482, %v5483
        %v5537 = vsel %vm2697, %v5481, %v5482
        %v5538 = vsel %vm2697, %v5480, %v5481
        %v5539 = vsel %vm2697, %v5479, %v5480
        %v5540 = vsel %vm2697, %v5478, %v5479
        %v5541 = vsel %vm2697, %v5477, %v5478
        %v5542 = vsel %vm2697, %v5476, %v5477
        %v5543 = vsel %vm2697, %v5475, %v5476
        %v5544 = vsel %vm2697, %v5474, %v5475
        %v5545 = vsel %vm2697, %v5473, %v5474
        %v5546 = vsel %vm2697, %v5472, %v5473
        %v5547 = vsel %vm2697, %v5471, %v5472
        %v5548 = vsel %vm2697, %v5470, %v5471
        %v5549 = vsel %vm2697, %v5469, %v5470
        %v5550 = vsel %vm2697, %v5509, %v5469
        %v5551 = vadd.f32 %v5271, %v5545
        %v5552 = vadd.f32 %v5272, %v5544
        %v5553 = vadd.f32 %v5273, %v5543
        %v5554 = vadd.f32 %v5274, %v5542
        %v5555 = vadd.f32 %v5275, %v5541
        %v5556 = vadd.f32 %v5276, %v5540
        %v5557 = vadd.f32 %v5277, %v5539
        %v5558 = vadd.f32 %v5278, %v5538
        %v5559 = vadd.f32 %v5279, %v5537
        %v5560 = vadd.f32 %v5280, %v5536
        %v5561 = vadd.f32 %v5281, %v5535
        %v5562 = vadd.f32 %v5282, %v5534
        %v5563 = vadd.f32 %v5283, %v5533
        %v5564 = vadd.f32 %v5284, %v5532
        %v5565 = vadd.f32 %v5285, %v5531
        %v5566 = vadd.f32 %v5286, %v5530
        %v5567 = vadd.f32 %v5287, %v5529
        %v5568 = vadd.f32 %v5288, %v5528
        %v5569 = vadd.f32 %v5289, %v5527
        %v5570 = vadd.f32 %v5290, %v5526
        %v5571 = vadd.f32 %v5291, %v5525
        %v5572 = vadd.f32 %v5292, %v5524
        %v5573 = vadd.f32 %v5293, %v5523
        %v5574 = vadd.f32 %v5294, %v5522
        %v5575 = vadd.f32 %v5295, %v5521
        %v5576 = vadd.f32 %v5296, %v5520
        %v5577 = vadd.f32 %v5297, %v5519
        %v5578 = vadd.f32 %v5298, %v5518
        %v5579 = vadd.f32 %v5299, %v5517
        %v5580 = vadd.f32 %v5300, %v5516
        %v5581 = vadd.f32 %v5301, %v5515
        %v5582 = vadd.f32 %v5302, %v5514
        %v5583 = vadd.f32 %v5303, %v5513
        %v5584 = vadd.f32 %v5304, %v5512
        %v5585 = vadd.f32 %v5305, %v5511
        %v5586 = vadd.f32 %v5306, %v5510
        %v5587 = vadd.f32 %v5307, %v5550
        %v5588 = vadd.f32 %v5308, %v5549
        %v5589 = vadd.f32 %v5309, %v5548
        %v5590 = vadd.f32 %v5310, %v5547
        %v5591 = vadd.f32 %v5311, %v5546
        %v5592 = vmul.f32 %v5551, %v2781
        %v5593 = vmul.f32 %v5552, %v2781
        %v5594 = vmul.f32 %v5553, %v2781
        %v5595 = vmul.f32 %v5554, %v2781
        %v5596 = vmul.f32 %v5555, %v2781
        %v5597 = vmul.f32 %v5556, %v2781
        %v5598 = vmul.f32 %v5557, %v2781
        %v5599 = vmul.f32 %v5558, %v2781
        %v5600 = vmul.f32 %v5559, %v2781
        %v5601 = vmul.f32 %v5560, %v2781
        %v5602 = vmul.f32 %v5561, %v2781
        %v5603 = vmul.f32 %v5562, %v2781
        %v5604 = vmul.f32 %v5563, %v2781
        %v5605 = vmul.f32 %v5564, %v2781
        %v5606 = vmul.f32 %v5565, %v2781
        %v5607 = vmul.f32 %v5566, %v2781
        %v5608 = vmul.f32 %v5567, %v2781
        %v5609 = vmul.f32 %v5568, %v2781
        %v5610 = vmul.f32 %v5569, %v2781
        %v5611 = vmul.f32 %v5570, %v2781
        %v5612 = vmul.f32 %v5571, %v2781
        %v5613 = vmul.f32 %v5572, %v2781
        %v5614 = vmul.f32 %v5573, %v2781
        %v5615 = vmul.f32 %v5574, %v2781
        %v5616 = vmul.f32 %v5575, %v2781
        %v5617 = vmul.f32 %v5576, %v2781
        %v5618 = vmul.f32 %v5577, %v2781
        %v5619 = vmul.f32 %v5578, %v2781
        %v5620 = vmul.f32 %v5579, %v2781
        %v5621 = vmul.f32 %v5580, %v2781
        %v5622 = vmul.f32 %v5581, %v2781
        %v5623 = vmul.f32 %v5582, %v2781
        %v5624 = vmul.f32 %v5583, %v2781
        %v5625 = vmul.f32 %v5584, %v2781
        %v5626 = vmul.f32 %v5585, %v2781
        %v5627 = vmul.f32 %v5586, %v2781
        %v5628 = vmul.f32 %v5587, %v2781
        %v5629 = vmul.f32 %v5588, %v2781
        %v5630 = vmul.f32 %v5589, %v2781
        %v5631 = vmul.f32 %v5590, %v2781
        %v5632 = vmul.f32 %v5591, %v2781
        %v5634 = vperm.slane %v375, 0
        %v5636 = vadd.f32 %v5592, %v5634
        %v5637 = vadd.f32 %v5593, %v5634
        %v5638 = vadd.f32 %v5594, %v5634
        %v5639 = vadd.f32 %v5595, %v5634
        %v5640 = vadd.f32 %v5596, %v5634
        %v5641 = vadd.f32 %v5597, %v5634
        %v5642 = vadd.f32 %v5598, %v5634
        %v5643 = vadd.f32 %v5599, %v5634
        %v5644 = vadd.f32 %v5600, %v5634
        %v5645 = vadd.f32 %v5601, %v5634
        %v5646 = vadd.f32 %v5602, %v5634
        %v5647 = vadd.f32 %v5603, %v5634
        %v5648 = vadd.f32 %v5604, %v5634
        %v5649 = vadd.f32 %v5605, %v5634
        %v5650 = vadd.f32 %v5606, %v5634
        %v5651 = vadd.f32 %v5607, %v5634
        %v5652 = vadd.f32 %v5608, %v5634
        %v5653 = vadd.f32 %v5609, %v5634
        %v5654 = vadd.f32 %v5610, %v5634
        %v5655 = vadd.f32 %v5611, %v5634
        %v5656 = vadd.f32 %v5612, %v5634
        %v5657 = vadd.f32 %v5613, %v5634
        %v5658 = vadd.f32 %v5614, %v5634
        %v5659 = vadd.f32 %v5615, %v5634
        %v5660 = vadd.f32 %v5616, %v5634
        %v5661 = vadd.f32 %v5617, %v5634
        %v5662 = vadd.f32 %v5618, %v5634
        %v5663 = vadd.f32 %v5619, %v5634
        %v5664 = vadd.f32 %v5620, %v5634
        %v5665 = vadd.f32 %v5621, %v5634
        %v5666 = vadd.f32 %v5622, %v5634
        %v5667 = vadd.f32 %v5623, %v5634
        %v5668 = vadd.f32 %v5624, %v5634
        %v5669 = vadd.f32 %v5625, %v5634
        %v5670 = vadd.f32 %v5626, %v5634
        %v5671 = vadd.f32 %v5627, %v5634
        %v5672 = vadd.f32 %v5628, %v5634
        %v5673 = vadd.f32 %v5629, %v5634
        %v5674 = vadd.f32 %v5630, %v5634
        %v5675 = vadd.f32 %v5631, %v5634
        %v5676 = vadd.f32 %v5632, %v5634
        %v5677 = vrot.slane %v332, 3
        %v5678 = vrot.slane %v333, 3
        %v5679 = vrot.slane %v334, 3
        %v5680 = vrot.slane %v335, 3
        %v5681 = vrot.slane %v336, 3
        %v5682 = vrot.slane %v337, 3
        %v5683 = vrot.slane %v338, 3
        %v5684 = vrot.slane %v339, 3
        %v5685 = vrot.slane %v340, 3
        %v5686 = vrot.slane %v341, 3
        %v5687 = vrot.slane %v342, 3
        %v5688 = vrot.slane %v343, 3
        %v5689 = vrot.slane %v344, 3
        %v5690 = vrot.slane %v345, 3
        %v5691 = vrot.slane %v346, 3
        %v5692 = vrot.slane %v347, 3
        %v5693 = vrot.slane %v348, 3
        %v5694 = vrot.slane %v349, 3
        %v5695 = vrot.slane %v350, 3
        %v5696 = vrot.slane %v351, 3
        %v5697 = vrot.slane %v352, 3
        %v5698 = vrot.slane %v353, 3
        %v5699 = vrot.slane %v354, 3
        %v5700 = vrot.slane %v355, 3
        %v5701 = vrot.slane %v356, 3
        %v5702 = vrot.slane %v357, 3
        %v5703 = vrot.slane %v358, 3
        %v5704 = vrot.slane %v359, 3
        %v5705 = vrot.slane %v360, 3
        %v5706 = vrot.slane %v361, 3
        %v5707 = vrot.slane %v362, 3
        %v5708 = vrot.slane %v363, 3
        %v5709 = vrot.slane %v364, 3
        %v5710 = vrot.slane %v365, 3
        %v5711 = vrot.slane %v366, 3
        %v5712 = vrot.slane %v367, 3
        %v5713 = vrot.slane %v368, 3
        %v5714 = vrot.slane %v369, 3
        %v5715 = vrot.slane %v370, 3
        %v5716 = vrot.slane %v371, 3
        %v5717 = vrot.slane %v372, 3
        %v5718 = vsel %vm1574, %v5716, %v5717
        %v5719 = vsel %vm1574, %v5715, %v5716
        %v5720 = vsel %vm1574, %v5714, %v5715
        %v5721 = vsel %vm1574, %v5713, %v5714
        %v5722 = vsel %vm1574, %v5712, %v5713
        %v5723 = vsel %vm1574, %v5711, %v5712
        %v5724 = vsel %vm1574, %v5710, %v5711
        %v5725 = vsel %vm1574, %v5709, %v5710
        %v5726 = vsel %vm1574, %v5708, %v5709
        %v5727 = vsel %vm1574, %v5707, %v5708
        %v5728 = vsel %vm1574, %v5706, %v5707
        %v5729 = vsel %vm1574, %v5705, %v5706
        %v5730 = vsel %vm1574, %v5704, %v5705
        %v5731 = vsel %vm1574, %v5703, %v5704
        %v5732 = vsel %vm1574, %v5702, %v5703
        %v5733 = vsel %vm1574, %v5701, %v5702
        %v5734 = vsel %vm1574, %v5700, %v5701
        %v5735 = vsel %vm1574, %v5699, %v5700
        %v5736 = vsel %vm1574, %v5698, %v5699
        %v5737 = vsel %vm1574, %v5697, %v5698
        %v5738 = vsel %vm1574, %v5696, %v5697
        %v5739 = vsel %vm1574, %v5695, %v5696
        %v5740 = vsel %vm1574, %v5694, %v5695
        %v5741 = vsel %vm1574, %v5693, %v5694
        %v5742 = vsel %vm1574, %v5692, %v5693
        %v5743 = vsel %vm1574, %v5691, %v5692
        %v5744 = vsel %vm1574, %v5690, %v5691
        %v5745 = vsel %vm1574, %v5689, %v5690
        %v5746 = vsel %vm1574, %v5688, %v5689
        %v5747 = vsel %vm1574, %v5687, %v5688
        %v5748 = vsel %vm1574, %v5686, %v5687
        %v5749 = vsel %vm1574, %v5685, %v5686
        %v5750 = vsel %vm1574, %v5684, %v5685
        %v5751 = vsel %vm1574, %v5683, %v5684
        %v5752 = vsel %vm1574, %v5682, %v5683
        %v5753 = vsel %vm1574, %v5681, %v5682
        %v5754 = vsel %vm1574, %v5680, %v5681
        %v5755 = vsel %vm1574, %v5679, %v5680
        %v5756 = vsel %vm1574, %v5678, %v5679
        %v5757 = vsel %vm1574, %v5677, %v5678
        %v5758 = vsel %vm1574, %v5717, %v5677
        %v5759 = vadd.f32 %v5636, %v5755
        %v5760 = vadd.f32 %v5637, %v5754
        %v5761 = vadd.f32 %v5638, %v5753
        %v5762 = vadd.f32 %v5639, %v5752
        %v5763 = vadd.f32 %v5640, %v5751
        %v5764 = vadd.f32 %v5641, %v5750
        %v5765 = vadd.f32 %v5642, %v5749
        %v5766 = vadd.f32 %v5643, %v5748
        %v5767 = vadd.f32 %v5644, %v5747
        %v5768 = vadd.f32 %v5645, %v5746
        %v5769 = vadd.f32 %v5646, %v5745
        %v5770 = vadd.f32 %v5647, %v5744
        %v5771 = vadd.f32 %v5648, %v5743
        %v5772 = vadd.f32 %v5649, %v5742
        %v5773 = vadd.f32 %v5650, %v5741
        %v5774 = vadd.f32 %v5651, %v5740
        %v5775 = vadd.f32 %v5652, %v5739
        %v5776 = vadd.f32 %v5653, %v5738
        %v5777 = vadd.f32 %v5654, %v5737
        %v5778 = vadd.f32 %v5655, %v5736
        %v5779 = vadd.f32 %v5656, %v5735
        %v5780 = vadd.f32 %v5657, %v5734
        %v5781 = vadd.f32 %v5658, %v5733
        %v5782 = vadd.f32 %v5659, %v5732
        %v5783 = vadd.f32 %v5660, %v5731
        %v5784 = vadd.f32 %v5661, %v5730
        %v5785 = vadd.f32 %v5662, %v5729
        %v5786 = vadd.f32 %v5663, %v5728
        %v5787 = vadd.f32 %v5664, %v5727
        %v5788 = vadd.f32 %v5665, %v5726
        %v5789 = vadd.f32 %v5666, %v5725
        %v5790 = vadd.f32 %v5667, %v5724
        %v5791 = vadd.f32 %v5668, %v5723
        %v5792 = vadd.f32 %v5669, %v5722
        %v5793 = vadd.f32 %v5670, %v5721
        %v5794 = vadd.f32 %v5671, %v5720
        %v5795 = vadd.f32 %v5672, %v5719
        %v5796 = vadd.f32 %v5673, %v5718
        %v5797 = vadd.f32 %v5674, %v5758
        %v5798 = vadd.f32 %v5675, %v5757
        %v5799 = vadd.f32 %v5676, %v5756
        %v5800 = vmax.f32 %v5759, 0.0
        %v5801 = vmax.f32 %v5760, 0.0
        %v5802 = vmax.f32 %v5761, 0.0
        %v5803 = vmax.f32 %v5762, 0.0
        %v5804 = vmax.f32 %v5763, 0.0
        %v5805 = vmax.f32 %v5764, 0.0
        %v5806 = vmax.f32 %v5765, 0.0
        %v5807 = vmax.f32 %v5766, 0.0
        %v5808 = vmax.f32 %v5767, 0.0
        %v5809 = vmax.f32 %v5768, 0.0
        %v5810 = vmax.f32 %v5769, 0.0
        %v5811 = vmax.f32 %v5770, 0.0
        %v5812 = vmax.f32 %v5771, 0.0
        %v5813 = vmax.f32 %v5772, 0.0
        %v5814 = vmax.f32 %v5773, 0.0
        %v5815 = vmax.f32 %v5774, 0.0
        %v5816 = vmax.f32 %v5775, 0.0
        %v5817 = vmax.f32 %v5776, 0.0
        %v5818 = vmax.f32 %v5777, 0.0
        %v5819 = vmax.f32 %v5778, 0.0
        %v5820 = vmax.f32 %v5779, 0.0
        %v5821 = vmax.f32 %v5780, 0.0
        %v5822 = vmax.f32 %v5781, 0.0
        %v5823 = vmax.f32 %v5782, 0.0
        %v5824 = vmax.f32 %v5783, 0.0
        %v5825 = vmax.f32 %v5784, 0.0
        %v5826 = vmax.f32 %v5785, 0.0
        %v5827 = vmax.f32 %v5786, 0.0
        %v5828 = vmax.f32 %v5787, 0.0
        %v5829 = vmax.f32 %v5788, 0.0
        %v5830 = vmax.f32 %v5789, 0.0
        %v5831 = vmax.f32 %v5790, 0.0
        %v5832 = vmax.f32 %v5791, 0.0
        %v5833 = vmax.f32 %v5792, 0.0
        %v5834 = vmax.f32 %v5793, 0.0
        %v5835 = vmax.f32 %v5794, 0.0
        %v5836 = vmax.f32 %v5795, 0.0
        %v5837 = vmax.f32 %v5796, 0.0
        %v5838 = vmax.f32 %v5797, 0.0
        %v5839 = vmax.f32 %v5798, 0.0
        %v5840 = vmax.f32 %v5799, 0.0
        %5841 = vst [vmem:[%s331] sm:$0xff] %v5800
        %5842 = vst [vmem:[%s331 + $0x8] sm:$0xff] %v5801
        %5843 = vst [vmem:[%s331 + $0x10] sm:$0xff] %v5802
        %5844 = vst [vmem:[%s331 + $0x18] sm:$0xff] %v5803
        %5845 = vst [vmem:[%s331 + $0x20] sm:$0xff] %v5804
        %5846 = vst [vmem:[%s331 + $0x28] sm:$0xff] %v5805
        %5847 = vst [vmem:[%s331 + $0x30] sm:$0xff] %v5806
        %5848 = vst [vmem:[%s331 + $0x38] sm:$0xff] %v5807
        %5849 = vst [vmem:[%s331 + $0x40] sm:$0xff] %v5808
        %5850 = vst [vmem:[%s331 + $0x48] sm:$0xff] %v5809
        %5851 = vst [vmem:[%s331 + $0x50] sm:$0xff] %v5810
        %5852 = vst [vmem:[%s331 + $0x58] sm:$0xff] %v5811
        %5853 = vst [vmem:[%s331 + $0x60] sm:$0xff] %v5812
        %5854 = vst [vmem:[%s331 + $0x68] sm:$0xff] %v5813
        %5855 = vst [vmem:[%s331 + $0x70] sm:$0xff] %v5814
        %5856 = vst [vmem:[%s331 + $0x78] sm:$0xff] %v5815
        %5857 = vst [vmem:[%s331 + $0x80] sm:$0xff] %v5816
        %5858 = vst [vmem:[%s331 + $0x88] sm:$0xff] %v5817
        %5859 = vst [vmem:[%s331 + $0x90] sm:$0xff] %v5818
        %5860 = vst [vmem:[%s331 + $0x98] sm:$0xff] %v5819
        %5861 = vst [vmem:[%s331 + $0xa0] sm:$0xff] %v5820
        %5862 = vst [vmem:[%s331 + $0xa8] sm:$0xff] %v5821
        %5863 = vst [vmem:[%s331 + $0xb0] sm:$0xff] %v5822
        %5864 = vst [vmem:[%s331 + $0xb8] sm:$0xff] %v5823
        %5865 = vst [vmem:[%s331 + $0xc0] sm:$0xff] %v5824
        %5866 = vst [vmem:[%s331 + $0xc8] sm:$0xff] %v5825
        %5867 = vst [vmem:[%s331 + $0xd0] sm:$0xff] %v5826
        %5868 = vst [vmem:[%s331 + $0xd8] sm:$0xff] %v5827
        %5869 = vst [vmem:[%s331 + $0xe0] sm:$0xff] %v5828
        %5870 = vst [vmem:[%s331 + $0xe8] sm:$0xff] %v5829
        %5871 = vst [vmem:[%s331 + $0xf0] sm:$0xff] %v5830
        %5872 = vst [vmem:[%s331 + $0xf8] sm:$0xff] %v5831
        %5873 = vst [vmem:[%s331 + $0x100] sm:$0xff] %v5832
        %5874 = vst [vmem:[%s331 + $0x108] sm:$0xff] %v5833
        %5875 = vst [vmem:[%s331 + $0x110] sm:$0xff] %v5834
        %5876 = vst [vmem:[%s331 + $0x118] sm:$0xff] %v5835
        %5877 = vst [vmem:[%s331 + $0x120] sm:$0xff] %v5836
        %5878 = vst [vmem:[%s331 + $0x128] sm:$0xff] %v5837
        %5879 = vst [vmem:[%s331 + $0x130] sm:$0xff] %v5838
        %5880 = vst [vmem:[%s331 + $0x138] sm:$0xff] %v5839
        %5881 = vst [vmem:[%s331 + $0x140] sm:$0xff] %v5840
        %s5882 = sand.u32 %s185, 1
        %s5883 = scalar_lea.sflag [#allocation4], %s5882
        %s5884 = sand.u32 %s185, 1
        %s5885 = smul.addr %s5884, 328
        %s5886 = scalar_lea.vmem [#allocation8], %s5885
        // Predicated region
        $region61: #{tpu_custom_call.1} parent=47 // pred_check
          %p5887 = pneg %p195
        $region62: #{tpu_custom_call.1} parent=47 // pred_check_branch
          %5889 = sbr.rel (%p5887) target = $region64
        $region63: #{tpu_custom_call.1} parent=47 // pred_region
          %5891 = vsyncadd %s5883, 0
          %s5892 = smul.addr %s25, 41
          %s5893 = smul.addr %s5892, 8
          %s5894 = scalar_lea.hbm %s7, %s5893
          %s5895 = sshll.u32 %s5886, 4
          %s5896 = int_to_ptr.vmem [resolvable:$true] %s5895
          %s5897 = sshll.u32 %s5894, 4
          %s5898 = int_to_ptr.hbm [resolvable:$true] %s5897
          %5903 = dma.vmem_to_hbm [thread:$0]  %s5896, 5248, %s5898, %s5883, 128, 128, 8
        $region64: #{tpu_custom_call.1} parent=47 // pred_fallthru
          _
      $region48: #{tpu_custom_call.1} parent=5 // pred_fallthru
        _
      %p5904 = scmp.le.s32.totalorder 2, %s20
      // Predicated region
      $region65: #{tpu_custom_call.1} parent=5 // pred_check
        %p5905 = pneg %p5904
      $region66: #{tpu_custom_call.1} parent=5 // pred_check_branch
        %5907 = sbr.rel (%p5905) target = $region68
      $region67: #{tpu_custom_call.1} parent=5 // pred_region
        %s5908 = ssub.s32 %s20, 2
        // Predicated region
        $region69: #{tpu_custom_call.1} parent=67 // pred_check
          %p5909 = pneg %p201
        $region70: #{tpu_custom_call.1} parent=67 // pred_check_branch
          %5911 = sbr.rel (%p5909) target = $region72
        $region71: #{tpu_custom_call.1} parent=67 // pred_region
          %s5912 = sand.u32 %s186, 1
          %s5913 = scalar_lea.sflag [#allocation4], %s5912
          %s5914 = sand.u32 %s186, 1
          %s5915 = smul.addr %s5914, 328
          %s5916 = scalar_lea.vmem [#allocation8], %s5915
          %5918 = dma.done %s5913, 5248
        $region72: #{tpu_custom_call.1} parent=67 // pred_fallthru
          _
      $region68: #{tpu_custom_call.1} parent=5 // pred_fallthru
        _
    $region6: #{tpu_custom_call.1} parent=1 // loop_footer
      %s24 = sadd.s32 1, %s20
    $region7: #{tpu_custom_call.1} parent=1 // loop_footer_branch
      %19 = sbr.rel target = $region3
    $region8: #{tpu_custom_call.1} parent=1 // loop_exit
      _
    %5919 = vsyncpa [#allocation3], 1
    %s5920 = scalar_lea.sflag [#allocation3], 1
    %5921 = vsyncpa %s5920, 1
    %5922 = vsyncpa [#allocation6], 1
    %5923 = vsyncpa [#allocation4], 1
    %s5924 = scalar_lea.sflag [#allocation4], 1
    %5925 = vsyncpa %s5924, 1

</llo_original>
